<compile_context>
chip_gen: v6e
topology: v6e:2x2x1
jax: 0.10.0
libtpu: 0.0.40
codegen_flags: <defaults>
</compile_context>

<pallas_src>
import functools
import math

import jax
import jax.numpy as jnp
from jax.experimental import pallas as pl
from jax.experimental.pallas import tpu as pltpu

_LN_EPS = 1e-5       # PyTorch nn.LayerNorm default eps
_HEAD_PAD = 128      # heads (f, g, z) stacked + zero-padded to 128 lanes


def _round_up(x, m):
    return (x + m - 1) // m * m


# --------------------------------------------------------------------------
# Fused DQN forward kernel
# --------------------------------------------------------------------------
def _make_dqn_kernel(n_blocks, training):
    n_noisy = 1 + 2 * n_blocks          # inp + (fc1, fc2) per residual block
    per_layer = 7 if training else 2    # refs per noisy layer

    def kernel(*refs):
        out_ref = refs[-1]
        in_refs = refs[:-1]

        x_ref = in_refs[0]
        pos = 1
        noisy_refs = []
        for _ in range(n_noisy):
            noisy_refs.append(in_refs[pos:pos + per_layer])
            pos += per_layer
        ln_refs = []
        for _ in range(2 * n_blocks):
            ln_refs.append(in_refs[pos:pos + 2])
            pos += 2
        wh_ref, bh_ref = in_refs[pos], in_refs[pos + 1]

        def noisy_linear(x, lrefs):
            if training:
                mu_w, sig_w, eps_in, eps_out, mu_b, sig_b, eps_b = lrefs
                # Rank-1 noise reconstruction on the VPU (no eps_w from HBM):
                #   w = mu_w + sigma_w * (eps_out ⊗ eps_in)
                w = mu_w[...] + sig_w[...] * (eps_out[...] * eps_in[...])
                b = mu_b[...] + sig_b[...] * eps_b[...]
            else:
                mu_w, mu_b = lrefs
                w, b = mu_w[...], mu_b[...]
            # x:(TB,in) . w:(out,in) contracted over in -> (TB,out); no w.T.
            y = jax.lax.dot_general(
                x, w, (((1,), (1,)), ((), ())),
                preferred_element_type=jnp.float32)
            return y + b

        def layer_norm(x, lrefs):
            g_ref, b_ref = lrefs
            mu = jnp.mean(x, axis=-1, keepdims=True)
            xc = x - mu
            var = jnp.mean(xc * xc, axis=-1, keepdims=True)
            return xc * jax.lax.rsqrt(var + _LN_EPS) * g_ref[...] + b_ref[...]

        # ---- forward ----
        x = x_ref[...].astype(jnp.float32)
        x = jnp.maximum(noisy_linear(x, noisy_refs[0]), 0.0)       # inp + relu
        li = 1
        for blk in range(n_blocks):
            h = noisy_linear(x, noisy_refs[li])
            h = jnp.maximum(layer_norm(h, ln_refs[2 * blk]), 0.0)
            h = noisy_linear(h, noisy_refs[li + 1])
            h = layer_norm(h, ln_refs[2 * blk + 1])
            x = jnp.maximum(x + h, 0.0)                            # residual
            li += 2

        # Heads: stacked (f,g,z) weight padded to (_HEAD_PAD, hidden); the
        # output block is lane-dense (TB, 128).
        heads = jax.lax.dot_general(
            x, wh_ref[...], (((1,), (1,)), ((), ())),
            preferred_element_type=jnp.float32) + bh_ref[...]
        # softplus(+1e-4) only on the z lane (lane 2), stable formulation.
        sp = jnp.maximum(heads, 0.0) + jnp.log(1.0 + jnp.exp(-jnp.abs(heads)))
        lane = jax.lax.broadcasted_iota(jnp.int32, heads.shape, 1)
        out_ref[...] = jnp.where(lane == 2, sp + 1e-4, heads).astype(out_ref.dtype)

    return kernel


# --------------------------------------------------------------------------
# Wrapper
# --------------------------------------------------------------------------
@functools.partial(jax.jit, static_argnames=("training", "batch_tile"))
def dqn_forward(x, params, training=True, batch_tile=32):
    """Fused DQN forward. x: (B, state_dim) f32. Returns (f, g, z) each (B,)."""
    B, state_dim = x.shape
    hidden = params["inp"]["mu_w"].shape[0]
    n_blocks = len(params["blocks"])

    in_pad = _round_up(state_dim, 128)
    TB = min(batch_tile, _round_up(B, 8))
    B_pad = _round_up(B, TB)
    x_pad = jnp.pad(x, ((0, B_pad - B), (0, in_pad - state_dim)))

    def big_layer_args(p, pad_to=None):
        mu_w, sig_w, eps_in = p["mu_w"], p["sigma_w"], p["eps_in"]
        if pad_to is not None and pad_to > mu_w.shape[1]:
            pad = pad_to - mu_w.shape[1]
            mu_w = jnp.pad(mu_w, ((0, 0), (0, pad)))
            sig_w = jnp.pad(sig_w, ((0, 0), (0, pad)))
            eps_in = jnp.pad(eps_in, ((0, pad),))
        out_f = mu_w.shape[0]
        if training:
            return [mu_w, sig_w,
                    eps_in.reshape(1, -1), p["eps_out"].reshape(out_f, 1),
                    p["mu_b"].reshape(1, out_f), p["sigma_b"].reshape(1, out_f),
                    p["eps_out"].reshape(1, out_f)]
        return [mu_w, p["mu_b"].reshape(1, out_f)]

    def head_eff(p):
        # Heads are (1, hidden): their "eps_w" is already rank-1-sized, so
        # precomputing the tiny effective weight here costs nothing.
        if training:
            w = p["mu_w"] + p["sigma_w"] * (p["eps_out"][:, None] * p["eps_in"][None, :])
            b = p["mu_b"] + p["sigma_b"] * p["eps_out"]
        else:
            w, b = p["mu_w"], p["mu_b"]
        return w, b

    args = [x_pad]
    args += big_layer_args(params["inp"], pad_to=in_pad)
    for blk in params["blocks"]:
        args += big_layer_args(blk["fc1"])
        args += big_layer_args(blk["fc2"])
    for blk in params["blocks"]:
        args += [blk["ln1"]["gamma"].reshape(1, hidden),
                 blk["ln1"]["beta"].reshape(1, hidden)]
        args += [blk["ln2"]["gamma"].reshape(1, hidden),
                 blk["ln2"]["beta"].reshape(1, hidden)]
    wf, bf = head_eff(params["head_f"])
    wg, bg = head_eff(params["head_g"])
    wz, bz = head_eff(params["head_z"])
    w_heads = jnp.pad(jnp.concatenate([wf, wg, wz], axis=0),
                      ((0, _HEAD_PAD - 3), (0, 0)))
    b_heads = jnp.pad(jnp.concatenate([bf, bg, bz], axis=0),
                      ((0, _HEAD_PAD - 3),)).reshape(1, _HEAD_PAD)
    args += [w_heads, b_heads]

    grid = (B_pad // TB,)
    # Batch-tiled input/output; every parameter is a full-array block with a
    # constant index map -> fetched once and VMEM-resident across the grid.
    in_specs = [pl.BlockSpec((TB, in_pad), lambda i: (i, 0))]
    in_specs += [pl.BlockSpec(a.shape, lambda i: (0, 0)) for a in args[1:]]
    out_specs = pl.BlockSpec((TB, _HEAD_PAD), lambda i: (i, 0))

    out = pl.pallas_call(
        _make_dqn_kernel(n_blocks, training),
        out_shape=jax.ShapeDtypeStruct((B_pad, _HEAD_PAD), x.dtype),
        grid=grid,
        in_specs=in_specs,
        out_specs=out_specs,
        compiler_params=pltpu.CompilerParams(
            dimension_semantics=("parallel",),
            vmem_limit_bytes=64 * 1024 * 1024,
        ),
    )(*args)

    f = out[:B, 0]
    g = out[:B, 1]
    z = out[:B, 2]
    return f, g, z


# --------------------------------------------------------------------------
# Parameter init + factorised noise sampling (plain JAX glue, mirrors PyTorch)
# --------------------------------------------------------------------------
def _init_noisy(key, in_f, out_f, sigma_init=0.5):
    bound = 1.0 / math.sqrt(in_f)
    k1, k2, k3, k4 = jax.random.split(key, 4)
    f = lambda v: jnp.sign(v) * jnp.sqrt(jnp.abs(v))
    return dict(
        mu_w=jax.random.uniform(k1, (out_f, in_f), jnp.float32, -bound, bound),
        sigma_w=jnp.full((out_f, in_f), sigma_init * bound, jnp.float32),
        mu_b=jax.random.uniform(k2, (out_f,), jnp.float32, -bound, bound),
        sigma_b=jnp.full((out_f,), sigma_init * bound, jnp.float32),
        eps_in=f(jax.random.normal(k3, (in_f,), jnp.float32)),
        eps_out=f(jax.random.normal(k4, (out_f,), jnp.float32)),
    )


def _init_ln(dim):
    return dict(gamma=jnp.ones((dim,), jnp.float32),
                beta=jnp.zeros((dim,), jnp.float32))


def init_dqn(key, state_dim=5, hidden=512, n_blocks=3, sigma_init=0.5):
    keys = jax.random.split(key, 1 + 2 * n_blocks + 3)
    params = dict(inp=_init_noisy(keys[0], state_dim, hidden, sigma_init),
                  blocks=[])
    ki = 1
    for _ in range(n_blocks):
        params["blocks"].append(dict(
            fc1=_init_noisy(keys[ki], hidden, hidden, sigma_init),
            ln1=_init_ln(hidden),
            fc2=_init_noisy(keys[ki + 1], hidden, hidden, sigma_init),
            ln2=_init_ln(hidden)))
        ki += 2
    params["head_f"] = _init_noisy(keys[ki], hidden, 1, sigma_init)
    params["head_g"] = _init_noisy(keys[ki + 1], hidden, 1, sigma_init)
    params["head_z"] = _init_noisy(keys[ki + 2], hidden, 1, sigma_init)
    return params


# --------------------------------------------------------------------------
# Plain-JAX reference (mirrors the PyTorch module exactly)
# --------------------------------------------------------------------------
def _noisy_ref(x, p, training):
    if training:
        eps_w = jnp.outer(p["eps_out"], p["eps_in"])
        w = p["mu_w"] + p["sigma_w"] * eps_w
        b = p["mu_b"] + p["sigma_b"] * p["eps_out"]
    else:
        w, b = p["mu_w"], p["mu_b"]
    return x @ w.T + b


def _ln_ref(x, p, eps=_LN_EPS):
    mu = x.mean(-1, keepdims=True)
    var = ((x - mu) ** 2).mean(-1, keepdims=True)
    return (x - mu) / jnp.sqrt(var + eps) * p["gamma"] + p["beta"]


def dqn_reference(x, params, training=True):
    h = jax.nn.relu(_noisy_ref(x, params["inp"], training))
    for blk in params["blocks"]:
        t = jax.nn.relu(_ln_ref(_noisy_ref(h, blk["fc1"], training), blk["ln1"]))
        t = _ln_ref(_noisy_ref(t, blk["fc2"], training), blk["ln2"])
        h = jax.nn.relu(h + t)
    f = _noisy_ref(h, params["head_f"], training)[:, 0]
    g = _noisy_ref(h, params["head_g"], training)[:, 0]
    z = jax.nn.softplus(_noisy_ref(h, params["head_z"], training)[:, 0]) + 1e-4
    return f, g, z


# --------------------------------------------------------------------------
if __name__ == "__main__":
    key = jax.random.PRNGKey(0)
    k_param, k_x = jax.random.split(key)

    STATE_DIM, HIDDEN, N_BLOCKS, BATCH = 5, 128, 3, 64
    params = init_dqn(k_param, STATE_DIM, HIDDEN, N_BLOCKS, sigma_init=0.5)
    s = jax.random.normal(k_x, (BATCH, STATE_DIM), jnp.float32)

    # Training path (noisy weights reconstructed in-kernel).
    f, g, z = jax.block_until_ready(dqn_forward(s, params, training=True))
    f_ref, g_ref, z_ref = dqn_reference(s, params, training=True)
    assert f.shape == (BATCH,) and g.shape == (BATCH,) and z.shape == (BATCH,)
    for got, ref, name in ((f, f_ref, "f"), (g, g_ref, "g"), (z, z_ref, "z")):
        err = float(jnp.max(jnp.abs(got - ref)))
        assert jnp.allclose(got, ref, atol=2e-2, rtol=2e-2), (name, err)
    assert bool(jnp.all(z > 0.0))

    # Eval path (deterministic mu weights only).
    fe, ge, ze = jax.block_until_ready(dqn_forward(s, params, training=False))
    fe_ref, ge_ref, ze_ref = dqn_reference(s, params, training=False)
    for got, ref, name in ((fe, fe_ref, "f_eval"), (ge, ge_ref, "g_eval"),
                           (ze, ze_ref, "z_eval")):
        err = float(jnp.max(jnp.abs(got - ref)))
        assert jnp.allclose(got, ref, atol=2e-2, rtol=2e-2), (name, err)

    print("KERNEL_OK")
</pallas_src>

<mosaic_0001>
module attributes {stable_mosaic.version = 11 : i64} {
  func.func @kernel(%arg0: i32, %arg1: memref<32x128xf32, #tpu.memory_space<vmem>>, %arg2: memref<128x128xf32, #tpu.memory_space<vmem>>, %arg3: memref<128x128xf32, #tpu.memory_space<vmem>>, %arg4: memref<1x128xf32, #tpu.memory_space<vmem>>, %arg5: memref<128x1xf32, #tpu.memory_space<vmem>>, %arg6: memref<1x128xf32, #tpu.memory_space<vmem>>, %arg7: memref<1x128xf32, #tpu.memory_space<vmem>>, %arg8: memref<1x128xf32, #tpu.memory_space<vmem>>, %arg9: memref<128x128xf32, #tpu.memory_space<vmem>>, %arg10: memref<128x128xf32, #tpu.memory_space<vmem>>, %arg11: memref<1x128xf32, #tpu.memory_space<vmem>>, %arg12: memref<128x1xf32, #tpu.memory_space<vmem>>, %arg13: memref<1x128xf32, #tpu.memory_space<vmem>>, %arg14: memref<1x128xf32, #tpu.memory_space<vmem>>, %arg15: memref<1x128xf32, #tpu.memory_space<vmem>>, %arg16: memref<128x128xf32, #tpu.memory_space<vmem>>, %arg17: memref<128x128xf32, #tpu.memory_space<vmem>>, %arg18: memref<1x128xf32, #tpu.memory_space<vmem>>, %arg19: memref<128x1xf32, #tpu.memory_space<vmem>>, %arg20: memref<1x128xf32, #tpu.memory_space<vmem>>, %arg21: memref<1x128xf32, #tpu.memory_space<vmem>>, %arg22: memref<1x128xf32, #tpu.memory_space<vmem>>, %arg23: memref<128x128xf32, #tpu.memory_space<vmem>>, %arg24: memref<128x128xf32, #tpu.memory_space<vmem>>, %arg25: memref<1x128xf32, #tpu.memory_space<vmem>>, %arg26: memref<128x1xf32, #tpu.memory_space<vmem>>, %arg27: memref<1x128xf32, #tpu.memory_space<vmem>>, %arg28: memref<1x128xf32, #tpu.memory_space<vmem>>, %arg29: memref<1x128xf32, #tpu.memory_space<vmem>>, %arg30: memref<128x128xf32, #tpu.memory_space<vmem>>, %arg31: memref<128x128xf32, #tpu.memory_space<vmem>>, %arg32: memref<1x128xf32, #tpu.memory_space<vmem>>, %arg33: memref<128x1xf32, #tpu.memory_space<vmem>>, %arg34: memref<1x128xf32, #tpu.memory_space<vmem>>, %arg35: memref<1x128xf32, #tpu.memory_space<vmem>>, %arg36: memref<1x128xf32, #tpu.memory_space<vmem>>, %arg37: memref<128x128xf32, #tpu.memory_space<vmem>>, %arg38: memref<128x128xf32, #tpu.memory_space<vmem>>, %arg39: memref<1x128xf32, #tpu.memory_space<vmem>>, %arg40: memref<128x1xf32, #tpu.memory_space<vmem>>, %arg41: memref<1x128xf32, #tpu.memory_space<vmem>>, %arg42: memref<1x128xf32, #tpu.memory_space<vmem>>, %arg43: memref<1x128xf32, #tpu.memory_space<vmem>>, %arg44: memref<128x128xf32, #tpu.memory_space<vmem>>, %arg45: memref<128x128xf32, #tpu.memory_space<vmem>>, %arg46: memref<1x128xf32, #tpu.memory_space<vmem>>, %arg47: memref<128x1xf32, #tpu.memory_space<vmem>>, %arg48: memref<1x128xf32, #tpu.memory_space<vmem>>, %arg49: memref<1x128xf32, #tpu.memory_space<vmem>>, %arg50: memref<1x128xf32, #tpu.memory_space<vmem>>, %arg51: memref<1x128xf32, #tpu.memory_space<vmem>>, %arg52: memref<1x128xf32, #tpu.memory_space<vmem>>, %arg53: memref<1x128xf32, #tpu.memory_space<vmem>>, %arg54: memref<1x128xf32, #tpu.memory_space<vmem>>, %arg55: memref<1x128xf32, #tpu.memory_space<vmem>>, %arg56: memref<1x128xf32, #tpu.memory_space<vmem>>, %arg57: memref<1x128xf32, #tpu.memory_space<vmem>>, %arg58: memref<1x128xf32, #tpu.memory_space<vmem>>, %arg59: memref<1x128xf32, #tpu.memory_space<vmem>>, %arg60: memref<1x128xf32, #tpu.memory_space<vmem>>, %arg61: memref<1x128xf32, #tpu.memory_space<vmem>>, %arg62: memref<1x128xf32, #tpu.memory_space<vmem>>, %arg63: memref<128x128xf32, #tpu.memory_space<vmem>>, %arg64: memref<1x128xf32, #tpu.memory_space<vmem>>, %arg65: memref<32x128xf32, #tpu.memory_space<vmem>>) attributes {dimension_semantics = [#tpu.dimension_semantics<parallel>], iteration_bounds = array<i64: 2>, scalar_prefetch = 0 : i64, scratch_operands = 0 : i64, tpu.core_type = #tpu.core_type<tc>, window_params = [{transform_indices = @transform_0, window_bounds = array<i64: 32, 128>}, {pipeline_mode = #tpu.pipeline_mode<synchronous>, transform_indices = @transform_1, window_bounds = array<i64: 128, 128>}, {pipeline_mode = #tpu.pipeline_mode<synchronous>, transform_indices = @transform_2, window_bounds = array<i64: 128, 128>}, {pipeline_mode = #tpu.pipeline_mode<synchronous>, transform_indices = @transform_3, window_bounds = array<i64: 1, 128>}, {pipeline_mode = #tpu.pipeline_mode<synchronous>, transform_indices = @transform_4, window_bounds = array<i64: 128, 1>}, {pipeline_mode = #tpu.pipeline_mode<synchronous>, transform_indices = @transform_5, window_bounds = array<i64: 1, 128>}, {pipeline_mode = #tpu.pipeline_mode<synchronous>, transform_indices = @transform_6, window_bounds = array<i64: 1, 128>}, {pipeline_mode = #tpu.pipeline_mode<synchronous>, transform_indices = @transform_7, window_bounds = array<i64: 1, 128>}, {pipeline_mode = #tpu.pipeline_mode<synchronous>, transform_indices = @transform_8, window_bounds = array<i64: 128, 128>}, {pipeline_mode = #tpu.pipeline_mode<synchronous>, transform_indices = @transform_9, window_bounds = array<i64: 128, 128>}, {pipeline_mode = #tpu.pipeline_mode<synchronous>, transform_indices = @transform_10, window_bounds = array<i64: 1, 128>}, {pipeline_mode = #tpu.pipeline_mode<synchronous>, transform_indices = @transform_11, window_bounds = array<i64: 128, 1>}, {pipeline_mode = #tpu.pipeline_mode<synchronous>, transform_indices = @transform_12, window_bounds = array<i64: 1, 128>}, {pipeline_mode = #tpu.pipeline_mode<synchronous>, transform_indices = @transform_13, window_bounds = array<i64: 1, 128>}, {pipeline_mode = #tpu.pipeline_mode<synchronous>, transform_indices = @transform_14, window_bounds = array<i64: 1, 128>}, {pipeline_mode = #tpu.pipeline_mode<synchronous>, transform_indices = @transform_15, window_bounds = array<i64: 128, 128>}, {pipeline_mode = #tpu.pipeline_mode<synchronous>, transform_indices = @transform_16, window_bounds = array<i64: 128, 128>}, {pipeline_mode = #tpu.pipeline_mode<synchronous>, transform_indices = @transform_17, window_bounds = array<i64: 1, 128>}, {pipeline_mode = #tpu.pipeline_mode<synchronous>, transform_indices = @transform_18, window_bounds = array<i64: 128, 1>}, {pipeline_mode = #tpu.pipeline_mode<synchronous>, transform_indices = @transform_19, window_bounds = array<i64: 1, 128>}, {pipeline_mode = #tpu.pipeline_mode<synchronous>, transform_indices = @transform_20, window_bounds = array<i64: 1, 128>}, {pipeline_mode = #tpu.pipeline_mode<synchronous>, transform_indices = @transform_21, window_bounds = array<i64: 1, 128>}, {pipeline_mode = #tpu.pipeline_mode<synchronous>, transform_indices = @transform_22, window_bounds = array<i64: 128, 128>}, {pipeline_mode = #tpu.pipeline_mode<synchronous>, transform_indices = @transform_23, window_bounds = array<i64: 128, 128>}, {pipeline_mode = #tpu.pipeline_mode<synchronous>, transform_indices = @transform_24, window_bounds = array<i64: 1, 128>}, {pipeline_mode = #tpu.pipeline_mode<synchronous>, transform_indices = @transform_25, window_bounds = array<i64: 128, 1>}, {pipeline_mode = #tpu.pipeline_mode<synchronous>, transform_indices = @transform_26, window_bounds = array<i64: 1, 128>}, {pipeline_mode = #tpu.pipeline_mode<synchronous>, transform_indices = @transform_27, window_bounds = array<i64: 1, 128>}, {pipeline_mode = #tpu.pipeline_mode<synchronous>, transform_indices = @transform_28, window_bounds = array<i64: 1, 128>}, {pipeline_mode = #tpu.pipeline_mode<synchronous>, transform_indices = @transform_29, window_bounds = array<i64: 128, 128>}, {pipeline_mode = #tpu.pipeline_mode<synchronous>, transform_indices = @transform_30, window_bounds = array<i64: 128, 128>}, {pipeline_mode = #tpu.pipeline_mode<synchronous>, transform_indices = @transform_31, window_bounds = array<i64: 1, 128>}, {pipeline_mode = #tpu.pipeline_mode<synchronous>, transform_indices = @transform_32, window_bounds = array<i64: 128, 1>}, {pipeline_mode = #tpu.pipeline_mode<synchronous>, transform_indices = @transform_33, window_bounds = array<i64: 1, 128>}, {pipeline_mode = #tpu.pipeline_mode<synchronous>, transform_indices = @transform_34, window_bounds = array<i64: 1, 128>}, {pipeline_mode = #tpu.pipeline_mode<synchronous>, transform_indices = @transform_35, window_bounds = array<i64: 1, 128>}, {pipeline_mode = #tpu.pipeline_mode<synchronous>, transform_indices = @transform_36, window_bounds = array<i64: 128, 128>}, {pipeline_mode = #tpu.pipeline_mode<synchronous>, transform_indices = @transform_37, window_bounds = array<i64: 128, 128>}, {pipeline_mode = #tpu.pipeline_mode<synchronous>, transform_indices = @transform_38, window_bounds = array<i64: 1, 128>}, {pipeline_mode = #tpu.pipeline_mode<synchronous>, transform_indices = @transform_39, window_bounds = array<i64: 128, 1>}, {pipeline_mode = #tpu.pipeline_mode<synchronous>, transform_indices = @transform_40, window_bounds = array<i64: 1, 128>}, {pipeline_mode = #tpu.pipeline_mode<synchronous>, transform_indices = @transform_41, window_bounds = array<i64: 1, 128>}, {pipeline_mode = #tpu.pipeline_mode<synchronous>, transform_indices = @transform_42, window_bounds = array<i64: 1, 128>}, {pipeline_mode = #tpu.pipeline_mode<synchronous>, transform_indices = @transform_43, window_bounds = array<i64: 128, 128>}, {pipeline_mode = #tpu.pipeline_mode<synchronous>, transform_indices = @transform_44, window_bounds = array<i64: 128, 128>}, {pipeline_mode = #tpu.pipeline_mode<synchronous>, transform_indices = @transform_45, window_bounds = array<i64: 1, 128>}, {pipeline_mode = #tpu.pipeline_mode<synchronous>, transform_indices = @transform_46, window_bounds = array<i64: 128, 1>}, {pipeline_mode = #tpu.pipeline_mode<synchronous>, transform_indices = @transform_47, window_bounds = array<i64: 1, 128>}, {pipeline_mode = #tpu.pipeline_mode<synchronous>, transform_indices = @transform_48, window_bounds = array<i64: 1, 128>}, {pipeline_mode = #tpu.pipeline_mode<synchronous>, transform_indices = @transform_49, window_bounds = array<i64: 1, 128>}, {pipeline_mode = #tpu.pipeline_mode<synchronous>, transform_indices = @transform_50, window_bounds = array<i64: 1, 128>}, {pipeline_mode = #tpu.pipeline_mode<synchronous>, transform_indices = @transform_51, window_bounds = array<i64: 1, 128>}, {pipeline_mode = #tpu.pipeline_mode<synchronous>, transform_indices = @transform_52, window_bounds = array<i64: 1, 128>}, {pipeline_mode = #tpu.pipeline_mode<synchronous>, transform_indices = @transform_53, window_bounds = array<i64: 1, 128>}, {pipeline_mode = #tpu.pipeline_mode<synchronous>, transform_indices = @transform_54, window_bounds = array<i64: 1, 128>}, {pipeline_mode = #tpu.pipeline_mode<synchronous>, transform_indices = @transform_55, window_bounds = array<i64: 1, 128>}, {pipeline_mode = #tpu.pipeline_mode<synchronous>, transform_indices = @transform_56, window_bounds = array<i64: 1, 128>}, {pipeline_mode = #tpu.pipeline_mode<synchronous>, transform_indices = @transform_57, window_bounds = array<i64: 1, 128>}, {pipeline_mode = #tpu.pipeline_mode<synchronous>, transform_indices = @transform_58, window_bounds = array<i64: 1, 128>}, {pipeline_mode = #tpu.pipeline_mode<synchronous>, transform_indices = @transform_59, window_bounds = array<i64: 1, 128>}, {pipeline_mode = #tpu.pipeline_mode<synchronous>, transform_indices = @transform_60, window_bounds = array<i64: 1, 128>}, {pipeline_mode = #tpu.pipeline_mode<synchronous>, transform_indices = @transform_61, window_bounds = array<i64: 1, 128>}, {pipeline_mode = #tpu.pipeline_mode<synchronous>, transform_indices = @transform_62, window_bounds = array<i64: 128, 128>}, {pipeline_mode = #tpu.pipeline_mode<synchronous>, transform_indices = @transform_63, window_bounds = array<i64: 1, 128>}, {transform_indices = @transform_64, window_bounds = array<i64: 32, 128>}]} {
    %c0 = arith.constant 0 : index
    %c0_0 = arith.constant 0 : index
    %0 = vector.load %arg1[%c0, %c0_0] : memref<32x128xf32, #tpu.memory_space<vmem>>, vector<32x128xf32>
    %c0_1 = arith.constant 0 : index
    %c0_2 = arith.constant 0 : index
    %1 = vector.load %arg2[%c0_1, %c0_2] : memref<128x128xf32, #tpu.memory_space<vmem>>, vector<128x128xf32>
    %c0_3 = arith.constant 0 : index
    %c0_4 = arith.constant 0 : index
    %2 = vector.load %arg3[%c0_3, %c0_4] : memref<128x128xf32, #tpu.memory_space<vmem>>, vector<128x128xf32>
    %c0_5 = arith.constant 0 : index
    %c0_6 = arith.constant 0 : index
    %3 = vector.load %arg5[%c0_5, %c0_6] : memref<128x1xf32, #tpu.memory_space<vmem>>, vector<128x1xf32>
    %c0_7 = arith.constant 0 : index
    %c0_8 = arith.constant 0 : index
    %4 = vector.load %arg4[%c0_7, %c0_8] : memref<1x128xf32, #tpu.memory_space<vmem>>, vector<1x128xf32>
    %5 = vector.broadcast %3 : vector<128x1xf32> to vector<128x128xf32>
    %6 = vector.broadcast %4 : vector<1x128xf32> to vector<128x128xf32>
    %7 = arith.mulf %5, %6 : vector<128x128xf32>
    %8 = arith.mulf %2, %7 : vector<128x128xf32>
    %9 = arith.addf %1, %8 : vector<128x128xf32>
    %c0_9 = arith.constant 0 : index
    %c0_10 = arith.constant 0 : index
    %10 = vector.load %arg6[%c0_9, %c0_10] : memref<1x128xf32, #tpu.memory_space<vmem>>, vector<1x128xf32>
    %c0_11 = arith.constant 0 : index
    %c0_12 = arith.constant 0 : index
    %11 = vector.load %arg7[%c0_11, %c0_12] : memref<1x128xf32, #tpu.memory_space<vmem>>, vector<1x128xf32>
    %c0_13 = arith.constant 0 : index
    %c0_14 = arith.constant 0 : index
    %12 = vector.load %arg8[%c0_13, %c0_14] : memref<1x128xf32, #tpu.memory_space<vmem>>, vector<1x128xf32>
    %13 = arith.mulf %11, %12 : vector<1x128xf32>
    %14 = arith.addf %10, %13 : vector<1x128xf32>
    %cst = arith.constant dense<0.000000e+00> : vector<32x128xf32>
    %15 = tpu.matmul %0, %9, %cst {dimension_numbers = #tpu.dot_dimension_numbers<[1], [1], [0], [0], [0, 0, 1, 0], [], []>} : vector<32x128xf32>, vector<128x128xf32>, vector<32x128xf32> -> vector<32x128xf32>
    %16 = vector.broadcast %14 : vector<1x128xf32> to vector<32x128xf32>
    %17 = arith.addf %15, %16 : vector<32x128xf32>
    %cst_15 = arith.constant 0.000000e+00 : f32
    %18 = vector.broadcast %cst_15 : f32 to vector<32x128xf32>
    %19 = arith.maximumf %17, %18 : vector<32x128xf32>
    %c0_16 = arith.constant 0 : index
    %c0_17 = arith.constant 0 : index
    %20 = vector.load %arg9[%c0_16, %c0_17] : memref<128x128xf32, #tpu.memory_space<vmem>>, vector<128x128xf32>
    %c0_18 = arith.constant 0 : index
    %c0_19 = arith.constant 0 : index
    %21 = vector.load %arg10[%c0_18, %c0_19] : memref<128x128xf32, #tpu.memory_space<vmem>>, vector<128x128xf32>
    %c0_20 = arith.constant 0 : index
    %c0_21 = arith.constant 0 : index
    %22 = vector.load %arg12[%c0_20, %c0_21] : memref<128x1xf32, #tpu.memory_space<vmem>>, vector<128x1xf32>
    %c0_22 = arith.constant 0 : index
    %c0_23 = arith.constant 0 : index
    %23 = vector.load %arg11[%c0_22, %c0_23] : memref<1x128xf32, #tpu.memory_space<vmem>>, vector<1x128xf32>
    %24 = vector.broadcast %22 : vector<128x1xf32> to vector<128x128xf32>
    %25 = vector.broadcast %23 : vector<1x128xf32> to vector<128x128xf32>
    %26 = arith.mulf %24, %25 : vector<128x128xf32>
    %27 = arith.mulf %21, %26 : vector<128x128xf32>
    %28 = arith.addf %20, %27 : vector<128x128xf32>
    %c0_24 = arith.constant 0 : index
    %c0_25 = arith.constant 0 : index
    %29 = vector.load %arg13[%c0_24, %c0_25] : memref<1x128xf32, #tpu.memory_space<vmem>>, vector<1x128xf32>
    %c0_26 = arith.constant 0 : index
    %c0_27 = arith.constant 0 : index
    %30 = vector.load %arg14[%c0_26, %c0_27] : memref<1x128xf32, #tpu.memory_space<vmem>>, vector<1x128xf32>
    %c0_28 = arith.constant 0 : index
    %c0_29 = arith.constant 0 : index
    %31 = vector.load %arg15[%c0_28, %c0_29] : memref<1x128xf32, #tpu.memory_space<vmem>>, vector<1x128xf32>
    %32 = arith.mulf %30, %31 : vector<1x128xf32>
    %33 = arith.addf %29, %32 : vector<1x128xf32>
    %cst_30 = arith.constant dense<0.000000e+00> : vector<32x128xf32>
    %34 = tpu.matmul %19, %28, %cst_30 {dimension_numbers = #tpu.dot_dimension_numbers<[1], [1], [0], [0], [0, 0, 1, 0], [], []>} : vector<32x128xf32>, vector<128x128xf32>, vector<32x128xf32> -> vector<32x128xf32>
    %35 = vector.broadcast %33 : vector<1x128xf32> to vector<32x128xf32>
    %36 = arith.addf %34, %35 : vector<32x128xf32>
    %cst_31 = arith.constant dense<0.000000e+00> : vector<32xf32>
    %37 = vector.multi_reduction <add>, %36, %cst_31 [1] : vector<32x128xf32> to vector<32xf32>
    %38 = vector.shape_cast %37 : vector<32xf32> to vector<32x1xf32>
    %cst_32 = arith.constant 1.280000e+02 : f32
    %39 = vector.broadcast %cst_32 : f32 to vector<32x1xf32>
    %40 = arith.divf %38, %39 : vector<32x1xf32>
    %41 = vector.broadcast %40 : vector<32x1xf32> to vector<32x128xf32>
    %42 = arith.subf %36, %41 : vector<32x128xf32>
    %43 = arith.mulf %42, %42 : vector<32x128xf32>
    %cst_33 = arith.constant dense<0.000000e+00> : vector<32xf32>
    %44 = vector.multi_reduction <add>, %43, %cst_33 [1] : vector<32x128xf32> to vector<32xf32>
    %45 = vector.shape_cast %44 : vector<32xf32> to vector<32x1xf32>
    %cst_34 = arith.constant 1.280000e+02 : f32
    %46 = vector.broadcast %cst_34 : f32 to vector<32x1xf32>
    %47 = arith.divf %45, %46 : vector<32x1xf32>
    %cst_35 = arith.constant 9.99999974E-6 : f32
    %48 = vector.broadcast %cst_35 : f32 to vector<32x1xf32>
    %49 = arith.addf %47, %48 : vector<32x1xf32>
    %50 = math.rsqrt %49 : vector<32x1xf32>
    %51 = vector.broadcast %50 : vector<32x1xf32> to vector<32x128xf32>
    %52 = arith.mulf %42, %51 : vector<32x128xf32>
    %c0_36 = arith.constant 0 : index
    %c0_37 = arith.constant 0 : index
    %53 = vector.load %arg51[%c0_36, %c0_37] : memref<1x128xf32, #tpu.memory_space<vmem>>, vector<1x128xf32>
    %54 = vector.broadcast %53 : vector<1x128xf32> to vector<32x128xf32>
    %55 = arith.mulf %52, %54 : vector<32x128xf32>
    %c0_38 = arith.constant 0 : index
    %c0_39 = arith.constant 0 : index
    %56 = vector.load %arg52[%c0_38, %c0_39] : memref<1x128xf32, #tpu.memory_space<vmem>>, vector<1x128xf32>
    %57 = vector.broadcast %56 : vector<1x128xf32> to vector<32x128xf32>
    %58 = arith.addf %55, %57 : vector<32x128xf32>
    %cst_40 = arith.constant 0.000000e+00 : f32
    %59 = vector.broadcast %cst_40 : f32 to vector<32x128xf32>
    %60 = arith.maximumf %58, %59 : vector<32x128xf32>
    %c0_41 = arith.constant 0 : index
    %c0_42 = arith.constant 0 : index
    %61 = vector.load %arg16[%c0_41, %c0_42] : memref<128x128xf32, #tpu.memory_space<vmem>>, vector<128x128xf32>
    %c0_43 = arith.constant 0 : index
    %c0_44 = arith.constant 0 : index
    %62 = vector.load %arg17[%c0_43, %c0_44] : memref<128x128xf32, #tpu.memory_space<vmem>>, vector<128x128xf32>
    %c0_45 = arith.constant 0 : index
    %c0_46 = arith.constant 0 : index
    %63 = vector.load %arg19[%c0_45, %c0_46] : memref<128x1xf32, #tpu.memory_space<vmem>>, vector<128x1xf32>
    %c0_47 = arith.constant 0 : index
    %c0_48 = arith.constant 0 : index
    %64 = vector.load %arg18[%c0_47, %c0_48] : memref<1x128xf32, #tpu.memory_space<vmem>>, vector<1x128xf32>
    %65 = vector.broadcast %63 : vector<128x1xf32> to vector<128x128xf32>
    %66 = vector.broadcast %64 : vector<1x128xf32> to vector<128x128xf32>
    %67 = arith.mulf %65, %66 : vector<128x128xf32>
    %68 = arith.mulf %62, %67 : vector<128x128xf32>
    %69 = arith.addf %61, %68 : vector<128x128xf32>
    %c0_49 = arith.constant 0 : index
    %c0_50 = arith.constant 0 : index
    %70 = vector.load %arg20[%c0_49, %c0_50] : memref<1x128xf32, #tpu.memory_space<vmem>>, vector<1x128xf32>
    %c0_51 = arith.constant 0 : index
    %c0_52 = arith.constant 0 : index
    %71 = vector.load %arg21[%c0_51, %c0_52] : memref<1x128xf32, #tpu.memory_space<vmem>>, vector<1x128xf32>
    %c0_53 = arith.constant 0 : index
    %c0_54 = arith.constant 0 : index
    %72 = vector.load %arg22[%c0_53, %c0_54] : memref<1x128xf32, #tpu.memory_space<vmem>>, vector<1x128xf32>
    %73 = arith.mulf %71, %72 : vector<1x128xf32>
    %74 = arith.addf %70, %73 : vector<1x128xf32>
    %cst_55 = arith.constant dense<0.000000e+00> : vector<32x128xf32>
    %75 = tpu.matmul %60, %69, %cst_55 {dimension_numbers = #tpu.dot_dimension_numbers<[1], [1], [0], [0], [0, 0, 1, 0], [], []>} : vector<32x128xf32>, vector<128x128xf32>, vector<32x128xf32> -> vector<32x128xf32>
    %76 = vector.broadcast %74 : vector<1x128xf32> to vector<32x128xf32>
    %77 = arith.addf %75, %76 : vector<32x128xf32>
    %cst_56 = arith.constant dense<0.000000e+00> : vector<32xf32>
    %78 = vector.multi_reduction <add>, %77, %cst_56 [1] : vector<32x128xf32> to vector<32xf32>
    %79 = vector.shape_cast %78 : vector<32xf32> to vector<32x1xf32>
    %cst_57 = arith.constant 1.280000e+02 : f32
    %80 = vector.broadcast %cst_57 : f32 to vector<32x1xf32>
    %81 = arith.divf %79, %80 : vector<32x1xf32>
    %82 = vector.broadcast %81 : vector<32x1xf32> to vector<32x128xf32>
    %83 = arith.subf %77, %82 : vector<32x128xf32>
    %84 = arith.mulf %83, %83 : vector<32x128xf32>
    %cst_58 = arith.constant dense<0.000000e+00> : vector<32xf32>
    %85 = vector.multi_reduction <add>, %84, %cst_58 [1] : vector<32x128xf32> to vector<32xf32>
    %86 = vector.shape_cast %85 : vector<32xf32> to vector<32x1xf32>
    %cst_59 = arith.constant 1.280000e+02 : f32
    %87 = vector.broadcast %cst_59 : f32 to vector<32x1xf32>
    %88 = arith.divf %86, %87 : vector<32x1xf32>
    %cst_60 = arith.constant 9.99999974E-6 : f32
    %89 = vector.broadcast %cst_60 : f32 to vector<32x1xf32>
    %90 = arith.addf %88, %89 : vector<32x1xf32>
    %91 = math.rsqrt %90 : vector<32x1xf32>
    %92 = vector.broadcast %91 : vector<32x1xf32> to vector<32x128xf32>
    %93 = arith.mulf %83, %92 : vector<32x128xf32>
    %c0_61 = arith.constant 0 : index
    %c0_62 = arith.constant 0 : index
    %94 = vector.load %arg53[%c0_61, %c0_62] : memref<1x128xf32, #tpu.memory_space<vmem>>, vector<1x128xf32>
    %95 = vector.broadcast %94 : vector<1x128xf32> to vector<32x128xf32>
    %96 = arith.mulf %93, %95 : vector<32x128xf32>
    %c0_63 = arith.constant 0 : index
    %c0_64 = arith.constant 0 : index
    %97 = vector.load %arg54[%c0_63, %c0_64] : memref<1x128xf32, #tpu.memory_space<vmem>>, vector<1x128xf32>
    %98 = vector.broadcast %97 : vector<1x128xf32> to vector<32x128xf32>
    %99 = arith.addf %96, %98 : vector<32x128xf32>
    %100 = arith.addf %19, %99 : vector<32x128xf32>
    %cst_65 = arith.constant 0.000000e+00 : f32
    %101 = vector.broadcast %cst_65 : f32 to vector<32x128xf32>
    %102 = arith.maximumf %100, %101 : vector<32x128xf32>
    %c0_66 = arith.constant 0 : index
    %c0_67 = arith.constant 0 : index
    %103 = vector.load %arg23[%c0_66, %c0_67] : memref<128x128xf32, #tpu.memory_space<vmem>>, vector<128x128xf32>
    %c0_68 = arith.constant 0 : index
    %c0_69 = arith.constant 0 : index
    %104 = vector.load %arg24[%c0_68, %c0_69] : memref<128x128xf32, #tpu.memory_space<vmem>>, vector<128x128xf32>
    %c0_70 = arith.constant 0 : index
    %c0_71 = arith.constant 0 : index
    %105 = vector.load %arg26[%c0_70, %c0_71] : memref<128x1xf32, #tpu.memory_space<vmem>>, vector<128x1xf32>
    %c0_72 = arith.constant 0 : index
    %c0_73 = arith.constant 0 : index
    %106 = vector.load %arg25[%c0_72, %c0_73] : memref<1x128xf32, #tpu.memory_space<vmem>>, vector<1x128xf32>
    %107 = vector.broadcast %105 : vector<128x1xf32> to vector<128x128xf32>
    %108 = vector.broadcast %106 : vector<1x128xf32> to vector<128x128xf32>
    %109 = arith.mulf %107, %108 : vector<128x128xf32>
    %110 = arith.mulf %104, %109 : vector<128x128xf32>
    %111 = arith.addf %103, %110 : vector<128x128xf32>
    %c0_74 = arith.constant 0 : index
    %c0_75 = arith.constant 0 : index
    %112 = vector.load %arg27[%c0_74, %c0_75] : memref<1x128xf32, #tpu.memory_space<vmem>>, vector<1x128xf32>
    %c0_76 = arith.constant 0 : index
    %c0_77 = arith.constant 0 : index
    %113 = vector.load %arg28[%c0_76, %c0_77] : memref<1x128xf32, #tpu.memory_space<vmem>>, vector<1x128xf32>
    %c0_78 = arith.constant 0 : index
    %c0_79 = arith.constant 0 : index
    %114 = vector.load %arg29[%c0_78, %c0_79] : memref<1x128xf32, #tpu.memory_space<vmem>>, vector<1x128xf32>
    %115 = arith.mulf %113, %114 : vector<1x128xf32>
    %116 = arith.addf %112, %115 : vector<1x128xf32>
    %cst_80 = arith.constant dense<0.000000e+00> : vector<32x128xf32>
    %117 = tpu.matmul %102, %111, %cst_80 {dimension_numbers = #tpu.dot_dimension_numbers<[1], [1], [0], [0], [0, 0, 1, 0], [], []>} : vector<32x128xf32>, vector<128x128xf32>, vector<32x128xf32> -> vector<32x128xf32>
    %118 = vector.broadcast %116 : vector<1x128xf32> to vector<32x128xf32>
    %119 = arith.addf %117, %118 : vector<32x128xf32>
    %cst_81 = arith.constant dense<0.000000e+00> : vector<32xf32>
    %120 = vector.multi_reduction <add>, %119, %cst_81 [1] : vector<32x128xf32> to vector<32xf32>
    %121 = vector.shape_cast %120 : vector<32xf32> to vector<32x1xf32>
    %cst_82 = arith.constant 1.280000e+02 : f32
    %122 = vector.broadcast %cst_82 : f32 to vector<32x1xf32>
    %123 = arith.divf %121, %122 : vector<32x1xf32>
    %124 = vector.broadcast %123 : vector<32x1xf32> to vector<32x128xf32>
    %125 = arith.subf %119, %124 : vector<32x128xf32>
    %126 = arith.mulf %125, %125 : vector<32x128xf32>
    %cst_83 = arith.constant dense<0.000000e+00> : vector<32xf32>
    %127 = vector.multi_reduction <add>, %126, %cst_83 [1] : vector<32x128xf32> to vector<32xf32>
    %128 = vector.shape_cast %127 : vector<32xf32> to vector<32x1xf32>
    %cst_84 = arith.constant 1.280000e+02 : f32
    %129 = vector.broadcast %cst_84 : f32 to vector<32x1xf32>
    %130 = arith.divf %128, %129 : vector<32x1xf32>
    %cst_85 = arith.constant 9.99999974E-6 : f32
    %131 = vector.broadcast %cst_85 : f32 to vector<32x1xf32>
    %132 = arith.addf %130, %131 : vector<32x1xf32>
    %133 = math.rsqrt %132 : vector<32x1xf32>
    %134 = vector.broadcast %133 : vector<32x1xf32> to vector<32x128xf32>
    %135 = arith.mulf %125, %134 : vector<32x128xf32>
    %c0_86 = arith.constant 0 : index
    %c0_87 = arith.constant 0 : index
    %136 = vector.load %arg55[%c0_86, %c0_87] : memref<1x128xf32, #tpu.memory_space<vmem>>, vector<1x128xf32>
    %137 = vector.broadcast %136 : vector<1x128xf32> to vector<32x128xf32>
    %138 = arith.mulf %135, %137 : vector<32x128xf32>
    %c0_88 = arith.constant 0 : index
    %c0_89 = arith.constant 0 : index
    %139 = vector.load %arg56[%c0_88, %c0_89] : memref<1x128xf32, #tpu.memory_space<vmem>>, vector<1x128xf32>
    %140 = vector.broadcast %139 : vector<1x128xf32> to vector<32x128xf32>
    %141 = arith.addf %138, %140 : vector<32x128xf32>
    %cst_90 = arith.constant 0.000000e+00 : f32
    %142 = vector.broadcast %cst_90 : f32 to vector<32x128xf32>
    %143 = arith.maximumf %141, %142 : vector<32x128xf32>
    %c0_91 = arith.constant 0 : index
    %c0_92 = arith.constant 0 : index
    %144 = vector.load %arg30[%c0_91, %c0_92] : memref<128x128xf32, #tpu.memory_space<vmem>>, vector<128x128xf32>
    %c0_93 = arith.constant 0 : index
    %c0_94 = arith.constant 0 : index
    %145 = vector.load %arg31[%c0_93, %c0_94] : memref<128x128xf32, #tpu.memory_space<vmem>>, vector<128x128xf32>
    %c0_95 = arith.constant 0 : index
    %c0_96 = arith.constant 0 : index
    %146 = vector.load %arg33[%c0_95, %c0_96] : memref<128x1xf32, #tpu.memory_space<vmem>>, vector<128x1xf32>
    %c0_97 = arith.constant 0 : index
    %c0_98 = arith.constant 0 : index
    %147 = vector.load %arg32[%c0_97, %c0_98] : memref<1x128xf32, #tpu.memory_space<vmem>>, vector<1x128xf32>
    %148 = vector.broadcast %146 : vector<128x1xf32> to vector<128x128xf32>
    %149 = vector.broadcast %147 : vector<1x128xf32> to vector<128x128xf32>
    %150 = arith.mulf %148, %149 : vector<128x128xf32>
    %151 = arith.mulf %145, %150 : vector<128x128xf32>
    %152 = arith.addf %144, %151 : vector<128x128xf32>
    %c0_99 = arith.constant 0 : index
    %c0_100 = arith.constant 0 : index
    %153 = vector.load %arg34[%c0_99, %c0_100] : memref<1x128xf32, #tpu.memory_space<vmem>>, vector<1x128xf32>
    %c0_101 = arith.constant 0 : index
    %c0_102 = arith.constant 0 : index
    %154 = vector.load %arg35[%c0_101, %c0_102] : memref<1x128xf32, #tpu.memory_space<vmem>>, vector<1x128xf32>
    %c0_103 = arith.constant 0 : index
    %c0_104 = arith.constant 0 : index
    %155 = vector.load %arg36[%c0_103, %c0_104] : memref<1x128xf32, #tpu.memory_space<vmem>>, vector<1x128xf32>
    %156 = arith.mulf %154, %155 : vector<1x128xf32>
    %157 = arith.addf %153, %156 : vector<1x128xf32>
    %cst_105 = arith.constant dense<0.000000e+00> : vector<32x128xf32>
    %158 = tpu.matmul %143, %152, %cst_105 {dimension_numbers = #tpu.dot_dimension_numbers<[1], [1], [0], [0], [0, 0, 1, 0], [], []>} : vector<32x128xf32>, vector<128x128xf32>, vector<32x128xf32> -> vector<32x128xf32>
    %159 = vector.broadcast %157 : vector<1x128xf32> to vector<32x128xf32>
    %160 = arith.addf %158, %159 : vector<32x128xf32>
    %cst_106 = arith.constant dense<0.000000e+00> : vector<32xf32>
    %161 = vector.multi_reduction <add>, %160, %cst_106 [1] : vector<32x128xf32> to vector<32xf32>
    %162 = vector.shape_cast %161 : vector<32xf32> to vector<32x1xf32>
    %cst_107 = arith.constant 1.280000e+02 : f32
    %163 = vector.broadcast %cst_107 : f32 to vector<32x1xf32>
    %164 = arith.divf %162, %163 : vector<32x1xf32>
    %165 = vector.broadcast %164 : vector<32x1xf32> to vector<32x128xf32>
    %166 = arith.subf %160, %165 : vector<32x128xf32>
    %167 = arith.mulf %166, %166 : vector<32x128xf32>
    %cst_108 = arith.constant dense<0.000000e+00> : vector<32xf32>
    %168 = vector.multi_reduction <add>, %167, %cst_108 [1] : vector<32x128xf32> to vector<32xf32>
    %169 = vector.shape_cast %168 : vector<32xf32> to vector<32x1xf32>
    %cst_109 = arith.constant 1.280000e+02 : f32
    %170 = vector.broadcast %cst_109 : f32 to vector<32x1xf32>
    %171 = arith.divf %169, %170 : vector<32x1xf32>
    %cst_110 = arith.constant 9.99999974E-6 : f32
    %172 = vector.broadcast %cst_110 : f32 to vector<32x1xf32>
    %173 = arith.addf %171, %172 : vector<32x1xf32>
    %174 = math.rsqrt %173 : vector<32x1xf32>
    %175 = vector.broadcast %174 : vector<32x1xf32> to vector<32x128xf32>
    %176 = arith.mulf %166, %175 : vector<32x128xf32>
    %c0_111 = arith.constant 0 : index
    %c0_112 = arith.constant 0 : index
    %177 = vector.load %arg57[%c0_111, %c0_112] : memref<1x128xf32, #tpu.memory_space<vmem>>, vector<1x128xf32>
    %178 = vector.broadcast %177 : vector<1x128xf32> to vector<32x128xf32>
    %179 = arith.mulf %176, %178 : vector<32x128xf32>
    %c0_113 = arith.constant 0 : index
    %c0_114 = arith.constant 0 : index
    %180 = vector.load %arg58[%c0_113, %c0_114] : memref<1x128xf32, #tpu.memory_space<vmem>>, vector<1x128xf32>
    %181 = vector.broadcast %180 : vector<1x128xf32> to vector<32x128xf32>
    %182 = arith.addf %179, %181 : vector<32x128xf32>
    %183 = arith.addf %102, %182 : vector<32x128xf32>
    %cst_115 = arith.constant 0.000000e+00 : f32
    %184 = vector.broadcast %cst_115 : f32 to vector<32x128xf32>
    %185 = arith.maximumf %183, %184 : vector<32x128xf32>
    %c0_116 = arith.constant 0 : index
    %c0_117 = arith.constant 0 : index
    %186 = vector.load %arg37[%c0_116, %c0_117] : memref<128x128xf32, #tpu.memory_space<vmem>>, vector<128x128xf32>
    %c0_118 = arith.constant 0 : index
    %c0_119 = arith.constant 0 : index
    %187 = vector.load %arg38[%c0_118, %c0_119] : memref<128x128xf32, #tpu.memory_space<vmem>>, vector<128x128xf32>
    %c0_120 = arith.constant 0 : index
    %c0_121 = arith.constant 0 : index
    %188 = vector.load %arg40[%c0_120, %c0_121] : memref<128x1xf32, #tpu.memory_space<vmem>>, vector<128x1xf32>
    %c0_122 = arith.constant 0 : index
    %c0_123 = arith.constant 0 : index
    %189 = vector.load %arg39[%c0_122, %c0_123] : memref<1x128xf32, #tpu.memory_space<vmem>>, vector<1x128xf32>
    %190 = vector.broadcast %188 : vector<128x1xf32> to vector<128x128xf32>
    %191 = vector.broadcast %189 : vector<1x128xf32> to vector<128x128xf32>
    %192 = arith.mulf %190, %191 : vector<128x128xf32>
    %193 = arith.mulf %187, %192 : vector<128x128xf32>
    %194 = arith.addf %186, %193 : vector<128x128xf32>
    %c0_124 = arith.constant 0 : index
    %c0_125 = arith.constant 0 : index
    %195 = vector.load %arg41[%c0_124, %c0_125] : memref<1x128xf32, #tpu.memory_space<vmem>>, vector<1x128xf32>
    %c0_126 = arith.constant 0 : index
    %c0_127 = arith.constant 0 : index
    %196 = vector.load %arg42[%c0_126, %c0_127] : memref<1x128xf32, #tpu.memory_space<vmem>>, vector<1x128xf32>
    %c0_128 = arith.constant 0 : index
    %c0_129 = arith.constant 0 : index
    %197 = vector.load %arg43[%c0_128, %c0_129] : memref<1x128xf32, #tpu.memory_space<vmem>>, vector<1x128xf32>
    %198 = arith.mulf %196, %197 : vector<1x128xf32>
    %199 = arith.addf %195, %198 : vector<1x128xf32>
    %cst_130 = arith.constant dense<0.000000e+00> : vector<32x128xf32>
    %200 = tpu.matmul %185, %194, %cst_130 {dimension_numbers = #tpu.dot_dimension_numbers<[1], [1], [0], [0], [0, 0, 1, 0], [], []>} : vector<32x128xf32>, vector<128x128xf32>, vector<32x128xf32> -> vector<32x128xf32>
    %201 = vector.broadcast %199 : vector<1x128xf32> to vector<32x128xf32>
    %202 = arith.addf %200, %201 : vector<32x128xf32>
    %cst_131 = arith.constant dense<0.000000e+00> : vector<32xf32>
    %203 = vector.multi_reduction <add>, %202, %cst_131 [1] : vector<32x128xf32> to vector<32xf32>
    %204 = vector.shape_cast %203 : vector<32xf32> to vector<32x1xf32>
    %cst_132 = arith.constant 1.280000e+02 : f32
    %205 = vector.broadcast %cst_132 : f32 to vector<32x1xf32>
    %206 = arith.divf %204, %205 : vector<32x1xf32>
    %207 = vector.broadcast %206 : vector<32x1xf32> to vector<32x128xf32>
    %208 = arith.subf %202, %207 : vector<32x128xf32>
    %209 = arith.mulf %208, %208 : vector<32x128xf32>
    %cst_133 = arith.constant dense<0.000000e+00> : vector<32xf32>
    %210 = vector.multi_reduction <add>, %209, %cst_133 [1] : vector<32x128xf32> to vector<32xf32>
    %211 = vector.shape_cast %210 : vector<32xf32> to vector<32x1xf32>
    %cst_134 = arith.constant 1.280000e+02 : f32
    %212 = vector.broadcast %cst_134 : f32 to vector<32x1xf32>
    %213 = arith.divf %211, %212 : vector<32x1xf32>
    %cst_135 = arith.constant 9.99999974E-6 : f32
    %214 = vector.broadcast %cst_135 : f32 to vector<32x1xf32>
    %215 = arith.addf %213, %214 : vector<32x1xf32>
    %216 = math.rsqrt %215 : vector<32x1xf32>
    %217 = vector.broadcast %216 : vector<32x1xf32> to vector<32x128xf32>
    %218 = arith.mulf %208, %217 : vector<32x128xf32>
    %c0_136 = arith.constant 0 : index
    %c0_137 = arith.constant 0 : index
    %219 = vector.load %arg59[%c0_136, %c0_137] : memref<1x128xf32, #tpu.memory_space<vmem>>, vector<1x128xf32>
    %220 = vector.broadcast %219 : vector<1x128xf32> to vector<32x128xf32>
    %221 = arith.mulf %218, %220 : vector<32x128xf32>
    %c0_138 = arith.constant 0 : index
    %c0_139 = arith.constant 0 : index
    %222 = vector.load %arg60[%c0_138, %c0_139] : memref<1x128xf32, #tpu.memory_space<vmem>>, vector<1x128xf32>
    %223 = vector.broadcast %222 : vector<1x128xf32> to vector<32x128xf32>
    %224 = arith.addf %221, %223 : vector<32x128xf32>
    %cst_140 = arith.constant 0.000000e+00 : f32
    %225 = vector.broadcast %cst_140 : f32 to vector<32x128xf32>
    %226 = arith.maximumf %224, %225 : vector<32x128xf32>
    %c0_141 = arith.constant 0 : index
    %c0_142 = arith.constant 0 : index
    %227 = vector.load %arg44[%c0_141, %c0_142] : memref<128x128xf32, #tpu.memory_space<vmem>>, vector<128x128xf32>
    %c0_143 = arith.constant 0 : index
    %c0_144 = arith.constant 0 : index
    %228 = vector.load %arg45[%c0_143, %c0_144] : memref<128x128xf32, #tpu.memory_space<vmem>>, vector<128x128xf32>
    %c0_145 = arith.constant 0 : index
    %c0_146 = arith.constant 0 : index
    %229 = vector.load %arg47[%c0_145, %c0_146] : memref<128x1xf32, #tpu.memory_space<vmem>>, vector<128x1xf32>
    %c0_147 = arith.constant 0 : index
    %c0_148 = arith.constant 0 : index
    %230 = vector.load %arg46[%c0_147, %c0_148] : memref<1x128xf32, #tpu.memory_space<vmem>>, vector<1x128xf32>
    %231 = vector.broadcast %229 : vector<128x1xf32> to vector<128x128xf32>
    %232 = vector.broadcast %230 : vector<1x128xf32> to vector<128x128xf32>
    %233 = arith.mulf %231, %232 : vector<128x128xf32>
    %234 = arith.mulf %228, %233 : vector<128x128xf32>
    %235 = arith.addf %227, %234 : vector<128x128xf32>
    %c0_149 = arith.constant 0 : index
    %c0_150 = arith.constant 0 : index
    %236 = vector.load %arg48[%c0_149, %c0_150] : memref<1x128xf32, #tpu.memory_space<vmem>>, vector<1x128xf32>
    %c0_151 = arith.constant 0 : index
    %c0_152 = arith.constant 0 : index
    %237 = vector.load %arg49[%c0_151, %c0_152] : memref<1x128xf32, #tpu.memory_space<vmem>>, vector<1x128xf32>
    %c0_153 = arith.constant 0 : index
    %c0_154 = arith.constant 0 : index
    %238 = vector.load %arg50[%c0_153, %c0_154] : memref<1x128xf32, #tpu.memory_space<vmem>>, vector<1x128xf32>
    %239 = arith.mulf %237, %238 : vector<1x128xf32>
    %240 = arith.addf %236, %239 : vector<1x128xf32>
    %cst_155 = arith.constant dense<0.000000e+00> : vector<32x128xf32>
    %241 = tpu.matmul %226, %235, %cst_155 {dimension_numbers = #tpu.dot_dimension_numbers<[1], [1], [0], [0], [0, 0, 1, 0], [], []>} : vector<32x128xf32>, vector<128x128xf32>, vector<32x128xf32> -> vector<32x128xf32>
    %242 = vector.broadcast %240 : vector<1x128xf32> to vector<32x128xf32>
    %243 = arith.addf %241, %242 : vector<32x128xf32>
    %cst_156 = arith.constant dense<0.000000e+00> : vector<32xf32>
    %244 = vector.multi_reduction <add>, %243, %cst_156 [1] : vector<32x128xf32> to vector<32xf32>
    %245 = vector.shape_cast %244 : vector<32xf32> to vector<32x1xf32>
    %cst_157 = arith.constant 1.280000e+02 : f32
    %246 = vector.broadcast %cst_157 : f32 to vector<32x1xf32>
    %247 = arith.divf %245, %246 : vector<32x1xf32>
    %248 = vector.broadcast %247 : vector<32x1xf32> to vector<32x128xf32>
    %249 = arith.subf %243, %248 : vector<32x128xf32>
    %250 = arith.mulf %249, %249 : vector<32x128xf32>
    %cst_158 = arith.constant dense<0.000000e+00> : vector<32xf32>
    %251 = vector.multi_reduction <add>, %250, %cst_158 [1] : vector<32x128xf32> to vector<32xf32>
    %252 = vector.shape_cast %251 : vector<32xf32> to vector<32x1xf32>
    %cst_159 = arith.constant 1.280000e+02 : f32
    %253 = vector.broadcast %cst_159 : f32 to vector<32x1xf32>
    %254 = arith.divf %252, %253 : vector<32x1xf32>
    %cst_160 = arith.constant 9.99999974E-6 : f32
    %255 = vector.broadcast %cst_160 : f32 to vector<32x1xf32>
    %256 = arith.addf %254, %255 : vector<32x1xf32>
    %257 = math.rsqrt %256 : vector<32x1xf32>
    %258 = vector.broadcast %257 : vector<32x1xf32> to vector<32x128xf32>
    %259 = arith.mulf %249, %258 : vector<32x128xf32>
    %c0_161 = arith.constant 0 : index
    %c0_162 = arith.constant 0 : index
    %260 = vector.load %arg61[%c0_161, %c0_162] : memref<1x128xf32, #tpu.memory_space<vmem>>, vector<1x128xf32>
    %261 = vector.broadcast %260 : vector<1x128xf32> to vector<32x128xf32>
    %262 = arith.mulf %259, %261 : vector<32x128xf32>
    %c0_163 = arith.constant 0 : index
    %c0_164 = arith.constant 0 : index
    %263 = vector.load %arg62[%c0_163, %c0_164] : memref<1x128xf32, #tpu.memory_space<vmem>>, vector<1x128xf32>
    %264 = vector.broadcast %263 : vector<1x128xf32> to vector<32x128xf32>
    %265 = arith.addf %262, %264 : vector<32x128xf32>
    %266 = arith.addf %185, %265 : vector<32x128xf32>
    %cst_165 = arith.constant 0.000000e+00 : f32
    %267 = vector.broadcast %cst_165 : f32 to vector<32x128xf32>
    %268 = arith.maximumf %266, %267 : vector<32x128xf32>
    %c0_166 = arith.constant 0 : index
    %c0_167 = arith.constant 0 : index
    %269 = vector.load %arg63[%c0_166, %c0_167] : memref<128x128xf32, #tpu.memory_space<vmem>>, vector<128x128xf32>
    %cst_168 = arith.constant dense<0.000000e+00> : vector<32x128xf32>
    %270 = tpu.matmul %268, %269, %cst_168 {dimension_numbers = #tpu.dot_dimension_numbers<[1], [1], [0], [0], [0, 0, 1, 0], [], []>} : vector<32x128xf32>, vector<128x128xf32>, vector<32x128xf32> -> vector<32x128xf32>
    %c0_169 = arith.constant 0 : index
    %c0_170 = arith.constant 0 : index
    %271 = vector.load %arg64[%c0_169, %c0_170] : memref<1x128xf32, #tpu.memory_space<vmem>>, vector<1x128xf32>
    %272 = vector.broadcast %271 : vector<1x128xf32> to vector<32x128xf32>
    %273 = arith.addf %270, %272 : vector<32x128xf32>
    %cst_171 = arith.constant 0.000000e+00 : f32
    %274 = vector.broadcast %cst_171 : f32 to vector<32x128xf32>
    %275 = arith.maximumf %273, %274 : vector<32x128xf32>
    %276 = math.absf %273 : vector<32x128xf32>
    %cst_172 = arith.constant 0.000000e+00 : f32
    %277 = vector.broadcast %cst_172 : f32 to vector<32x128xf32>
    %278 = arith.subf %277, %276 : vector<32x128xf32>
    %279 = math.exp %278 : vector<32x128xf32>
    %cst_173 = arith.constant 1.000000e+00 : f32
    %280 = vector.broadcast %cst_173 : f32 to vector<32x128xf32>
    %281 = arith.addf %280, %279 : vector<32x128xf32>
    %282 = math.log %281 : vector<32x128xf32>
    %283 = arith.addf %275, %282 : vector<32x128xf32>
    %284 = tpu.iota {dimensions = array<i32: 1>} : vector<32x128xi32>
    %c2_i32 = arith.constant 2 : i32
    %285 = vector.broadcast %c2_i32 : i32 to vector<32x128xi32>
    %286 = arith.cmpi eq, %284, %285 : vector<32x128xi32>
    %cst_174 = arith.constant 9.99999974E-5 : f32
    %287 = vector.broadcast %cst_174 : f32 to vector<32x128xf32>
    %288 = arith.addf %283, %287 : vector<32x128xf32>
    %289 = arith.select %286, %288, %273 : vector<32x128xi1>, vector<32x128xf32>
    %c0_175 = arith.constant 0 : index
    %c0_176 = arith.constant 0 : index
    %290 = vector.load %arg65[%c0_175, %c0_176] : memref<32x128xf32, #tpu.memory_space<vmem>>, vector<32x128xf32>
    tpu.vector_store %arg65[%c0_175, %c0_176], %289 {strides = array<i32>} : memref<32x128xf32, #tpu.memory_space<vmem>>, vector<32x128xf32>,
    return
  }
  func.func @transform_0(%arg0: i32) -> (i32, i32) {
    %c0_i32 = arith.constant 0 : i32
    %c0_i32_0 = arith.constant 0 : i32
    return %arg0, %c0_i32 : i32, i32
  }
  func.func @transform_1(%arg0: i32) -> (i32, i32) {
    %c0_i32 = arith.constant 0 : i32
    %c0_i32_0 = arith.constant 0 : i32
    %c0_i32_1 = arith.constant 0 : i32
    return %c0_i32, %c0_i32_0 : i32, i32
  }
  func.func @transform_2(%arg0: i32) -> (i32, i32) {
    %c0_i32 = arith.constant 0 : i32
    %c0_i32_0 = arith.constant 0 : i32
    %c0_i32_1 = arith.constant 0 : i32
    return %c0_i32, %c0_i32_0 : i32, i32
  }
  func.func @transform_3(%arg0: i32) -> (i32, i32) {
    %c0_i32 = arith.constant 0 : i32
    %c0_i32_0 = arith.constant 0 : i32
    %c0_i32_1 = arith.constant 0 : i32
    return %c0_i32, %c0_i32_0 : i32, i32
  }
  func.func @transform_4(%arg0: i32) -> (i32, i32) {
    %c0_i32 = arith.constant 0 : i32
    %c0_i32_0 = arith.constant 0 : i32
    %c0_i32_1 = arith.constant 0 : i32
    return %c0_i32, %c0_i32_0 : i32, i32
  }
  func.func @transform_5(%arg0: i32) -> (i32, i32) {
    %c0_i32 = arith.constant 0 : i32
    %c0_i32_0 = arith.constant 0 : i32
    %c0_i32_1 = arith.constant 0 : i32
    return %c0_i32, %c0_i32_0 : i32, i32
  }
  func.func @transform_6(%arg0: i32) -> (i32, i32) {
    %c0_i32 = arith.constant 0 : i32
    %c0_i32_0 = arith.constant 0 : i32
    %c0_i32_1 = arith.constant 0 : i32
    return %c0_i32, %c0_i32_0 : i32, i32
  }
  func.func @transform_7(%arg0: i32) -> (i32, i32) {
    %c0_i32 = arith.constant 0 : i32
    %c0_i32_0 = arith.constant 0 : i32
    %c0_i32_1 = arith.constant 0 : i32
    return %c0_i32, %c0_i32_0 : i32, i32
  }
  func.func @transform_8(%arg0: i32) -> (i32, i32) {
    %c0_i32 = arith.constant 0 : i32
    %c0_i32_0 = arith.constant 0 : i32
    %c0_i32_1 = arith.constant 0 : i32
    return %c0_i32, %c0_i32_0 : i32, i32
  }
  func.func @transform_9(%arg0: i32) -> (i32, i32) {
    %c0_i32 = arith.constant 0 : i32
    %c0_i32_0 = arith.constant 0 : i32
    %c0_i32_1 = arith.constant 0 : i32
    return %c0_i32, %c0_i32_0 : i32, i32
  }
  func.func @transform_10(%arg0: i32) -> (i32, i32) {
    %c0_i32 = arith.constant 0 : i32
    %c0_i32_0 = arith.constant 0 : i32
    %c0_i32_1 = arith.constant 0 : i32
    return %c0_i32, %c0_i32_0 : i32, i32
  }
  func.func @transform_11(%arg0: i32) -> (i32, i32) {
    %c0_i32 = arith.constant 0 : i32
    %c0_i32_0 = arith.constant 0 : i32
    %c0_i32_1 = arith.constant 0 : i32
    return %c0_i32, %c0_i32_0 : i32, i32
  }
  func.func @transform_12(%arg0: i32) -> (i32, i32) {
    %c0_i32 = arith.constant 0 : i32
    %c0_i32_0 = arith.constant 0 : i32
    %c0_i32_1 = arith.constant 0 : i32
    return %c0_i32, %c0_i32_0 : i32, i32
  }
  func.func @transform_13(%arg0: i32) -> (i32, i32) {
    %c0_i32 = arith.constant 0 : i32
    %c0_i32_0 = arith.constant 0 : i32
    %c0_i32_1 = arith.constant 0 : i32
    return %c0_i32, %c0_i32_0 : i32, i32
  }
  func.func @transform_14(%arg0: i32) -> (i32, i32) {
    %c0_i32 = arith.constant 0 : i32
    %c0_i32_0 = arith.constant 0 : i32
    %c0_i32_1 = arith.constant 0 : i32
    return %c0_i32, %c0_i32_0 : i32, i32
  }
  func.func @transform_15(%arg0: i32) -> (i32, i32) {
    %c0_i32 = arith.constant 0 : i32
    %c0_i32_0 = arith.constant 0 : i32
    %c0_i32_1 = arith.constant 0 : i32
    return %c0_i32, %c0_i32_0 : i32, i32
  }
  func.func @transform_16(%arg0: i32) -> (i32, i32) {
    %c0_i32 = arith.constant 0 : i32
    %c0_i32_0 = arith.constant 0 : i32
    %c0_i32_1 = arith.constant 0 : i32
    return %c0_i32, %c0_i32_0 : i32, i32
  }
  func.func @transform_17(%arg0: i32) -> (i32, i32) {
    %c0_i32 = arith.constant 0 : i32
    %c0_i32_0 = arith.constant 0 : i32
    %c0_i32_1 = arith.constant 0 : i32
    return %c0_i32, %c0_i32_0 : i32, i32
  }
  func.func @transform_18(%arg0: i32) -> (i32, i32) {
    %c0_i32 = arith.constant 0 : i32
    %c0_i32_0 = arith.constant 0 : i32
    %c0_i32_1 = arith.constant 0 : i32
    return %c0_i32, %c0_i32_0 : i32, i32
  }
  func.func @transform_19(%arg0: i32) -> (i32, i32) {
    %c0_i32 = arith.constant 0 : i32
    %c0_i32_0 = arith.constant 0 : i32
    %c0_i32_1 = arith.constant 0 : i32
    return %c0_i32, %c0_i32_0 : i32, i32
  }
  func.func @transform_20(%arg0: i32) -> (i32, i32) {
    %c0_i32 = arith.constant 0 : i32
    %c0_i32_0 = arith.constant 0 : i32
    %c0_i32_1 = arith.constant 0 : i32
    return %c0_i32, %c0_i32_0 : i32, i32
  }
  func.func @transform_21(%arg0: i32) -> (i32, i32) {
    %c0_i32 = arith.constant 0 : i32
    %c0_i32_0 = arith.constant 0 : i32
    %c0_i32_1 = arith.constant 0 : i32
    return %c0_i32, %c0_i32_0 : i32, i32
  }
  func.func @transform_22(%arg0: i32) -> (i32, i32) {
    %c0_i32 = arith.constant 0 : i32
    %c0_i32_0 = arith.constant 0 : i32
    %c0_i32_1 = arith.constant 0 : i32
    return %c0_i32, %c0_i32_0 : i32, i32
  }
  func.func @transform_23(%arg0: i32) -> (i32, i32) {
    %c0_i32 = arith.constant 0 : i32
    %c0_i32_0 = arith.constant 0 : i32
    %c0_i32_1 = arith.constant 0 : i32
    return %c0_i32, %c0_i32_0 : i32, i32
  }
  func.func @transform_24(%arg0: i32) -> (i32, i32) {
    %c0_i32 = arith.constant 0 : i32
    %c0_i32_0 = arith.constant 0 : i32
    %c0_i32_1 = arith.constant 0 : i32
    return %c0_i32, %c0_i32_0 : i32, i32
  }
  func.func @transform_25(%arg0: i32) -> (i32, i32) {
    %c0_i32 = arith.constant 0 : i32
    %c0_i32_0 = arith.constant 0 : i32
    %c0_i32_1 = arith.constant 0 : i32
    return %c0_i32, %c0_i32_0 : i32, i32
  }
  func.func @transform_26(%arg0: i32) -> (i32, i32) {
    %c0_i32 = arith.constant 0 : i32
    %c0_i32_0 = arith.constant 0 : i32
    %c0_i32_1 = arith.constant 0 : i32
    return %c0_i32, %c0_i32_0 : i32, i32
  }
  func.func @transform_27(%arg0: i32) -> (i32, i32) {
    %c0_i32 = arith.constant 0 : i32
    %c0_i32_0 = arith.constant 0 : i32
    %c0_i32_1 = arith.constant 0 : i32
    return %c0_i32, %c0_i32_0 : i32, i32
  }
  func.func @transform_28(%arg0: i32) -> (i32, i32) {
    %c0_i32 = arith.constant 0 : i32
    %c0_i32_0 = arith.constant 0 : i32
    %c0_i32_1 = arith.constant 0 : i32
    return %c0_i32, %c0_i32_0 : i32, i32
  }
  func.func @transform_29(%arg0: i32) -> (i32, i32) {
    %c0_i32 = arith.constant 0 : i32
    %c0_i32_0 = arith.constant 0 : i32
    %c0_i32_1 = arith.constant 0 : i32
    return %c0_i32, %c0_i32_0 : i32, i32
  }
  func.func @transform_30(%arg0: i32) -> (i32, i32) {
    %c0_i32 = arith.constant 0 : i32
    %c0_i32_0 = arith.constant 0 : i32
    %c0_i32_1 = arith.constant 0 : i32
    return %c0_i32, %c0_i32_0 : i32, i32
  }
  func.func @transform_31(%arg0: i32) -> (i32, i32) {
    %c0_i32 = arith.constant 0 : i32
    %c0_i32_0 = arith.constant 0 : i32
    %c0_i32_1 = arith.constant 0 : i32
    return %c0_i32, %c0_i32_0 : i32, i32
  }
  func.func @transform_32(%arg0: i32) -> (i32, i32) {
    %c0_i32 = arith.constant 0 : i32
    %c0_i32_0 = arith.constant 0 : i32
    %c0_i32_1 = arith.constant 0 : i32
    return %c0_i32, %c0_i32_0 : i32, i32
  }
  func.func @transform_33(%arg0: i32) -> (i32, i32) {
    %c0_i32 = arith.constant 0 : i32
    %c0_i32_0 = arith.constant 0 : i32
    %c0_i32_1 = arith.constant 0 : i32
    return %c0_i32, %c0_i32_0 : i32, i32
  }
  func.func @transform_34(%arg0: i32) -> (i32, i32) {
    %c0_i32 = arith.constant 0 : i32
    %c0_i32_0 = arith.constant 0 : i32
    %c0_i32_1 = arith.constant 0 : i32
    return %c0_i32, %c0_i32_0 : i32, i32
  }
  func.func @transform_35(%arg0: i32) -> (i32, i32) {
    %c0_i32 = arith.constant 0 : i32
    %c0_i32_0 = arith.constant 0 : i32
    %c0_i32_1 = arith.constant 0 : i32
    return %c0_i32, %c0_i32_0 : i32, i32
  }
  func.func @transform_36(%arg0: i32) -> (i32, i32) {
    %c0_i32 = arith.constant 0 : i32
    %c0_i32_0 = arith.constant 0 : i32
    %c0_i32_1 = arith.constant 0 : i32
    return %c0_i32, %c0_i32_0 : i32, i32
  }
  func.func @transform_37(%arg0: i32) -> (i32, i32) {
    %c0_i32 = arith.constant 0 : i32
    %c0_i32_0 = arith.constant 0 : i32
    %c0_i32_1 = arith.constant 0 : i32
    return %c0_i32, %c0_i32_0 : i32, i32
  }
  func.func @transform_38(%arg0: i32) -> (i32, i32) {
    %c0_i32 = arith.constant 0 : i32
    %c0_i32_0 = arith.constant 0 : i32
    %c0_i32_1 = arith.constant 0 : i32
    return %c0_i32, %c0_i32_0 : i32, i32
  }
  func.func @transform_39(%arg0: i32) -> (i32, i32) {
    %c0_i32 = arith.constant 0 : i32
    %c0_i32_0 = arith.constant 0 : i32
    %c0_i32_1 = arith.constant 0 : i32
    return %c0_i32, %c0_i32_0 : i32, i32
  }
  func.func @transform_40(%arg0: i32) -> (i32, i32) {
    %c0_i32 = arith.constant 0 : i32
    %c0_i32_0 = arith.constant 0 : i32
    %c0_i32_1 = arith.constant 0 : i32
    return %c0_i32, %c0_i32_0 : i32, i32
  }
  func.func @transform_41(%arg0: i32) -> (i32, i32) {
    %c0_i32 = arith.constant 0 : i32
    %c0_i32_0 = arith.constant 0 : i32
    %c0_i32_1 = arith.constant 0 : i32
    return %c0_i32, %c0_i32_0 : i32, i32
  }
  func.func @transform_42(%arg0: i32) -> (i32, i32) {
    %c0_i32 = arith.constant 0 : i32
    %c0_i32_0 = arith.constant 0 : i32
    %c0_i32_1 = arith.constant 0 : i32
    return %c0_i32, %c0_i32_0 : i32, i32
  }
  func.func @transform_43(%arg0: i32) -> (i32, i32) {
    %c0_i32 = arith.constant 0 : i32
    %c0_i32_0 = arith.constant 0 : i32
    %c0_i32_1 = arith.constant 0 : i32
    return %c0_i32, %c0_i32_0 : i32, i32
  }
  func.func @transform_44(%arg0: i32) -> (i32, i32) {
    %c0_i32 = arith.constant 0 : i32
    %c0_i32_0 = arith.constant 0 : i32
    %c0_i32_1 = arith.constant 0 : i32
    return %c0_i32, %c0_i32_0 : i32, i32
  }
  func.func @transform_45(%arg0: i32) -> (i32, i32) {
    %c0_i32 = arith.constant 0 : i32
    %c0_i32_0 = arith.constant 0 : i32
    %c0_i32_1 = arith.constant 0 : i32
    return %c0_i32, %c0_i32_0 : i32, i32
  }
  func.func @transform_46(%arg0: i32) -> (i32, i32) {
    %c0_i32 = arith.constant 0 : i32
    %c0_i32_0 = arith.constant 0 : i32
    %c0_i32_1 = arith.constant 0 : i32
    return %c0_i32, %c0_i32_0 : i32, i32
  }
  func.func @transform_47(%arg0: i32) -> (i32, i32) {
    %c0_i32 = arith.constant 0 : i32
    %c0_i32_0 = arith.constant 0 : i32
    %c0_i32_1 = arith.constant 0 : i32
    return %c0_i32, %c0_i32_0 : i32, i32
  }
  func.func @transform_48(%arg0: i32) -> (i32, i32) {
    %c0_i32 = arith.constant 0 : i32
    %c0_i32_0 = arith.constant 0 : i32
    %c0_i32_1 = arith.constant 0 : i32
    return %c0_i32, %c0_i32_0 : i32, i32
  }
  func.func @transform_49(%arg0: i32) -> (i32, i32) {
    %c0_i32 = arith.constant 0 : i32
    %c0_i32_0 = arith.constant 0 : i32
    %c0_i32_1 = arith.constant 0 : i32
    return %c0_i32, %c0_i32_0 : i32, i32
  }
  func.func @transform_50(%arg0: i32) -> (i32, i32) {
    %c0_i32 = arith.constant 0 : i32
    %c0_i32_0 = arith.constant 0 : i32
    %c0_i32_1 = arith.constant 0 : i32
    return %c0_i32, %c0_i32_0 : i32, i32
  }
  func.func @transform_51(%arg0: i32) -> (i32, i32) {
    %c0_i32 = arith.constant 0 : i32
    %c0_i32_0 = arith.constant 0 : i32
    %c0_i32_1 = arith.constant 0 : i32
    return %c0_i32, %c0_i32_0 : i32, i32
  }
  func.func @transform_52(%arg0: i32) -> (i32, i32) {
    %c0_i32 = arith.constant 0 : i32
    %c0_i32_0 = arith.constant 0 : i32
    %c0_i32_1 = arith.constant 0 : i32
    return %c0_i32, %c0_i32_0 : i32, i32
  }
  func.func @transform_53(%arg0: i32) -> (i32, i32) {
    %c0_i32 = arith.constant 0 : i32
    %c0_i32_0 = arith.constant 0 : i32
    %c0_i32_1 = arith.constant 0 : i32
    return %c0_i32, %c0_i32_0 : i32, i32
  }
  func.func @transform_54(%arg0: i32) -> (i32, i32) {
    %c0_i32 = arith.constant 0 : i32
    %c0_i32_0 = arith.constant 0 : i32
    %c0_i32_1 = arith.constant 0 : i32
    return %c0_i32, %c0_i32_0 : i32, i32
  }
  func.func @transform_55(%arg0: i32) -> (i32, i32) {
    %c0_i32 = arith.constant 0 : i32
    %c0_i32_0 = arith.constant 0 : i32
    %c0_i32_1 = arith.constant 0 : i32
    return %c0_i32, %c0_i32_0 : i32, i32
  }
  func.func @transform_56(%arg0: i32) -> (i32, i32) {
    %c0_i32 = arith.constant 0 : i32
    %c0_i32_0 = arith.constant 0 : i32
    %c0_i32_1 = arith.constant 0 : i32
    return %c0_i32, %c0_i32_0 : i32, i32
  }
  func.func @transform_57(%arg0: i32) -> (i32, i32) {
    %c0_i32 = arith.constant 0 : i32
    %c0_i32_0 = arith.constant 0 : i32
    %c0_i32_1 = arith.constant 0 : i32
    return %c0_i32, %c0_i32_0 : i32, i32
  }
  func.func @transform_58(%arg0: i32) -> (i32, i32) {
    %c0_i32 = arith.constant 0 : i32
    %c0_i32_0 = arith.constant 0 : i32
    %c0_i32_1 = arith.constant 0 : i32
    return %c0_i32, %c0_i32_0 : i32, i32
  }
  func.func @transform_59(%arg0: i32) -> (i32, i32) {
    %c0_i32 = arith.constant 0 : i32
    %c0_i32_0 = arith.constant 0 : i32
    %c0_i32_1 = arith.constant 0 : i32
    return %c0_i32, %c0_i32_0 : i32, i32
  }
  func.func @transform_60(%arg0: i32) -> (i32, i32) {
    %c0_i32 = arith.constant 0 : i32
    %c0_i32_0 = arith.constant 0 : i32
    %c0_i32_1 = arith.constant 0 : i32
    return %c0_i32, %c0_i32_0 : i32, i32
  }
  func.func @transform_61(%arg0: i32) -> (i32, i32) {
    %c0_i32 = arith.constant 0 : i32
    %c0_i32_0 = arith.constant 0 : i32
    %c0_i32_1 = arith.constant 0 : i32
    return %c0_i32, %c0_i32_0 : i32, i32
  }
  func.func @transform_62(%arg0: i32) -> (i32, i32) {
    %c0_i32 = arith.constant 0 : i32
    %c0_i32_0 = arith.constant 0 : i32
    %c0_i32_1 = arith.constant 0 : i32
    return %c0_i32, %c0_i32_0 : i32, i32
  }
  func.func @transform_63(%arg0: i32) -> (i32, i32) {
    %c0_i32 = arith.constant 0 : i32
    %c0_i32_0 = arith.constant 0 : i32
    %c0_i32_1 = arith.constant 0 : i32
    return %c0_i32, %c0_i32_0 : i32, i32
  }
  func.func @transform_64(%arg0: i32) -> (i32, i32) {
    %c0_i32 = arith.constant 0 : i32
    %c0_i32_0 = arith.constant 0 : i32
    return %arg0, %c0_i32 : i32, i32
  }
}

</mosaic_0001>

<llo_original>
// kernel: dqn_forward.1
$region0: #{dqn_forward.1}
  #allocation0 [shape = 'u32[]', space=smem, size = 0x4, offset = 0x4, fixed_abs, tag = 'smem constant byte address 0x4 - core index']
  #allocation1 [shape = 'u32[144,128]{1,0:T(1,128)}', space=vmem, size = 0x12000, scoped, tag = 'internal scratch']
  %s0 = inlined_call_operand.smem [shape: u32[65], index: -1, kind: input, shape index: {}]
  %s1 = sld [smem:[%s0]]
  %s2 = scalar_lea.smem %s0, 1
  %s3 = sld [smem:[%s2]]
  %s4 = scalar_lea.smem %s0, 2
  %s5 = sld [smem:[%s4]]
  %s6 = scalar_lea.smem %s0, 3
  %s7 = sld [smem:[%s6]]
  %s8 = scalar_lea.smem %s0, 4
  %s9 = sld [smem:[%s8]]
  %s10 = scalar_lea.smem %s0, 5
  %s11 = sld [smem:[%s10]]
  %s12 = scalar_lea.smem %s0, 6
  %s13 = sld [smem:[%s12]]
  %s14 = scalar_lea.smem %s0, 7
  %s15 = sld [smem:[%s14]]
  %s16 = scalar_lea.smem %s0, 8
  %s17 = sld [smem:[%s16]]
  %s18 = scalar_lea.smem %s0, 9
  %s19 = sld [smem:[%s18]]
  %s20 = scalar_lea.smem %s0, 10
  %s21 = sld [smem:[%s20]]
  %s22 = scalar_lea.smem %s0, 11
  %s23 = sld [smem:[%s22]]
  %s24 = scalar_lea.smem %s0, 12
  %s25 = sld [smem:[%s24]]
  %s26 = scalar_lea.smem %s0, 13
  %s27 = sld [smem:[%s26]]
  %s28 = scalar_lea.smem %s0, 14
  %s29 = sld [smem:[%s28]]
  %s30 = scalar_lea.smem %s0, 15
  %s31 = sld [smem:[%s30]]
  %s32 = scalar_lea.smem %s0, 16
  %s33 = sld [smem:[%s32]]
  %s34 = scalar_lea.smem %s0, 17
  %s35 = sld [smem:[%s34]]
  %s36 = scalar_lea.smem %s0, 18
  %s37 = sld [smem:[%s36]]
  %s38 = scalar_lea.smem %s0, 19
  %s39 = sld [smem:[%s38]]
  %s40 = scalar_lea.smem %s0, 20
  %s41 = sld [smem:[%s40]]
  %s42 = scalar_lea.smem %s0, 21
  %s43 = sld [smem:[%s42]]
  %s44 = scalar_lea.smem %s0, 22
  %s45 = sld [smem:[%s44]]
  %s46 = scalar_lea.smem %s0, 23
  %s47 = sld [smem:[%s46]]
  %s48 = scalar_lea.smem %s0, 24
  %s49 = sld [smem:[%s48]]
  %s50 = scalar_lea.smem %s0, 25
  %s51 = sld [smem:[%s50]]
  %s52 = scalar_lea.smem %s0, 26
  %s53 = sld [smem:[%s52]]
  %s54 = scalar_lea.smem %s0, 27
  %s55 = sld [smem:[%s54]]
  %s56 = scalar_lea.smem %s0, 28
  %s57 = sld [smem:[%s56]]
  %s58 = scalar_lea.smem %s0, 29
  %s59 = sld [smem:[%s58]]
  %s60 = scalar_lea.smem %s0, 30
  %s61 = sld [smem:[%s60]]
  %s62 = scalar_lea.smem %s0, 31
  %s63 = sld [smem:[%s62]]
  %s64 = scalar_lea.smem %s0, 32
  %s65 = sld [smem:[%s64]]
  %s66 = scalar_lea.smem %s0, 33
  %s67 = sld [smem:[%s66]]
  %s68 = scalar_lea.smem %s0, 34
  %s69 = sld [smem:[%s68]]
  %s70 = scalar_lea.smem %s0, 35
  %s71 = sld [smem:[%s70]]
  %s72 = scalar_lea.smem %s0, 36
  %s73 = sld [smem:[%s72]]
  %s74 = scalar_lea.smem %s0, 37
  %s75 = sld [smem:[%s74]]
  %s76 = scalar_lea.smem %s0, 38
  %s77 = sld [smem:[%s76]]
  %s78 = scalar_lea.smem %s0, 39
  %s79 = sld [smem:[%s78]]
  %s80 = scalar_lea.smem %s0, 40
  %s81 = sld [smem:[%s80]]
  %s82 = scalar_lea.smem %s0, 41
  %s83 = sld [smem:[%s82]]
  %s84 = scalar_lea.smem %s0, 42
  %s85 = sld [smem:[%s84]]
  %s86 = scalar_lea.smem %s0, 43
  %s87 = sld [smem:[%s86]]
  %s88 = scalar_lea.smem %s0, 44
  %s89 = sld [smem:[%s88]]
  %s90 = scalar_lea.smem %s0, 45
  %s91 = sld [smem:[%s90]]
  %s92 = scalar_lea.smem %s0, 46
  %s93 = sld [smem:[%s92]]
  %s94 = scalar_lea.smem %s0, 47
  %s95 = sld [smem:[%s94]]
  %s96 = scalar_lea.smem %s0, 48
  %s97 = sld [smem:[%s96]]
  %s98 = scalar_lea.smem %s0, 49
  %s99 = sld [smem:[%s98]]
  %s100 = scalar_lea.smem %s0, 50
  %s101 = sld [smem:[%s100]]
  %s102 = scalar_lea.smem %s0, 51
  %s103 = sld [smem:[%s102]]
  %s104 = scalar_lea.smem %s0, 52
  %s105 = sld [smem:[%s104]]
  %s106 = scalar_lea.smem %s0, 53
  %s107 = sld [smem:[%s106]]
  %s108 = scalar_lea.smem %s0, 54
  %s109 = sld [smem:[%s108]]
  %s110 = scalar_lea.smem %s0, 55
  %s111 = sld [smem:[%s110]]
  %s112 = scalar_lea.smem %s0, 56
  %s113 = sld [smem:[%s112]]
  %s114 = scalar_lea.smem %s0, 57
  %s115 = sld [smem:[%s114]]
  %s116 = scalar_lea.smem %s0, 58
  %s117 = sld [smem:[%s116]]
  %s118 = scalar_lea.smem %s0, 59
  %s119 = sld [smem:[%s118]]
  %s120 = scalar_lea.smem %s0, 60
  %s121 = sld [smem:[%s120]]
  %s122 = scalar_lea.smem %s0, 61
  %s123 = sld [smem:[%s122]]
  %s124 = scalar_lea.smem %s0, 62
  %s125 = sld [smem:[%s124]]
  %s126 = scalar_lea.smem %s0, 63
  %s127 = sld [smem:[%s126]]
  %s128 = scalar_lea.smem %s0, 64
  %s129 = sld [smem:[%s128]]
  %s130 = sld [smem:[#allocation0]]
  $region341: #{dqn_forward.1} parent=0
    _
  %s132 = ssub.s32 1, %s130
  %s133 = scalar_select 0, %s132, %s130
  $region1: #{dqn_forward.1} parent=0
    #allocation2 [shape = 'u8[512]{0}', space=vmem, size = 0x400, scoped, tag = 'input window, operand 48, single buffered']
    #allocation3 [shape = 's32[2]{0}', space=sflag, size = 0x8, scoped, tag = 'scoped memory for dqn_forward.1']
    #allocation4 [shape = 'u8[512]{0}', space=vmem, size = 0x400, scoped, tag = 'input window, operand 50, single buffered']
    #allocation5 [shape = 's32[1]{0}', space=sflag, size = 0x4, scoped, tag = 'scoped memory for dqn_forward.1']
    #allocation6 [shape = 'u8[512]{0}', space=vmem, size = 0x400, scoped, tag = 'input window, operand 51, single buffered']
    #allocation7 [shape = 'u8[512]{0}', space=vmem, size = 0x400, scoped, tag = 'input window, operand 52, single buffered']
    #allocation8 [shape = 's32[1]{0}', space=sflag, size = 0x4, scoped, tag = 'scoped memory for dqn_forward.1']
    #allocation9 [shape = 'u8[512]{0}', space=vmem, size = 0x400, scoped, tag = 'input window, operand 53, single buffered']
    #allocation10 [shape = 'u8[512]{0}', space=vmem, size = 0x400, scoped, tag = 'input window, operand 54, single buffered']
    #allocation11 [shape = 's32[1]{0}', space=sflag, size = 0x4, scoped, tag = 'scoped memory for dqn_forward.1']
    #allocation12 [shape = 'u8[512]{0}', space=vmem, size = 0x400, scoped, tag = 'input window, operand 55, single buffered']
    #allocation13 [shape = 'u8[512]{0}', space=vmem, size = 0x400, scoped, tag = 'input window, operand 56, single buffered']
    #allocation14 [shape = 's32[1]{0}', space=sflag, size = 0x4, scoped, tag = 'scoped memory for dqn_forward.1']
    #allocation15 [shape = 'u8[512]{0}', space=vmem, size = 0x400, scoped, tag = 'input window, operand 57, single buffered']
    #allocation16 [shape = 'u8[512]{0}', space=vmem, size = 0x400, scoped, tag = 'input window, operand 58, single buffered']
    #allocation17 [shape = 's32[1]{0}', space=sflag, size = 0x4, scoped, tag = 'scoped memory for dqn_forward.1']
    #allocation18 [shape = 'u8[512]{0}', space=vmem, size = 0x400, scoped, tag = 'input window, operand 59, single buffered']
    #allocation19 [shape = 'u8[512]{0}', space=vmem, size = 0x400, scoped, tag = 'input window, operand 60, single buffered']
    #allocation20 [shape = 's32[1]{0}', space=sflag, size = 0x4, scoped, tag = 'scoped memory for dqn_forward.1']
    #allocation21 [shape = 'u8[512]{0}', space=vmem, size = 0x400, scoped, tag = 'input window, operand 61, single buffered']
    %134 = vsyncpa [#allocation3], 0
    %135 = vsyncpa [#allocation5], 0
    %136 = vsyncpa [#allocation8], 0
    %137 = vsyncpa [#allocation11], 0
    %138 = vsyncpa [#allocation14], 0
    %139 = vsyncpa [#allocation17], 0
    %140 = vsyncpa [#allocation20], 0
    loop: start=0, step=1, limit=4
    $region2: #{dqn_forward.1} parent=1 // loop_pre_header
      _
    $region3: #{dqn_forward.1} parent=1 // loop_header
      %s142 = sphi 0, %s146
      %p143 = scmp.ge.s32.totalorder %s142, 4
      %s152 = sphi 0, %s154
      %s155 = sphi 0, %s152
      %s156 = sphi 0, %s155
      %s172 = sphi 0, %s156
      %s176 = sphi 0, %s176
      %s178 = sphi 0, %s176
      %s179 = sphi 0, %s178
      %s193 = sphi 0, %s179
      %s197 = sphi 0, %s197
      %s199 = sphi 0, %s197
      %s200 = sphi 0, %s199
      %s214 = sphi 0, %s200
      %s218 = sphi 0, %s218
      %s220 = sphi 0, %s218
      %s221 = sphi 0, %s220
      %s235 = sphi 0, %s221
      %s239 = sphi 0, %s239
      %s241 = sphi 0, %s239
      %s242 = sphi 0, %s241
      %s256 = sphi 0, %s242
      %s260 = sphi 0, %s260
      %s262 = sphi 0, %s260
      %s263 = sphi 0, %s262
      %s277 = sphi 0, %s263
      %s281 = sphi 0, %s281
      %s283 = sphi 0, %s281
      %s284 = sphi 0, %s283
      %s298 = sphi 0, %s284
      %s302 = sphi 0, %s302
      %s304 = sphi 0, %s302
      %s305 = sphi 0, %s304
      %s319 = sphi 0, %s305
      %s323 = sphi 0, %s323
      %s325 = sphi 0, %s323
      %s326 = sphi 0, %s325
      %s340 = sphi 0, %s326
      %s344 = sphi 0, %s344
      %s346 = sphi 0, %s344
      %s347 = sphi 0, %s346
      %s361 = sphi 0, %s347
      %s365 = sphi 0, %s365
      %s367 = sphi 0, %s365
      %s368 = sphi 0, %s367
      %s382 = sphi 0, %s368
      %s386 = sphi 0, %s386
      %s388 = sphi 0, %s386
      %s389 = sphi 0, %s388
      %s403 = sphi 0, %s389
      %s407 = sphi 0, %s407
      %s409 = sphi 0, %s407
      %s410 = sphi 0, %s409
      %s424 = sphi 0, %s410
      %s428 = sphi 0, %s428
      %s430 = sphi 0, %s428
      %s431 = sphi 0, %s430
      %s445 = sphi 0, %s431
      %s449 = sphi 0, %s449
      %s451 = sphi 0, %s449
      %s452 = sphi 0, %s451
      %s466 = sphi 0, %s452
      %s470 = sphi 0, %s470
      %s472 = sphi 0, %s470
      %s473 = sphi 0, %s472
      %s487 = sphi 0, %s473
      %s491 = sphi 0, %s491
      %s493 = sphi 0, %s491
      %s494 = sphi 0, %s493
      %s508 = sphi 0, %s494
      %s512 = sphi 0, %s512
      %s514 = sphi 0, %s512
      %s515 = sphi 0, %s514
      %s529 = sphi 0, %s515
      %s533 = sphi 0, %s533
      %s535 = sphi 0, %s533
      %s536 = sphi 0, %s535
      %s550 = sphi 0, %s536
      %s554 = sphi 0, %s554
      %s556 = sphi 0, %s554
      %s557 = sphi 0, %s556
      %s571 = sphi 0, %s557
      %s575 = sphi 0, %s575
      %s577 = sphi 0, %s575
      %s578 = sphi 0, %s577
      %s592 = sphi 0, %s578
      %s596 = sphi 0, %s596
      %s598 = sphi 0, %s596
      %s599 = sphi 0, %s598
      %s613 = sphi 0, %s599
      %s617 = sphi 0, %s617
      %s619 = sphi 0, %s617
      %s620 = sphi 0, %s619
      %s634 = sphi 0, %s620
      %s638 = sphi 0, %s638
      %s640 = sphi 0, %s638
      %s641 = sphi 0, %s640
      %s655 = sphi 0, %s641
      %s659 = sphi 0, %s659
      %s661 = sphi 0, %s659
      %s662 = sphi 0, %s661
      %s676 = sphi 0, %s662
      %s680 = sphi 0, %s680
      %s682 = sphi 0, %s680
      %s683 = sphi 0, %s682
      %s697 = sphi 0, %s683
      %s701 = sphi 0, %s701
      %s703 = sphi 0, %s701
      %s704 = sphi 0, %s703
      %s718 = sphi 0, %s704
      %s722 = sphi 0, %s722
      %s724 = sphi 0, %s722
      %s725 = sphi 0, %s724
      %s739 = sphi 0, %s725
      %s743 = sphi 0, %s743
      %s745 = sphi 0, %s743
      %s746 = sphi 0, %s745
      %s760 = sphi 0, %s746
      %s764 = sphi 0, %s764
      %s766 = sphi 0, %s764
      %s767 = sphi 0, %s766
      %s781 = sphi 0, %s767
      %s785 = sphi 0, %s785
      %s787 = sphi 0, %s785
      %s788 = sphi 0, %s787
      %s802 = sphi 0, %s788
      %s806 = sphi 0, %s806
      %s808 = sphi 0, %s806
      %s809 = sphi 0, %s808
      %s823 = sphi 0, %s809
      %s827 = sphi 0, %s827
      %s829 = sphi 0, %s827
      %s830 = sphi 0, %s829
      %s844 = sphi 0, %s830
      %s848 = sphi 0, %s848
      %s850 = sphi 0, %s848
      %s851 = sphi 0, %s850
      %s865 = sphi 0, %s851
      %s869 = sphi 0, %s869
      %s871 = sphi 0, %s869
      %s872 = sphi 0, %s871
      %s886 = sphi 0, %s872
      %s890 = sphi 0, %s890
      %s892 = sphi 0, %s890
      %s893 = sphi 0, %s892
      %s907 = sphi 0, %s893
      %s911 = sphi 0, %s911
      %s913 = sphi 0, %s911
      %s914 = sphi 0, %s913
      %s928 = sphi 0, %s914
      %s932 = sphi 0, %s932
      %s934 = sphi 0, %s932
      %s935 = sphi 0, %s934
      %s949 = sphi 0, %s935
      %s953 = sphi 0, %s953
      %s955 = sphi 0, %s953
      %s956 = sphi 0, %s955
      %s970 = sphi 0, %s956
      %s974 = sphi 0, %s974
      %s976 = sphi 0, %s974
      %s977 = sphi 0, %s976
      %s991 = sphi 0, %s977
      %s995 = sphi 0, %s995
      %s997 = sphi 0, %s995
      %s998 = sphi 0, %s997
      %s1012 = sphi 0, %s998
      %s1016 = sphi 0, %s1016
      %s1018 = sphi 0, %s1016
      %s1019 = sphi 0, %s1018
      %s1033 = sphi 0, %s1019
      %s1037 = sphi 0, %s1037
      %s1039 = sphi 0, %s1037
      %s1040 = sphi 0, %s1039
      %s1054 = sphi 0, %s1040
      %s1058 = sphi 0, %s1058
      %s1060 = sphi 0, %s1058
      %s1061 = sphi 0, %s1060
      %s1075 = sphi 0, %s1061
      %s1079 = sphi 0, %s1079
      %s1081 = sphi 0, %s1079
      %s1082 = sphi 0, %s1081
      %s1096 = sphi 0, %s1082
      %s1100 = sphi 0, %s1100
      %s1102 = sphi 0, %s1100
      %s1103 = sphi 0, %s1102
      %s1117 = sphi 0, %s1103
      %s1121 = sphi 0, %s1121
      %s1123 = sphi 0, %s1121
      %s1124 = sphi 0, %s1123
      %s1138 = sphi 0, %s1124
      %s1142 = sphi 0, %s1142
      %s1144 = sphi 0, %s1142
      %s1145 = sphi 0, %s1144
      %s1159 = sphi 0, %s1145
      %s1163 = sphi 0, %s1163
      %s1165 = sphi 0, %s1163
      %s1166 = sphi 0, %s1165
      %s1180 = sphi 0, %s1166
      %s1184 = sphi 0, %s1184
      %s1186 = sphi 0, %s1184
      %s1187 = sphi 0, %s1186
      %s1201 = sphi 0, %s1187
      %s1205 = sphi 0, %s1205
      %s1207 = sphi 0, %s1205
      %s1208 = sphi 0, %s1207
      %s1222 = sphi 0, %s1208
      %s1226 = sphi 0, %s1226
      %s1228 = sphi 0, %s1226
      %s1229 = sphi 0, %s1228
      %s1243 = sphi 0, %s1229
      %s1247 = sphi 0, %s1247
      %s1249 = sphi 0, %s1247
      %s1250 = sphi 0, %s1249
      %s1264 = sphi 0, %s1250
      %s1268 = sphi 0, %s1268
      %s1270 = sphi 0, %s1268
      %s1271 = sphi 0, %s1270
      %s1285 = sphi 0, %s1271
      %s1289 = sphi 0, %s1289
      %s1291 = sphi 0, %s1289
      %s1292 = sphi 0, %s1291
      %s1306 = sphi 0, %s1292
      %s1310 = sphi 0, %s1310
      %s1312 = sphi 0, %s1310
      %s1313 = sphi 0, %s1312
      %s1327 = sphi 0, %s1313
      %s1331 = sphi 0, %s1331
      %s1333 = sphi 0, %s1331
      %s1334 = sphi 0, %s1333
      %s1348 = sphi 0, %s1334
      %s1352 = sphi 0, %s1352
      %s1354 = sphi 0, %s1352
      %s1355 = sphi 0, %s1354
      %s1369 = sphi 0, %s1355
      %s1373 = sphi 0, %s1373
      %s1375 = sphi 0, %s1373
      %s1376 = sphi 0, %s1375
      %s1390 = sphi 0, %s1376
      %s1394 = sphi 0, %s1394
      %s1396 = sphi 0, %s1394
      %s1397 = sphi 0, %s1396
      %s1411 = sphi 0, %s1397
      %s1415 = sphi 0, %s1415
      %s1417 = sphi 0, %s1415
      %s1418 = sphi 0, %s1417
      %s1432 = sphi 0, %s1418
      %s1436 = sphi 0, %s1436
      %s1438 = sphi 0, %s1436
      %s1439 = sphi 0, %s1438
      %s1453 = sphi 0, %s1439
      %s1457 = sphi 0, %s1457
      %s1459 = sphi 0, %s1457
      %s1460 = sphi 0, %s1459
      %s1474 = sphi 0, %s1460
      %s1478 = sphi 0, %s1478
      %s1480 = sphi 0, %s1478
      %s1481 = sphi 0, %s1480
      %s1495 = sphi 0, %s1481
      %s1501 = sphi 0, %s1503
      %s1504 = sphi 0, %s1501
      %s1505 = sphi 0, %s1504
      %s1521 = sphi 0, %s1505
    $region4: #{dqn_forward.1} parent=1 // loop_header_branch
      %145 = sbr.rel (%p143) target = $region8
    $region5: #{dqn_forward.1} parent=1 // loop_body
      %s147 = ssub.s32 %s142, 1
      %s148 = ssub.s32 %s142, 2
      %s149 = sadd.s32 %s142, 1
      %s150 = ssub.s32 %s142, %s149
      %p151 = scmp.eq.s32.totalorder %s150, 0
      %s153 = sadd.s32 %s152, 1
      %s154 = scalar_select %p151, %s152, %s153
      %p157 = pneg %p151
      %p158 = scmp.eq.s32.totalorder %s142, 1
      %p159 = por %p157, %p158
      %p160 = scmp.ne.s32.totalorder %s152, %s155
      %p161 = scmp.eq.s32.totalorder %s142, 0
      %p162 = por %p160, %p161
      %p163 = scmp.ne.s32.totalorder %s152, %s155
      %p164 = scmp.eq.s32.totalorder %s147, 1
      %p165 = por %p163, %p164
      %p166 = scmp.ne.s32.totalorder %s155, %s156
      %p167 = scmp.eq.s32.totalorder %s147, 0
      %p168 = por %p166, %p167
      %p169 = scmp.ne.s32.totalorder %s155, %s156
      %p170 = scmp.eq.s32.totalorder %s148, 1
      %p171 = por %p169, %p170
      %p173 = scmp.ne.s32.totalorder %s156, %s172
      %p174 = scmp.eq.s32.totalorder %s148, 0
      %p175 = por %p173, %p174
      %s177 = sadd.s32 %s176, 1
      %p180 = scmp.eq.s32.totalorder %s142, 1
      %p181 = scmp.ne.s32.totalorder %s176, %s178
      %p182 = scmp.eq.s32.totalorder %s142, 0
      %p183 = por %p181, %p182
      %p184 = scmp.ne.s32.totalorder %s176, %s178
      %p185 = scmp.eq.s32.totalorder %s147, 1
      %p186 = por %p184, %p185
      %p187 = scmp.ne.s32.totalorder %s178, %s179
      %p188 = scmp.eq.s32.totalorder %s147, 0
      %p189 = por %p187, %p188
      %p190 = scmp.ne.s32.totalorder %s178, %s179
      %p191 = scmp.eq.s32.totalorder %s148, 1
      %p192 = por %p190, %p191
      %p194 = scmp.ne.s32.totalorder %s179, %s193
      %p195 = scmp.eq.s32.totalorder %s148, 0
      %p196 = por %p194, %p195
      %s198 = sadd.s32 %s197, 1
      %p201 = scmp.eq.s32.totalorder %s142, 1
      %p202 = scmp.ne.s32.totalorder %s197, %s199
      %p203 = scmp.eq.s32.totalorder %s142, 0
      %p204 = por %p202, %p203
      %p205 = scmp.ne.s32.totalorder %s197, %s199
      %p206 = scmp.eq.s32.totalorder %s147, 1
      %p207 = por %p205, %p206
      %p208 = scmp.ne.s32.totalorder %s199, %s200
      %p209 = scmp.eq.s32.totalorder %s147, 0
      %p210 = por %p208, %p209
      %p211 = scmp.ne.s32.totalorder %s199, %s200
      %p212 = scmp.eq.s32.totalorder %s148, 1
      %p213 = por %p211, %p212
      %p215 = scmp.ne.s32.totalorder %s200, %s214
      %p216 = scmp.eq.s32.totalorder %s148, 0
      %p217 = por %p215, %p216
      %s219 = sadd.s32 %s218, 1
      %p222 = scmp.eq.s32.totalorder %s142, 1
      %p223 = scmp.ne.s32.totalorder %s218, %s220
      %p224 = scmp.eq.s32.totalorder %s142, 0
      %p225 = por %p223, %p224
      %p226 = scmp.ne.s32.totalorder %s218, %s220
      %p227 = scmp.eq.s32.totalorder %s147, 1
      %p228 = por %p226, %p227
      %p229 = scmp.ne.s32.totalorder %s220, %s221
      %p230 = scmp.eq.s32.totalorder %s147, 0
      %p231 = por %p229, %p230
      %p232 = scmp.ne.s32.totalorder %s220, %s221
      %p233 = scmp.eq.s32.totalorder %s148, 1
      %p234 = por %p232, %p233
      %p236 = scmp.ne.s32.totalorder %s221, %s235
      %p237 = scmp.eq.s32.totalorder %s148, 0
      %p238 = por %p236, %p237
      %s240 = sadd.s32 %s239, 1
      %p243 = scmp.eq.s32.totalorder %s142, 1
      %p244 = scmp.ne.s32.totalorder %s239, %s241
      %p245 = scmp.eq.s32.totalorder %s142, 0
      %p246 = por %p244, %p245
      %p247 = scmp.ne.s32.totalorder %s239, %s241
      %p248 = scmp.eq.s32.totalorder %s147, 1
      %p249 = por %p247, %p248
      %p250 = scmp.ne.s32.totalorder %s241, %s242
      %p251 = scmp.eq.s32.totalorder %s147, 0
      %p252 = por %p250, %p251
      %p253 = scmp.ne.s32.totalorder %s241, %s242
      %p254 = scmp.eq.s32.totalorder %s148, 1
      %p255 = por %p253, %p254
      %p257 = scmp.ne.s32.totalorder %s242, %s256
      %p258 = scmp.eq.s32.totalorder %s148, 0
      %p259 = por %p257, %p258
      %s261 = sadd.s32 %s260, 1
      %p264 = scmp.eq.s32.totalorder %s142, 1
      %p265 = scmp.ne.s32.totalorder %s260, %s262
      %p266 = scmp.eq.s32.totalorder %s142, 0
      %p267 = por %p265, %p266
      %p268 = scmp.ne.s32.totalorder %s260, %s262
      %p269 = scmp.eq.s32.totalorder %s147, 1
      %p270 = por %p268, %p269
      %p271 = scmp.ne.s32.totalorder %s262, %s263
      %p272 = scmp.eq.s32.totalorder %s147, 0
      %p273 = por %p271, %p272
      %p274 = scmp.ne.s32.totalorder %s262, %s263
      %p275 = scmp.eq.s32.totalorder %s148, 1
      %p276 = por %p274, %p275
      %p278 = scmp.ne.s32.totalorder %s263, %s277
      %p279 = scmp.eq.s32.totalorder %s148, 0
      %p280 = por %p278, %p279
      %s282 = sadd.s32 %s281, 1
      %p285 = scmp.eq.s32.totalorder %s142, 1
      %p286 = scmp.ne.s32.totalorder %s281, %s283
      %p287 = scmp.eq.s32.totalorder %s142, 0
      %p288 = por %p286, %p287
      %p289 = scmp.ne.s32.totalorder %s281, %s283
      %p290 = scmp.eq.s32.totalorder %s147, 1
      %p291 = por %p289, %p290
      %p292 = scmp.ne.s32.totalorder %s283, %s284
      %p293 = scmp.eq.s32.totalorder %s147, 0
      %p294 = por %p292, %p293
      %p295 = scmp.ne.s32.totalorder %s283, %s284
      %p296 = scmp.eq.s32.totalorder %s148, 1
      %p297 = por %p295, %p296
      %p299 = scmp.ne.s32.totalorder %s284, %s298
      %p300 = scmp.eq.s32.totalorder %s148, 0
      %p301 = por %p299, %p300
      %s303 = sadd.s32 %s302, 1
      %p306 = scmp.eq.s32.totalorder %s142, 1
      %p307 = scmp.ne.s32.totalorder %s302, %s304
      %p308 = scmp.eq.s32.totalorder %s142, 0
      %p309 = por %p307, %p308
      %p310 = scmp.ne.s32.totalorder %s302, %s304
      %p311 = scmp.eq.s32.totalorder %s147, 1
      %p312 = por %p310, %p311
      %p313 = scmp.ne.s32.totalorder %s304, %s305
      %p314 = scmp.eq.s32.totalorder %s147, 0
      %p315 = por %p313, %p314
      %p316 = scmp.ne.s32.totalorder %s304, %s305
      %p317 = scmp.eq.s32.totalorder %s148, 1
      %p318 = por %p316, %p317
      %p320 = scmp.ne.s32.totalorder %s305, %s319
      %p321 = scmp.eq.s32.totalorder %s148, 0
      %p322 = por %p320, %p321
      %s324 = sadd.s32 %s323, 1
      %p327 = scmp.eq.s32.totalorder %s142, 1
      %p328 = scmp.ne.s32.totalorder %s323, %s325
      %p329 = scmp.eq.s32.totalorder %s142, 0
      %p330 = por %p328, %p329
      %p331 = scmp.ne.s32.totalorder %s323, %s325
      %p332 = scmp.eq.s32.totalorder %s147, 1
      %p333 = por %p331, %p332
      %p334 = scmp.ne.s32.totalorder %s325, %s326
      %p335 = scmp.eq.s32.totalorder %s147, 0
      %p336 = por %p334, %p335
      %p337 = scmp.ne.s32.totalorder %s325, %s326
      %p338 = scmp.eq.s32.totalorder %s148, 1
      %p339 = por %p337, %p338
      %p341 = scmp.ne.s32.totalorder %s326, %s340
      %p342 = scmp.eq.s32.totalorder %s148, 0
      %p343 = por %p341, %p342
      %s345 = sadd.s32 %s344, 1
      %p348 = scmp.eq.s32.totalorder %s142, 1
      %p349 = scmp.ne.s32.totalorder %s344, %s346
      %p350 = scmp.eq.s32.totalorder %s142, 0
      %p351 = por %p349, %p350
      %p352 = scmp.ne.s32.totalorder %s344, %s346
      %p353 = scmp.eq.s32.totalorder %s147, 1
      %p354 = por %p352, %p353
      %p355 = scmp.ne.s32.totalorder %s346, %s347
      %p356 = scmp.eq.s32.totalorder %s147, 0
      %p357 = por %p355, %p356
      %p358 = scmp.ne.s32.totalorder %s346, %s347
      %p359 = scmp.eq.s32.totalorder %s148, 1
      %p360 = por %p358, %p359
      %p362 = scmp.ne.s32.totalorder %s347, %s361
      %p363 = scmp.eq.s32.totalorder %s148, 0
      %p364 = por %p362, %p363
      %s366 = sadd.s32 %s365, 1
      %p369 = scmp.eq.s32.totalorder %s142, 1
      %p370 = scmp.ne.s32.totalorder %s365, %s367
      %p371 = scmp.eq.s32.totalorder %s142, 0
      %p372 = por %p370, %p371
      %p373 = scmp.ne.s32.totalorder %s365, %s367
      %p374 = scmp.eq.s32.totalorder %s147, 1
      %p375 = por %p373, %p374
      %p376 = scmp.ne.s32.totalorder %s367, %s368
      %p377 = scmp.eq.s32.totalorder %s147, 0
      %p378 = por %p376, %p377
      %p379 = scmp.ne.s32.totalorder %s367, %s368
      %p380 = scmp.eq.s32.totalorder %s148, 1
      %p381 = por %p379, %p380
      %p383 = scmp.ne.s32.totalorder %s368, %s382
      %p384 = scmp.eq.s32.totalorder %s148, 0
      %p385 = por %p383, %p384
      %s387 = sadd.s32 %s386, 1
      %p390 = scmp.eq.s32.totalorder %s142, 1
      %p391 = scmp.ne.s32.totalorder %s386, %s388
      %p392 = scmp.eq.s32.totalorder %s142, 0
      %p393 = por %p391, %p392
      %p394 = scmp.ne.s32.totalorder %s386, %s388
      %p395 = scmp.eq.s32.totalorder %s147, 1
      %p396 = por %p394, %p395
      %p397 = scmp.ne.s32.totalorder %s388, %s389
      %p398 = scmp.eq.s32.totalorder %s147, 0
      %p399 = por %p397, %p398
      %p400 = scmp.ne.s32.totalorder %s388, %s389
      %p401 = scmp.eq.s32.totalorder %s148, 1
      %p402 = por %p400, %p401
      %p404 = scmp.ne.s32.totalorder %s389, %s403
      %p405 = scmp.eq.s32.totalorder %s148, 0
      %p406 = por %p404, %p405
      %s408 = sadd.s32 %s407, 1
      %p411 = scmp.eq.s32.totalorder %s142, 1
      %p412 = scmp.ne.s32.totalorder %s407, %s409
      %p413 = scmp.eq.s32.totalorder %s142, 0
      %p414 = por %p412, %p413
      %p415 = scmp.ne.s32.totalorder %s407, %s409
      %p416 = scmp.eq.s32.totalorder %s147, 1
      %p417 = por %p415, %p416
      %p418 = scmp.ne.s32.totalorder %s409, %s410
      %p419 = scmp.eq.s32.totalorder %s147, 0
      %p420 = por %p418, %p419
      %p421 = scmp.ne.s32.totalorder %s409, %s410
      %p422 = scmp.eq.s32.totalorder %s148, 1
      %p423 = por %p421, %p422
      %p425 = scmp.ne.s32.totalorder %s410, %s424
      %p426 = scmp.eq.s32.totalorder %s148, 0
      %p427 = por %p425, %p426
      %s429 = sadd.s32 %s428, 1
      %p432 = scmp.eq.s32.totalorder %s142, 1
      %p433 = scmp.ne.s32.totalorder %s428, %s430
      %p434 = scmp.eq.s32.totalorder %s142, 0
      %p435 = por %p433, %p434
      %p436 = scmp.ne.s32.totalorder %s428, %s430
      %p437 = scmp.eq.s32.totalorder %s147, 1
      %p438 = por %p436, %p437
      %p439 = scmp.ne.s32.totalorder %s430, %s431
      %p440 = scmp.eq.s32.totalorder %s147, 0
      %p441 = por %p439, %p440
      %p442 = scmp.ne.s32.totalorder %s430, %s431
      %p443 = scmp.eq.s32.totalorder %s148, 1
      %p444 = por %p442, %p443
      %p446 = scmp.ne.s32.totalorder %s431, %s445
      %p447 = scmp.eq.s32.totalorder %s148, 0
      %p448 = por %p446, %p447
      %s450 = sadd.s32 %s449, 1
      %p453 = scmp.eq.s32.totalorder %s142, 1
      %p454 = scmp.ne.s32.totalorder %s449, %s451
      %p455 = scmp.eq.s32.totalorder %s142, 0
      %p456 = por %p454, %p455
      %p457 = scmp.ne.s32.totalorder %s449, %s451
      %p458 = scmp.eq.s32.totalorder %s147, 1
      %p459 = por %p457, %p458
      %p460 = scmp.ne.s32.totalorder %s451, %s452
      %p461 = scmp.eq.s32.totalorder %s147, 0
      %p462 = por %p460, %p461
      %p463 = scmp.ne.s32.totalorder %s451, %s452
      %p464 = scmp.eq.s32.totalorder %s148, 1
      %p465 = por %p463, %p464
      %p467 = scmp.ne.s32.totalorder %s452, %s466
      %p468 = scmp.eq.s32.totalorder %s148, 0
      %p469 = por %p467, %p468
      %s471 = sadd.s32 %s470, 1
      %p474 = scmp.eq.s32.totalorder %s142, 1
      %p475 = scmp.ne.s32.totalorder %s470, %s472
      %p476 = scmp.eq.s32.totalorder %s142, 0
      %p477 = por %p475, %p476
      %p478 = scmp.ne.s32.totalorder %s470, %s472
      %p479 = scmp.eq.s32.totalorder %s147, 1
      %p480 = por %p478, %p479
      %p481 = scmp.ne.s32.totalorder %s472, %s473
      %p482 = scmp.eq.s32.totalorder %s147, 0
      %p483 = por %p481, %p482
      %p484 = scmp.ne.s32.totalorder %s472, %s473
      %p485 = scmp.eq.s32.totalorder %s148, 1
      %p486 = por %p484, %p485
      %p488 = scmp.ne.s32.totalorder %s473, %s487
      %p489 = scmp.eq.s32.totalorder %s148, 0
      %p490 = por %p488, %p489
      %s492 = sadd.s32 %s491, 1
      %p495 = scmp.eq.s32.totalorder %s142, 1
      %p496 = scmp.ne.s32.totalorder %s491, %s493
      %p497 = scmp.eq.s32.totalorder %s142, 0
      %p498 = por %p496, %p497
      %p499 = scmp.ne.s32.totalorder %s491, %s493
      %p500 = scmp.eq.s32.totalorder %s147, 1
      %p501 = por %p499, %p500
      %p502 = scmp.ne.s32.totalorder %s493, %s494
      %p503 = scmp.eq.s32.totalorder %s147, 0
      %p504 = por %p502, %p503
      %p505 = scmp.ne.s32.totalorder %s493, %s494
      %p506 = scmp.eq.s32.totalorder %s148, 1
      %p507 = por %p505, %p506
      %p509 = scmp.ne.s32.totalorder %s494, %s508
      %p510 = scmp.eq.s32.totalorder %s148, 0
      %p511 = por %p509, %p510
      %s513 = sadd.s32 %s512, 1
      %p516 = scmp.eq.s32.totalorder %s142, 1
      %p517 = scmp.ne.s32.totalorder %s512, %s514
      %p518 = scmp.eq.s32.totalorder %s142, 0
      %p519 = por %p517, %p518
      %p520 = scmp.ne.s32.totalorder %s512, %s514
      %p521 = scmp.eq.s32.totalorder %s147, 1
      %p522 = por %p520, %p521
      %p523 = scmp.ne.s32.totalorder %s514, %s515
      %p524 = scmp.eq.s32.totalorder %s147, 0
      %p525 = por %p523, %p524
      %p526 = scmp.ne.s32.totalorder %s514, %s515
      %p527 = scmp.eq.s32.totalorder %s148, 1
      %p528 = por %p526, %p527
      %p530 = scmp.ne.s32.totalorder %s515, %s529
      %p531 = scmp.eq.s32.totalorder %s148, 0
      %p532 = por %p530, %p531
      %s534 = sadd.s32 %s533, 1
      %p537 = scmp.eq.s32.totalorder %s142, 1
      %p538 = scmp.ne.s32.totalorder %s533, %s535
      %p539 = scmp.eq.s32.totalorder %s142, 0
      %p540 = por %p538, %p539
      %p541 = scmp.ne.s32.totalorder %s533, %s535
      %p542 = scmp.eq.s32.totalorder %s147, 1
      %p543 = por %p541, %p542
      %p544 = scmp.ne.s32.totalorder %s535, %s536
      %p545 = scmp.eq.s32.totalorder %s147, 0
      %p546 = por %p544, %p545
      %p547 = scmp.ne.s32.totalorder %s535, %s536
      %p548 = scmp.eq.s32.totalorder %s148, 1
      %p549 = por %p547, %p548
      %p551 = scmp.ne.s32.totalorder %s536, %s550
      %p552 = scmp.eq.s32.totalorder %s148, 0
      %p553 = por %p551, %p552
      %s555 = sadd.s32 %s554, 1
      %p558 = scmp.eq.s32.totalorder %s142, 1
      %p559 = scmp.ne.s32.totalorder %s554, %s556
      %p560 = scmp.eq.s32.totalorder %s142, 0
      %p561 = por %p559, %p560
      %p562 = scmp.ne.s32.totalorder %s554, %s556
      %p563 = scmp.eq.s32.totalorder %s147, 1
      %p564 = por %p562, %p563
      %p565 = scmp.ne.s32.totalorder %s556, %s557
      %p566 = scmp.eq.s32.totalorder %s147, 0
      %p567 = por %p565, %p566
      %p568 = scmp.ne.s32.totalorder %s556, %s557
      %p569 = scmp.eq.s32.totalorder %s148, 1
      %p570 = por %p568, %p569
      %p572 = scmp.ne.s32.totalorder %s557, %s571
      %p573 = scmp.eq.s32.totalorder %s148, 0
      %p574 = por %p572, %p573
      %s576 = sadd.s32 %s575, 1
      %p579 = scmp.eq.s32.totalorder %s142, 1
      %p580 = scmp.ne.s32.totalorder %s575, %s577
      %p581 = scmp.eq.s32.totalorder %s142, 0
      %p582 = por %p580, %p581
      %p583 = scmp.ne.s32.totalorder %s575, %s577
      %p584 = scmp.eq.s32.totalorder %s147, 1
      %p585 = por %p583, %p584
      %p586 = scmp.ne.s32.totalorder %s577, %s578
      %p587 = scmp.eq.s32.totalorder %s147, 0
      %p588 = por %p586, %p587
      %p589 = scmp.ne.s32.totalorder %s577, %s578
      %p590 = scmp.eq.s32.totalorder %s148, 1
      %p591 = por %p589, %p590
      %p593 = scmp.ne.s32.totalorder %s578, %s592
      %p594 = scmp.eq.s32.totalorder %s148, 0
      %p595 = por %p593, %p594
      %s597 = sadd.s32 %s596, 1
      %p600 = scmp.eq.s32.totalorder %s142, 1
      %p601 = scmp.ne.s32.totalorder %s596, %s598
      %p602 = scmp.eq.s32.totalorder %s142, 0
      %p603 = por %p601, %p602
      %p604 = scmp.ne.s32.totalorder %s596, %s598
      %p605 = scmp.eq.s32.totalorder %s147, 1
      %p606 = por %p604, %p605
      %p607 = scmp.ne.s32.totalorder %s598, %s599
      %p608 = scmp.eq.s32.totalorder %s147, 0
      %p609 = por %p607, %p608
      %p610 = scmp.ne.s32.totalorder %s598, %s599
      %p611 = scmp.eq.s32.totalorder %s148, 1
      %p612 = por %p610, %p611
      %p614 = scmp.ne.s32.totalorder %s599, %s613
      %p615 = scmp.eq.s32.totalorder %s148, 0
      %p616 = por %p614, %p615
      %s618 = sadd.s32 %s617, 1
      %p621 = scmp.eq.s32.totalorder %s142, 1
      %p622 = scmp.ne.s32.totalorder %s617, %s619
      %p623 = scmp.eq.s32.totalorder %s142, 0
      %p624 = por %p622, %p623
      %p625 = scmp.ne.s32.totalorder %s617, %s619
      %p626 = scmp.eq.s32.totalorder %s147, 1
      %p627 = por %p625, %p626
      %p628 = scmp.ne.s32.totalorder %s619, %s620
      %p629 = scmp.eq.s32.totalorder %s147, 0
      %p630 = por %p628, %p629
      %p631 = scmp.ne.s32.totalorder %s619, %s620
      %p632 = scmp.eq.s32.totalorder %s148, 1
      %p633 = por %p631, %p632
      %p635 = scmp.ne.s32.totalorder %s620, %s634
      %p636 = scmp.eq.s32.totalorder %s148, 0
      %p637 = por %p635, %p636
      %s639 = sadd.s32 %s638, 1
      %p642 = scmp.eq.s32.totalorder %s142, 1
      %p643 = scmp.ne.s32.totalorder %s638, %s640
      %p644 = scmp.eq.s32.totalorder %s142, 0
      %p645 = por %p643, %p644
      %p646 = scmp.ne.s32.totalorder %s638, %s640
      %p647 = scmp.eq.s32.totalorder %s147, 1
      %p648 = por %p646, %p647
      %p649 = scmp.ne.s32.totalorder %s640, %s641
      %p650 = scmp.eq.s32.totalorder %s147, 0
      %p651 = por %p649, %p650
      %p652 = scmp.ne.s32.totalorder %s640, %s641
      %p653 = scmp.eq.s32.totalorder %s148, 1
      %p654 = por %p652, %p653
      %p656 = scmp.ne.s32.totalorder %s641, %s655
      %p657 = scmp.eq.s32.totalorder %s148, 0
      %p658 = por %p656, %p657
      %s660 = sadd.s32 %s659, 1
      %p663 = scmp.eq.s32.totalorder %s142, 1
      %p664 = scmp.ne.s32.totalorder %s659, %s661
      %p665 = scmp.eq.s32.totalorder %s142, 0
      %p666 = por %p664, %p665
      %p667 = scmp.ne.s32.totalorder %s659, %s661
      %p668 = scmp.eq.s32.totalorder %s147, 1
      %p669 = por %p667, %p668
      %p670 = scmp.ne.s32.totalorder %s661, %s662
      %p671 = scmp.eq.s32.totalorder %s147, 0
      %p672 = por %p670, %p671
      %p673 = scmp.ne.s32.totalorder %s661, %s662
      %p674 = scmp.eq.s32.totalorder %s148, 1
      %p675 = por %p673, %p674
      %p677 = scmp.ne.s32.totalorder %s662, %s676
      %p678 = scmp.eq.s32.totalorder %s148, 0
      %p679 = por %p677, %p678
      %s681 = sadd.s32 %s680, 1
      %p684 = scmp.eq.s32.totalorder %s142, 1
      %p685 = scmp.ne.s32.totalorder %s680, %s682
      %p686 = scmp.eq.s32.totalorder %s142, 0
      %p687 = por %p685, %p686
      %p688 = scmp.ne.s32.totalorder %s680, %s682
      %p689 = scmp.eq.s32.totalorder %s147, 1
      %p690 = por %p688, %p689
      %p691 = scmp.ne.s32.totalorder %s682, %s683
      %p692 = scmp.eq.s32.totalorder %s147, 0
      %p693 = por %p691, %p692
      %p694 = scmp.ne.s32.totalorder %s682, %s683
      %p695 = scmp.eq.s32.totalorder %s148, 1
      %p696 = por %p694, %p695
      %p698 = scmp.ne.s32.totalorder %s683, %s697
      %p699 = scmp.eq.s32.totalorder %s148, 0
      %p700 = por %p698, %p699
      %s702 = sadd.s32 %s701, 1
      %p705 = scmp.eq.s32.totalorder %s142, 1
      %p706 = scmp.ne.s32.totalorder %s701, %s703
      %p707 = scmp.eq.s32.totalorder %s142, 0
      %p708 = por %p706, %p707
      %p709 = scmp.ne.s32.totalorder %s701, %s703
      %p710 = scmp.eq.s32.totalorder %s147, 1
      %p711 = por %p709, %p710
      %p712 = scmp.ne.s32.totalorder %s703, %s704
      %p713 = scmp.eq.s32.totalorder %s147, 0
      %p714 = por %p712, %p713
      %p715 = scmp.ne.s32.totalorder %s703, %s704
      %p716 = scmp.eq.s32.totalorder %s148, 1
      %p717 = por %p715, %p716
      %p719 = scmp.ne.s32.totalorder %s704, %s718
      %p720 = scmp.eq.s32.totalorder %s148, 0
      %p721 = por %p719, %p720
      %s723 = sadd.s32 %s722, 1
      %p726 = scmp.eq.s32.totalorder %s142, 1
      %p727 = scmp.ne.s32.totalorder %s722, %s724
      %p728 = scmp.eq.s32.totalorder %s142, 0
      %p729 = por %p727, %p728
      %p730 = scmp.ne.s32.totalorder %s722, %s724
      %p731 = scmp.eq.s32.totalorder %s147, 1
      %p732 = por %p730, %p731
      %p733 = scmp.ne.s32.totalorder %s724, %s725
      %p734 = scmp.eq.s32.totalorder %s147, 0
      %p735 = por %p733, %p734
      %p736 = scmp.ne.s32.totalorder %s724, %s725
      %p737 = scmp.eq.s32.totalorder %s148, 1
      %p738 = por %p736, %p737
      %p740 = scmp.ne.s32.totalorder %s725, %s739
      %p741 = scmp.eq.s32.totalorder %s148, 0
      %p742 = por %p740, %p741
      %s744 = sadd.s32 %s743, 1
      %p747 = scmp.eq.s32.totalorder %s142, 1
      %p748 = scmp.ne.s32.totalorder %s743, %s745
      %p749 = scmp.eq.s32.totalorder %s142, 0
      %p750 = por %p748, %p749
      %p751 = scmp.ne.s32.totalorder %s743, %s745
      %p752 = scmp.eq.s32.totalorder %s147, 1
      %p753 = por %p751, %p752
      %p754 = scmp.ne.s32.totalorder %s745, %s746
      %p755 = scmp.eq.s32.totalorder %s147, 0
      %p756 = por %p754, %p755
      %p757 = scmp.ne.s32.totalorder %s745, %s746
      %p758 = scmp.eq.s32.totalorder %s148, 1
      %p759 = por %p757, %p758
      %p761 = scmp.ne.s32.totalorder %s746, %s760
      %p762 = scmp.eq.s32.totalorder %s148, 0
      %p763 = por %p761, %p762
      %s765 = sadd.s32 %s764, 1
      %p768 = scmp.eq.s32.totalorder %s142, 1
      %p769 = scmp.ne.s32.totalorder %s764, %s766
      %p770 = scmp.eq.s32.totalorder %s142, 0
      %p771 = por %p769, %p770
      %p772 = scmp.ne.s32.totalorder %s764, %s766
      %p773 = scmp.eq.s32.totalorder %s147, 1
      %p774 = por %p772, %p773
      %p775 = scmp.ne.s32.totalorder %s766, %s767
      %p776 = scmp.eq.s32.totalorder %s147, 0
      %p777 = por %p775, %p776
      %p778 = scmp.ne.s32.totalorder %s766, %s767
      %p779 = scmp.eq.s32.totalorder %s148, 1
      %p780 = por %p778, %p779
      %p782 = scmp.ne.s32.totalorder %s767, %s781
      %p783 = scmp.eq.s32.totalorder %s148, 0
      %p784 = por %p782, %p783
      %s786 = sadd.s32 %s785, 1
      %p789 = scmp.eq.s32.totalorder %s142, 1
      %p790 = scmp.ne.s32.totalorder %s785, %s787
      %p791 = scmp.eq.s32.totalorder %s142, 0
      %p792 = por %p790, %p791
      %p793 = scmp.ne.s32.totalorder %s785, %s787
      %p794 = scmp.eq.s32.totalorder %s147, 1
      %p795 = por %p793, %p794
      %p796 = scmp.ne.s32.totalorder %s787, %s788
      %p797 = scmp.eq.s32.totalorder %s147, 0
      %p798 = por %p796, %p797
      %p799 = scmp.ne.s32.totalorder %s787, %s788
      %p800 = scmp.eq.s32.totalorder %s148, 1
      %p801 = por %p799, %p800
      %p803 = scmp.ne.s32.totalorder %s788, %s802
      %p804 = scmp.eq.s32.totalorder %s148, 0
      %p805 = por %p803, %p804
      %s807 = sadd.s32 %s806, 1
      %p810 = scmp.eq.s32.totalorder %s142, 1
      %p811 = scmp.ne.s32.totalorder %s806, %s808
      %p812 = scmp.eq.s32.totalorder %s142, 0
      %p813 = por %p811, %p812
      %p814 = scmp.ne.s32.totalorder %s806, %s808
      %p815 = scmp.eq.s32.totalorder %s147, 1
      %p816 = por %p814, %p815
      %p817 = scmp.ne.s32.totalorder %s808, %s809
      %p818 = scmp.eq.s32.totalorder %s147, 0
      %p819 = por %p817, %p818
      %p820 = scmp.ne.s32.totalorder %s808, %s809
      %p821 = scmp.eq.s32.totalorder %s148, 1
      %p822 = por %p820, %p821
      %p824 = scmp.ne.s32.totalorder %s809, %s823
      %p825 = scmp.eq.s32.totalorder %s148, 0
      %p826 = por %p824, %p825
      %s828 = sadd.s32 %s827, 1
      %p831 = scmp.eq.s32.totalorder %s142, 1
      %p832 = scmp.ne.s32.totalorder %s827, %s829
      %p833 = scmp.eq.s32.totalorder %s142, 0
      %p834 = por %p832, %p833
      %p835 = scmp.ne.s32.totalorder %s827, %s829
      %p836 = scmp.eq.s32.totalorder %s147, 1
      %p837 = por %p835, %p836
      %p838 = scmp.ne.s32.totalorder %s829, %s830
      %p839 = scmp.eq.s32.totalorder %s147, 0
      %p840 = por %p838, %p839
      %p841 = scmp.ne.s32.totalorder %s829, %s830
      %p842 = scmp.eq.s32.totalorder %s148, 1
      %p843 = por %p841, %p842
      %p845 = scmp.ne.s32.totalorder %s830, %s844
      %p846 = scmp.eq.s32.totalorder %s148, 0
      %p847 = por %p845, %p846
      %s849 = sadd.s32 %s848, 1
      %p852 = scmp.eq.s32.totalorder %s142, 1
      %p853 = scmp.ne.s32.totalorder %s848, %s850
      %p854 = scmp.eq.s32.totalorder %s142, 0
      %p855 = por %p853, %p854
      %p856 = scmp.ne.s32.totalorder %s848, %s850
      %p857 = scmp.eq.s32.totalorder %s147, 1
      %p858 = por %p856, %p857
      %p859 = scmp.ne.s32.totalorder %s850, %s851
      %p860 = scmp.eq.s32.totalorder %s147, 0
      %p861 = por %p859, %p860
      %p862 = scmp.ne.s32.totalorder %s850, %s851
      %p863 = scmp.eq.s32.totalorder %s148, 1
      %p864 = por %p862, %p863
      %p866 = scmp.ne.s32.totalorder %s851, %s865
      %p867 = scmp.eq.s32.totalorder %s148, 0
      %p868 = por %p866, %p867
      %s870 = sadd.s32 %s869, 1
      %p873 = scmp.eq.s32.totalorder %s142, 1
      %p874 = scmp.ne.s32.totalorder %s869, %s871
      %p875 = scmp.eq.s32.totalorder %s142, 0
      %p876 = por %p874, %p875
      %p877 = scmp.ne.s32.totalorder %s869, %s871
      %p878 = scmp.eq.s32.totalorder %s147, 1
      %p879 = por %p877, %p878
      %p880 = scmp.ne.s32.totalorder %s871, %s872
      %p881 = scmp.eq.s32.totalorder %s147, 0
      %p882 = por %p880, %p881
      %p883 = scmp.ne.s32.totalorder %s871, %s872
      %p884 = scmp.eq.s32.totalorder %s148, 1
      %p885 = por %p883, %p884
      %p887 = scmp.ne.s32.totalorder %s872, %s886
      %p888 = scmp.eq.s32.totalorder %s148, 0
      %p889 = por %p887, %p888
      %s891 = sadd.s32 %s890, 1
      %p894 = scmp.eq.s32.totalorder %s142, 1
      %p895 = scmp.ne.s32.totalorder %s890, %s892
      %p896 = scmp.eq.s32.totalorder %s142, 0
      %p897 = por %p895, %p896
      %p898 = scmp.ne.s32.totalorder %s890, %s892
      %p899 = scmp.eq.s32.totalorder %s147, 1
      %p900 = por %p898, %p899
      %p901 = scmp.ne.s32.totalorder %s892, %s893
      %p902 = scmp.eq.s32.totalorder %s147, 0
      %p903 = por %p901, %p902
      %p904 = scmp.ne.s32.totalorder %s892, %s893
      %p905 = scmp.eq.s32.totalorder %s148, 1
      %p906 = por %p904, %p905
      %p908 = scmp.ne.s32.totalorder %s893, %s907
      %p909 = scmp.eq.s32.totalorder %s148, 0
      %p910 = por %p908, %p909
      %s912 = sadd.s32 %s911, 1
      %p915 = scmp.eq.s32.totalorder %s142, 1
      %p916 = scmp.ne.s32.totalorder %s911, %s913
      %p917 = scmp.eq.s32.totalorder %s142, 0
      %p918 = por %p916, %p917
      %p919 = scmp.ne.s32.totalorder %s911, %s913
      %p920 = scmp.eq.s32.totalorder %s147, 1
      %p921 = por %p919, %p920
      %p922 = scmp.ne.s32.totalorder %s913, %s914
      %p923 = scmp.eq.s32.totalorder %s147, 0
      %p924 = por %p922, %p923
      %p925 = scmp.ne.s32.totalorder %s913, %s914
      %p926 = scmp.eq.s32.totalorder %s148, 1
      %p927 = por %p925, %p926
      %p929 = scmp.ne.s32.totalorder %s914, %s928
      %p930 = scmp.eq.s32.totalorder %s148, 0
      %p931 = por %p929, %p930
      %s933 = sadd.s32 %s932, 1
      %p936 = scmp.eq.s32.totalorder %s142, 1
      %p937 = scmp.ne.s32.totalorder %s932, %s934
      %p938 = scmp.eq.s32.totalorder %s142, 0
      %p939 = por %p937, %p938
      %p940 = scmp.ne.s32.totalorder %s932, %s934
      %p941 = scmp.eq.s32.totalorder %s147, 1
      %p942 = por %p940, %p941
      %p943 = scmp.ne.s32.totalorder %s934, %s935
      %p944 = scmp.eq.s32.totalorder %s147, 0
      %p945 = por %p943, %p944
      %p946 = scmp.ne.s32.totalorder %s934, %s935
      %p947 = scmp.eq.s32.totalorder %s148, 1
      %p948 = por %p946, %p947
      %p950 = scmp.ne.s32.totalorder %s935, %s949
      %p951 = scmp.eq.s32.totalorder %s148, 0
      %p952 = por %p950, %p951
      %s954 = sadd.s32 %s953, 1
      %p957 = scmp.eq.s32.totalorder %s142, 1
      %p958 = scmp.ne.s32.totalorder %s953, %s955
      %p959 = scmp.eq.s32.totalorder %s142, 0
      %p960 = por %p958, %p959
      %p961 = scmp.ne.s32.totalorder %s953, %s955
      %p962 = scmp.eq.s32.totalorder %s147, 1
      %p963 = por %p961, %p962
      %p964 = scmp.ne.s32.totalorder %s955, %s956
      %p965 = scmp.eq.s32.totalorder %s147, 0
      %p966 = por %p964, %p965
      %p967 = scmp.ne.s32.totalorder %s955, %s956
      %p968 = scmp.eq.s32.totalorder %s148, 1
      %p969 = por %p967, %p968
      %p971 = scmp.ne.s32.totalorder %s956, %s970
      %p972 = scmp.eq.s32.totalorder %s148, 0
      %p973 = por %p971, %p972
      %s975 = sadd.s32 %s974, 1
      %p978 = scmp.eq.s32.totalorder %s142, 1
      %p979 = scmp.ne.s32.totalorder %s974, %s976
      %p980 = scmp.eq.s32.totalorder %s142, 0
      %p981 = por %p979, %p980
      %p982 = scmp.ne.s32.totalorder %s974, %s976
      %p983 = scmp.eq.s32.totalorder %s147, 1
      %p984 = por %p982, %p983
      %p985 = scmp.ne.s32.totalorder %s976, %s977
      %p986 = scmp.eq.s32.totalorder %s147, 0
      %p987 = por %p985, %p986
      %p988 = scmp.ne.s32.totalorder %s976, %s977
      %p989 = scmp.eq.s32.totalorder %s148, 1
      %p990 = por %p988, %p989
      %p992 = scmp.ne.s32.totalorder %s977, %s991
      %p993 = scmp.eq.s32.totalorder %s148, 0
      %p994 = por %p992, %p993
      %s996 = sadd.s32 %s995, 1
      %p999 = scmp.eq.s32.totalorder %s142, 1
      %p1000 = scmp.ne.s32.totalorder %s995, %s997
      %p1001 = scmp.eq.s32.totalorder %s142, 0
      %p1002 = por %p1000, %p1001
      %p1003 = scmp.ne.s32.totalorder %s995, %s997
      %p1004 = scmp.eq.s32.totalorder %s147, 1
      %p1005 = por %p1003, %p1004
      %p1006 = scmp.ne.s32.totalorder %s997, %s998
      %p1007 = scmp.eq.s32.totalorder %s147, 0
      %p1008 = por %p1006, %p1007
      %p1009 = scmp.ne.s32.totalorder %s997, %s998
      %p1010 = scmp.eq.s32.totalorder %s148, 1
      %p1011 = por %p1009, %p1010
      %p1013 = scmp.ne.s32.totalorder %s998, %s1012
      %p1014 = scmp.eq.s32.totalorder %s148, 0
      %p1015 = por %p1013, %p1014
      %s1017 = sadd.s32 %s1016, 1
      %p1020 = scmp.eq.s32.totalorder %s142, 1
      %p1021 = scmp.ne.s32.totalorder %s1016, %s1018
      %p1022 = scmp.eq.s32.totalorder %s142, 0
      %p1023 = por %p1021, %p1022
      %p1024 = scmp.ne.s32.totalorder %s1016, %s1018
      %p1025 = scmp.eq.s32.totalorder %s147, 1
      %p1026 = por %p1024, %p1025
      %p1027 = scmp.ne.s32.totalorder %s1018, %s1019
      %p1028 = scmp.eq.s32.totalorder %s147, 0
      %p1029 = por %p1027, %p1028
      %p1030 = scmp.ne.s32.totalorder %s1018, %s1019
      %p1031 = scmp.eq.s32.totalorder %s148, 1
      %p1032 = por %p1030, %p1031
      %p1034 = scmp.ne.s32.totalorder %s1019, %s1033
      %p1035 = scmp.eq.s32.totalorder %s148, 0
      %p1036 = por %p1034, %p1035
      %s1038 = sadd.s32 %s1037, 1
      %p1041 = scmp.eq.s32.totalorder %s142, 1
      %p1042 = scmp.ne.s32.totalorder %s1037, %s1039
      %p1043 = scmp.eq.s32.totalorder %s142, 0
      %p1044 = por %p1042, %p1043
      %p1045 = scmp.ne.s32.totalorder %s1037, %s1039
      %p1046 = scmp.eq.s32.totalorder %s147, 1
      %p1047 = por %p1045, %p1046
      %p1048 = scmp.ne.s32.totalorder %s1039, %s1040
      %p1049 = scmp.eq.s32.totalorder %s147, 0
      %p1050 = por %p1048, %p1049
      %p1051 = scmp.ne.s32.totalorder %s1039, %s1040
      %p1052 = scmp.eq.s32.totalorder %s148, 1
      %p1053 = por %p1051, %p1052
      %p1055 = scmp.ne.s32.totalorder %s1040, %s1054
      %p1056 = scmp.eq.s32.totalorder %s148, 0
      %p1057 = por %p1055, %p1056
      %s1059 = sadd.s32 %s1058, 1
      %p1062 = scmp.eq.s32.totalorder %s142, 1
      %p1063 = scmp.ne.s32.totalorder %s1058, %s1060
      %p1064 = scmp.eq.s32.totalorder %s142, 0
      %p1065 = por %p1063, %p1064
      %p1066 = scmp.ne.s32.totalorder %s1058, %s1060
      %p1067 = scmp.eq.s32.totalorder %s147, 1
      %p1068 = por %p1066, %p1067
      %p1069 = scmp.ne.s32.totalorder %s1060, %s1061
      %p1070 = scmp.eq.s32.totalorder %s147, 0
      %p1071 = por %p1069, %p1070
      %p1072 = scmp.ne.s32.totalorder %s1060, %s1061
      %p1073 = scmp.eq.s32.totalorder %s148, 1
      %p1074 = por %p1072, %p1073
      %p1076 = scmp.ne.s32.totalorder %s1061, %s1075
      %p1077 = scmp.eq.s32.totalorder %s148, 0
      %p1078 = por %p1076, %p1077
      %s1080 = sadd.s32 %s1079, 1
      %p1083 = scmp.eq.s32.totalorder %s142, 1
      %p1084 = scmp.ne.s32.totalorder %s1079, %s1081
      %p1085 = scmp.eq.s32.totalorder %s142, 0
      %p1086 = por %p1084, %p1085
      %p1087 = scmp.ne.s32.totalorder %s1079, %s1081
      %p1088 = scmp.eq.s32.totalorder %s147, 1
      %p1089 = por %p1087, %p1088
      %p1090 = scmp.ne.s32.totalorder %s1081, %s1082
      %p1091 = scmp.eq.s32.totalorder %s147, 0
      %p1092 = por %p1090, %p1091
      %p1093 = scmp.ne.s32.totalorder %s1081, %s1082
      %p1094 = scmp.eq.s32.totalorder %s148, 1
      %p1095 = por %p1093, %p1094
      %p1097 = scmp.ne.s32.totalorder %s1082, %s1096
      %p1098 = scmp.eq.s32.totalorder %s148, 0
      %p1099 = por %p1097, %p1098
      %s1101 = sadd.s32 %s1100, 1
      %p1104 = scmp.eq.s32.totalorder %s142, 1
      %p1105 = scmp.ne.s32.totalorder %s1100, %s1102
      %p1106 = scmp.eq.s32.totalorder %s142, 0
      %p1107 = por %p1105, %p1106
      %p1108 = scmp.ne.s32.totalorder %s1100, %s1102
      %p1109 = scmp.eq.s32.totalorder %s147, 1
      %p1110 = por %p1108, %p1109
      %p1111 = scmp.ne.s32.totalorder %s1102, %s1103
      %p1112 = scmp.eq.s32.totalorder %s147, 0
      %p1113 = por %p1111, %p1112
      %p1114 = scmp.ne.s32.totalorder %s1102, %s1103
      %p1115 = scmp.eq.s32.totalorder %s148, 1
      %p1116 = por %p1114, %p1115
      %p1118 = scmp.ne.s32.totalorder %s1103, %s1117
      %p1119 = scmp.eq.s32.totalorder %s148, 0
      %p1120 = por %p1118, %p1119
      %s1122 = sadd.s32 %s1121, 1
      %p1125 = scmp.eq.s32.totalorder %s142, 1
      %p1126 = scmp.ne.s32.totalorder %s1121, %s1123
      %p1127 = scmp.eq.s32.totalorder %s142, 0
      %p1128 = por %p1126, %p1127
      %p1129 = scmp.ne.s32.totalorder %s1121, %s1123
      %p1130 = scmp.eq.s32.totalorder %s147, 1
      %p1131 = por %p1129, %p1130
      %p1132 = scmp.ne.s32.totalorder %s1123, %s1124
      %p1133 = scmp.eq.s32.totalorder %s147, 0
      %p1134 = por %p1132, %p1133
      %p1135 = scmp.ne.s32.totalorder %s1123, %s1124
      %p1136 = scmp.eq.s32.totalorder %s148, 1
      %p1137 = por %p1135, %p1136
      %p1139 = scmp.ne.s32.totalorder %s1124, %s1138
      %p1140 = scmp.eq.s32.totalorder %s148, 0
      %p1141 = por %p1139, %p1140
      %s1143 = sadd.s32 %s1142, 1
      %p1146 = scmp.eq.s32.totalorder %s142, 1
      %p1147 = scmp.ne.s32.totalorder %s1142, %s1144
      %p1148 = scmp.eq.s32.totalorder %s142, 0
      %p1149 = por %p1147, %p1148
      %p1150 = scmp.ne.s32.totalorder %s1142, %s1144
      %p1151 = scmp.eq.s32.totalorder %s147, 1
      %p1152 = por %p1150, %p1151
      %p1153 = scmp.ne.s32.totalorder %s1144, %s1145
      %p1154 = scmp.eq.s32.totalorder %s147, 0
      %p1155 = por %p1153, %p1154
      %p1156 = scmp.ne.s32.totalorder %s1144, %s1145
      %p1157 = scmp.eq.s32.totalorder %s148, 1
      %p1158 = por %p1156, %p1157
      %p1160 = scmp.ne.s32.totalorder %s1145, %s1159
      %p1161 = scmp.eq.s32.totalorder %s148, 0
      %p1162 = por %p1160, %p1161
      %s1164 = sadd.s32 %s1163, 1
      %p1167 = scmp.eq.s32.totalorder %s142, 1
      %p1168 = scmp.ne.s32.totalorder %s1163, %s1165
      %p1169 = scmp.eq.s32.totalorder %s142, 0
      %p1170 = por %p1168, %p1169
      %p1171 = scmp.ne.s32.totalorder %s1163, %s1165
      %p1172 = scmp.eq.s32.totalorder %s147, 1
      %p1173 = por %p1171, %p1172
      %p1174 = scmp.ne.s32.totalorder %s1165, %s1166
      %p1175 = scmp.eq.s32.totalorder %s147, 0
      %p1176 = por %p1174, %p1175
      %p1177 = scmp.ne.s32.totalorder %s1165, %s1166
      %p1178 = scmp.eq.s32.totalorder %s148, 1
      %p1179 = por %p1177, %p1178
      %p1181 = scmp.ne.s32.totalorder %s1166, %s1180
      %p1182 = scmp.eq.s32.totalorder %s148, 0
      %p1183 = por %p1181, %p1182
      %s1185 = sadd.s32 %s1184, 1
      %p1188 = scmp.eq.s32.totalorder %s142, 1
      %p1189 = scmp.ne.s32.totalorder %s1184, %s1186
      %p1190 = scmp.eq.s32.totalorder %s142, 0
      %p1191 = por %p1189, %p1190
      %p1192 = scmp.ne.s32.totalorder %s1184, %s1186
      %p1193 = scmp.eq.s32.totalorder %s147, 1
      %p1194 = por %p1192, %p1193
      %p1195 = scmp.ne.s32.totalorder %s1186, %s1187
      %p1196 = scmp.eq.s32.totalorder %s147, 0
      %p1197 = por %p1195, %p1196
      %p1198 = scmp.ne.s32.totalorder %s1186, %s1187
      %p1199 = scmp.eq.s32.totalorder %s148, 1
      %p1200 = por %p1198, %p1199
      %p1202 = scmp.ne.s32.totalorder %s1187, %s1201
      %p1203 = scmp.eq.s32.totalorder %s148, 0
      %p1204 = por %p1202, %p1203
      %s1206 = sadd.s32 %s1205, 1
      %p1209 = scmp.eq.s32.totalorder %s142, 1
      %p1210 = scmp.ne.s32.totalorder %s1205, %s1207
      %p1211 = scmp.eq.s32.totalorder %s142, 0
      %p1212 = por %p1210, %p1211
      %p1213 = scmp.ne.s32.totalorder %s1205, %s1207
      %p1214 = scmp.eq.s32.totalorder %s147, 1
      %p1215 = por %p1213, %p1214
      %p1216 = scmp.ne.s32.totalorder %s1207, %s1208
      %p1217 = scmp.eq.s32.totalorder %s147, 0
      %p1218 = por %p1216, %p1217
      %p1219 = scmp.ne.s32.totalorder %s1207, %s1208
      %p1220 = scmp.eq.s32.totalorder %s148, 1
      %p1221 = por %p1219, %p1220
      %p1223 = scmp.ne.s32.totalorder %s1208, %s1222
      %p1224 = scmp.eq.s32.totalorder %s148, 0
      %p1225 = por %p1223, %p1224
      %s1227 = sadd.s32 %s1226, 1
      %p1230 = scmp.eq.s32.totalorder %s142, 1
      %p1231 = scmp.ne.s32.totalorder %s1226, %s1228
      %p1232 = scmp.eq.s32.totalorder %s142, 0
      %p1233 = por %p1231, %p1232
      %p1234 = scmp.ne.s32.totalorder %s1226, %s1228
      %p1235 = scmp.eq.s32.totalorder %s147, 1
      %p1236 = por %p1234, %p1235
      %p1237 = scmp.ne.s32.totalorder %s1228, %s1229
      %p1238 = scmp.eq.s32.totalorder %s147, 0
      %p1239 = por %p1237, %p1238
      %p1240 = scmp.ne.s32.totalorder %s1228, %s1229
      %p1241 = scmp.eq.s32.totalorder %s148, 1
      %p1242 = por %p1240, %p1241
      %p1244 = scmp.ne.s32.totalorder %s1229, %s1243
      %p1245 = scmp.eq.s32.totalorder %s148, 0
      %p1246 = por %p1244, %p1245
      %s1248 = sadd.s32 %s1247, 1
      %p1251 = scmp.eq.s32.totalorder %s142, 1
      %p1252 = scmp.ne.s32.totalorder %s1247, %s1249
      %p1253 = scmp.eq.s32.totalorder %s142, 0
      %p1254 = por %p1252, %p1253
      %p1255 = scmp.ne.s32.totalorder %s1247, %s1249
      %p1256 = scmp.eq.s32.totalorder %s147, 1
      %p1257 = por %p1255, %p1256
      %p1258 = scmp.ne.s32.totalorder %s1249, %s1250
      %p1259 = scmp.eq.s32.totalorder %s147, 0
      %p1260 = por %p1258, %p1259
      %p1261 = scmp.ne.s32.totalorder %s1249, %s1250
      %p1262 = scmp.eq.s32.totalorder %s148, 1
      %p1263 = por %p1261, %p1262
      %p1265 = scmp.ne.s32.totalorder %s1250, %s1264
      %p1266 = scmp.eq.s32.totalorder %s148, 0
      %p1267 = por %p1265, %p1266
      %s1269 = sadd.s32 %s1268, 1
      %p1272 = scmp.eq.s32.totalorder %s142, 1
      %p1273 = scmp.ne.s32.totalorder %s1268, %s1270
      %p1274 = scmp.eq.s32.totalorder %s142, 0
      %p1275 = por %p1273, %p1274
      %p1276 = scmp.ne.s32.totalorder %s1268, %s1270
      %p1277 = scmp.eq.s32.totalorder %s147, 1
      %p1278 = por %p1276, %p1277
      %p1279 = scmp.ne.s32.totalorder %s1270, %s1271
      %p1280 = scmp.eq.s32.totalorder %s147, 0
      %p1281 = por %p1279, %p1280
      %p1282 = scmp.ne.s32.totalorder %s1270, %s1271
      %p1283 = scmp.eq.s32.totalorder %s148, 1
      %p1284 = por %p1282, %p1283
      %p1286 = scmp.ne.s32.totalorder %s1271, %s1285
      %p1287 = scmp.eq.s32.totalorder %s148, 0
      %p1288 = por %p1286, %p1287
      %s1290 = sadd.s32 %s1289, 1
      %p1293 = scmp.eq.s32.totalorder %s142, 1
      %p1294 = scmp.ne.s32.totalorder %s1289, %s1291
      %p1295 = scmp.eq.s32.totalorder %s142, 0
      %p1296 = por %p1294, %p1295
      %p1297 = scmp.ne.s32.totalorder %s1289, %s1291
      %p1298 = scmp.eq.s32.totalorder %s147, 1
      %p1299 = por %p1297, %p1298
      %p1300 = scmp.ne.s32.totalorder %s1291, %s1292
      %p1301 = scmp.eq.s32.totalorder %s147, 0
      %p1302 = por %p1300, %p1301
      %p1303 = scmp.ne.s32.totalorder %s1291, %s1292
      %p1304 = scmp.eq.s32.totalorder %s148, 1
      %p1305 = por %p1303, %p1304
      %p1307 = scmp.ne.s32.totalorder %s1292, %s1306
      %p1308 = scmp.eq.s32.totalorder %s148, 0
      %p1309 = por %p1307, %p1308
      %s1311 = sadd.s32 %s1310, 1
      %p1314 = scmp.eq.s32.totalorder %s142, 1
      %p1315 = scmp.ne.s32.totalorder %s1310, %s1312
      %p1316 = scmp.eq.s32.totalorder %s142, 0
      %p1317 = por %p1315, %p1316
      %p1318 = scmp.ne.s32.totalorder %s1310, %s1312
      %p1319 = scmp.eq.s32.totalorder %s147, 1
      %p1320 = por %p1318, %p1319
      %p1321 = scmp.ne.s32.totalorder %s1312, %s1313
      %p1322 = scmp.eq.s32.totalorder %s147, 0
      %p1323 = por %p1321, %p1322
      %p1324 = scmp.ne.s32.totalorder %s1312, %s1313
      %p1325 = scmp.eq.s32.totalorder %s148, 1
      %p1326 = por %p1324, %p1325
      %p1328 = scmp.ne.s32.totalorder %s1313, %s1327
      %p1329 = scmp.eq.s32.totalorder %s148, 0
      %p1330 = por %p1328, %p1329
      %s1332 = sadd.s32 %s1331, 1
      %p1335 = scmp.eq.s32.totalorder %s142, 1
      %p1336 = scmp.ne.s32.totalorder %s1331, %s1333
      %p1337 = scmp.eq.s32.totalorder %s142, 0
      %p1338 = por %p1336, %p1337
      %p1339 = scmp.ne.s32.totalorder %s1331, %s1333
      %p1340 = scmp.eq.s32.totalorder %s147, 1
      %p1341 = por %p1339, %p1340
      %p1342 = scmp.ne.s32.totalorder %s1333, %s1334
      %p1343 = scmp.eq.s32.totalorder %s147, 0
      %p1344 = por %p1342, %p1343
      %p1345 = scmp.ne.s32.totalorder %s1333, %s1334
      %p1346 = scmp.eq.s32.totalorder %s148, 1
      %p1347 = por %p1345, %p1346
      %p1349 = scmp.ne.s32.totalorder %s1334, %s1348
      %p1350 = scmp.eq.s32.totalorder %s148, 0
      %p1351 = por %p1349, %p1350
      %s1353 = sadd.s32 %s1352, 1
      %p1356 = scmp.eq.s32.totalorder %s142, 1
      %p1357 = scmp.ne.s32.totalorder %s1352, %s1354
      %p1358 = scmp.eq.s32.totalorder %s142, 0
      %p1359 = por %p1357, %p1358
      %p1360 = scmp.ne.s32.totalorder %s1352, %s1354
      %p1361 = scmp.eq.s32.totalorder %s147, 1
      %p1362 = por %p1360, %p1361
      %p1363 = scmp.ne.s32.totalorder %s1354, %s1355
      %p1364 = scmp.eq.s32.totalorder %s147, 0
      %p1365 = por %p1363, %p1364
      %p1366 = scmp.ne.s32.totalorder %s1354, %s1355
      %p1367 = scmp.eq.s32.totalorder %s148, 1
      %p1368 = por %p1366, %p1367
      %p1370 = scmp.ne.s32.totalorder %s1355, %s1369
      %p1371 = scmp.eq.s32.totalorder %s148, 0
      %p1372 = por %p1370, %p1371
      %s1374 = sadd.s32 %s1373, 1
      %p1377 = scmp.eq.s32.totalorder %s142, 1
      %p1378 = scmp.ne.s32.totalorder %s1373, %s1375
      %p1379 = scmp.eq.s32.totalorder %s142, 0
      %p1380 = por %p1378, %p1379
      %p1381 = scmp.ne.s32.totalorder %s1373, %s1375
      %p1382 = scmp.eq.s32.totalorder %s147, 1
      %p1383 = por %p1381, %p1382
      %p1384 = scmp.ne.s32.totalorder %s1375, %s1376
      %p1385 = scmp.eq.s32.totalorder %s147, 0
      %p1386 = por %p1384, %p1385
      %p1387 = scmp.ne.s32.totalorder %s1375, %s1376
      %p1388 = scmp.eq.s32.totalorder %s148, 1
      %p1389 = por %p1387, %p1388
      %p1391 = scmp.ne.s32.totalorder %s1376, %s1390
      %p1392 = scmp.eq.s32.totalorder %s148, 0
      %p1393 = por %p1391, %p1392
      %s1395 = sadd.s32 %s1394, 1
      %p1398 = scmp.eq.s32.totalorder %s142, 1
      %p1399 = scmp.ne.s32.totalorder %s1394, %s1396
      %p1400 = scmp.eq.s32.totalorder %s142, 0
      %p1401 = por %p1399, %p1400
      %p1402 = scmp.ne.s32.totalorder %s1394, %s1396
      %p1403 = scmp.eq.s32.totalorder %s147, 1
      %p1404 = por %p1402, %p1403
      %p1405 = scmp.ne.s32.totalorder %s1396, %s1397
      %p1406 = scmp.eq.s32.totalorder %s147, 0
      %p1407 = por %p1405, %p1406
      %p1408 = scmp.ne.s32.totalorder %s1396, %s1397
      %p1409 = scmp.eq.s32.totalorder %s148, 1
      %p1410 = por %p1408, %p1409
      %p1412 = scmp.ne.s32.totalorder %s1397, %s1411
      %p1413 = scmp.eq.s32.totalorder %s148, 0
      %p1414 = por %p1412, %p1413
      %s1416 = sadd.s32 %s1415, 1
      %p1419 = scmp.eq.s32.totalorder %s142, 1
      %p1420 = scmp.ne.s32.totalorder %s1415, %s1417
      %p1421 = scmp.eq.s32.totalorder %s142, 0
      %p1422 = por %p1420, %p1421
      %p1423 = scmp.ne.s32.totalorder %s1415, %s1417
      %p1424 = scmp.eq.s32.totalorder %s147, 1
      %p1425 = por %p1423, %p1424
      %p1426 = scmp.ne.s32.totalorder %s1417, %s1418
      %p1427 = scmp.eq.s32.totalorder %s147, 0
      %p1428 = por %p1426, %p1427
      %p1429 = scmp.ne.s32.totalorder %s1417, %s1418
      %p1430 = scmp.eq.s32.totalorder %s148, 1
      %p1431 = por %p1429, %p1430
      %p1433 = scmp.ne.s32.totalorder %s1418, %s1432
      %p1434 = scmp.eq.s32.totalorder %s148, 0
      %p1435 = por %p1433, %p1434
      %s1437 = sadd.s32 %s1436, 1
      %p1440 = scmp.eq.s32.totalorder %s142, 1
      %p1441 = scmp.ne.s32.totalorder %s1436, %s1438
      %p1442 = scmp.eq.s32.totalorder %s142, 0
      %p1443 = por %p1441, %p1442
      %p1444 = scmp.ne.s32.totalorder %s1436, %s1438
      %p1445 = scmp.eq.s32.totalorder %s147, 1
      %p1446 = por %p1444, %p1445
      %p1447 = scmp.ne.s32.totalorder %s1438, %s1439
      %p1448 = scmp.eq.s32.totalorder %s147, 0
      %p1449 = por %p1447, %p1448
      %p1450 = scmp.ne.s32.totalorder %s1438, %s1439
      %p1451 = scmp.eq.s32.totalorder %s148, 1
      %p1452 = por %p1450, %p1451
      %p1454 = scmp.ne.s32.totalorder %s1439, %s1453
      %p1455 = scmp.eq.s32.totalorder %s148, 0
      %p1456 = por %p1454, %p1455
      %s1458 = sadd.s32 %s1457, 1
      %p1461 = scmp.eq.s32.totalorder %s142, 1
      %p1462 = scmp.ne.s32.totalorder %s1457, %s1459
      %p1463 = scmp.eq.s32.totalorder %s142, 0
      %p1464 = por %p1462, %p1463
      %p1465 = scmp.ne.s32.totalorder %s1457, %s1459
      %p1466 = scmp.eq.s32.totalorder %s147, 1
      %p1467 = por %p1465, %p1466
      %p1468 = scmp.ne.s32.totalorder %s1459, %s1460
      %p1469 = scmp.eq.s32.totalorder %s147, 0
      %p1470 = por %p1468, %p1469
      %p1471 = scmp.ne.s32.totalorder %s1459, %s1460
      %p1472 = scmp.eq.s32.totalorder %s148, 1
      %p1473 = por %p1471, %p1472
      %p1475 = scmp.ne.s32.totalorder %s1460, %s1474
      %p1476 = scmp.eq.s32.totalorder %s148, 0
      %p1477 = por %p1475, %p1476
      %s1479 = sadd.s32 %s1478, 1
      %p1482 = scmp.eq.s32.totalorder %s142, 1
      %p1483 = scmp.ne.s32.totalorder %s1478, %s1480
      %p1484 = scmp.eq.s32.totalorder %s142, 0
      %p1485 = por %p1483, %p1484
      %p1486 = scmp.ne.s32.totalorder %s1478, %s1480
      %p1487 = scmp.eq.s32.totalorder %s147, 1
      %p1488 = por %p1486, %p1487
      %p1489 = scmp.ne.s32.totalorder %s1480, %s1481
      %p1490 = scmp.eq.s32.totalorder %s147, 0
      %p1491 = por %p1489, %p1490
      %p1492 = scmp.ne.s32.totalorder %s1480, %s1481
      %p1493 = scmp.eq.s32.totalorder %s148, 1
      %p1494 = por %p1492, %p1493
      %p1496 = scmp.ne.s32.totalorder %s1481, %s1495
      %p1497 = scmp.eq.s32.totalorder %s148, 0
      %p1498 = por %p1496, %p1497
      %s1499 = ssub.s32 %s142, %s149
      %p1500 = scmp.eq.s32.totalorder %s1499, 0
      %s1502 = sadd.s32 %s1501, 1
      %s1503 = scalar_select %p1500, %s1501, %s1502
      %p1506 = pneg %p1500
      %p1507 = scmp.eq.s32.totalorder %s142, 1
      %p1508 = por %p1506, %p1507
      %p1509 = scmp.ne.s32.totalorder %s1501, %s1504
      %p1510 = scmp.eq.s32.totalorder %s142, 0
      %p1511 = por %p1509, %p1510
      %p1512 = scmp.ne.s32.totalorder %s1501, %s1504
      %p1513 = scmp.eq.s32.totalorder %s147, 1
      %p1514 = por %p1512, %p1513
      %p1515 = scmp.ne.s32.totalorder %s1504, %s1505
      %p1516 = scmp.eq.s32.totalorder %s147, 0
      %p1517 = por %p1515, %p1516
      %p1518 = scmp.ne.s32.totalorder %s1504, %s1505
      %p1519 = scmp.eq.s32.totalorder %s148, 1
      %p1520 = por %p1518, %p1519
      %p1522 = scmp.ne.s32.totalorder %s1505, %s1521
      %p1523 = scmp.eq.s32.totalorder %s148, 0
      %p1524 = por %p1522, %p1523
      %p1525 = scmp.le.s32.totalorder 1, %s142
      %p1526 = scmp.lt.s32.totalorder %s142, 3
      %p1527 = pnand %p1525, %p1526
      %p1528 = pneg %p1527
      // Predicated region
      $region9: #{dqn_forward.1} parent=5 // pred_check
        _
      $region10: #{dqn_forward.1} parent=5 // pred_check_branch
        %1530 = sbr.rel (%p1527) target = $region12
      $region11: #{dqn_forward.1} parent=5 // pred_region
        %s1531 = ssub.s32 %s142, 1
        // Predicated region
        $region13: #{dqn_forward.1} parent=11 // pred_check
          %p1532 = pneg %p189
        $region14: #{dqn_forward.1} parent=11 // pred_check_branch
          %1534 = sbr.rel (%p1532) target = $region16
        $region15: #{dqn_forward.1} parent=11 // pred_region
          _
        $region16: #{dqn_forward.1} parent=11 // pred_fallthru
          _
        // Predicated region
        $region17: #{dqn_forward.1} parent=11 // pred_check
          %p1535 = pneg %p210
        $region18: #{dqn_forward.1} parent=11 // pred_check_branch
          %1537 = sbr.rel (%p1535) target = $region20
        $region19: #{dqn_forward.1} parent=11 // pred_region
          _
        $region20: #{dqn_forward.1} parent=11 // pred_fallthru
          _
        // Predicated region
        $region21: #{dqn_forward.1} parent=11 // pred_check
          %p1538 = pneg %p231
        $region22: #{dqn_forward.1} parent=11 // pred_check_branch
          %1540 = sbr.rel (%p1538) target = $region24
        $region23: #{dqn_forward.1} parent=11 // pred_region
          _
        $region24: #{dqn_forward.1} parent=11 // pred_fallthru
          _
        // Predicated region
        $region25: #{dqn_forward.1} parent=11 // pred_check
          %p1541 = pneg %p252
        $region26: #{dqn_forward.1} parent=11 // pred_check_branch
          %1543 = sbr.rel (%p1541) target = $region28
        $region27: #{dqn_forward.1} parent=11 // pred_region
          _
        $region28: #{dqn_forward.1} parent=11 // pred_fallthru
          _
        // Predicated region
        $region29: #{dqn_forward.1} parent=11 // pred_check
          %p1544 = pneg %p273
        $region30: #{dqn_forward.1} parent=11 // pred_check_branch
          %1546 = sbr.rel (%p1544) target = $region32
        $region31: #{dqn_forward.1} parent=11 // pred_region
          _
        $region32: #{dqn_forward.1} parent=11 // pred_fallthru
          _
        // Predicated region
        $region33: #{dqn_forward.1} parent=11 // pred_check
          %p1547 = pneg %p294
        $region34: #{dqn_forward.1} parent=11 // pred_check_branch
          %1549 = sbr.rel (%p1547) target = $region36
        $region35: #{dqn_forward.1} parent=11 // pred_region
          _
        $region36: #{dqn_forward.1} parent=11 // pred_fallthru
          _
        // Predicated region
        $region37: #{dqn_forward.1} parent=11 // pred_check
          %p1550 = pneg %p315
        $region38: #{dqn_forward.1} parent=11 // pred_check_branch
          %1552 = sbr.rel (%p1550) target = $region40
        $region39: #{dqn_forward.1} parent=11 // pred_region
          _
        $region40: #{dqn_forward.1} parent=11 // pred_fallthru
          _
        // Predicated region
        $region41: #{dqn_forward.1} parent=11 // pred_check
          %p1553 = pneg %p336
        $region42: #{dqn_forward.1} parent=11 // pred_check_branch
          %1555 = sbr.rel (%p1553) target = $region44
        $region43: #{dqn_forward.1} parent=11 // pred_region
          _
        $region44: #{dqn_forward.1} parent=11 // pred_fallthru
          _
        // Predicated region
        $region45: #{dqn_forward.1} parent=11 // pred_check
          %p1556 = pneg %p357
        $region46: #{dqn_forward.1} parent=11 // pred_check_branch
          %1558 = sbr.rel (%p1556) target = $region48
        $region47: #{dqn_forward.1} parent=11 // pred_region
          _
        $region48: #{dqn_forward.1} parent=11 // pred_fallthru
          _
        // Predicated region
        $region49: #{dqn_forward.1} parent=11 // pred_check
          %p1559 = pneg %p378
        $region50: #{dqn_forward.1} parent=11 // pred_check_branch
          %1561 = sbr.rel (%p1559) target = $region52
        $region51: #{dqn_forward.1} parent=11 // pred_region
          _
        $region52: #{dqn_forward.1} parent=11 // pred_fallthru
          _
        // Predicated region
        $region53: #{dqn_forward.1} parent=11 // pred_check
          %p1562 = pneg %p399
        $region54: #{dqn_forward.1} parent=11 // pred_check_branch
          %1564 = sbr.rel (%p1562) target = $region56
        $region55: #{dqn_forward.1} parent=11 // pred_region
          _
        $region56: #{dqn_forward.1} parent=11 // pred_fallthru
          _
        // Predicated region
        $region57: #{dqn_forward.1} parent=11 // pred_check
          %p1565 = pneg %p420
        $region58: #{dqn_forward.1} parent=11 // pred_check_branch
          %1567 = sbr.rel (%p1565) target = $region60
        $region59: #{dqn_forward.1} parent=11 // pred_region
          _
        $region60: #{dqn_forward.1} parent=11 // pred_fallthru
          _
        // Predicated region
        $region61: #{dqn_forward.1} parent=11 // pred_check
          %p1568 = pneg %p441
        $region62: #{dqn_forward.1} parent=11 // pred_check_branch
          %1570 = sbr.rel (%p1568) target = $region64
        $region63: #{dqn_forward.1} parent=11 // pred_region
          _
        $region64: #{dqn_forward.1} parent=11 // pred_fallthru
          _
        // Predicated region
        $region65: #{dqn_forward.1} parent=11 // pred_check
          %p1571 = pneg %p462
        $region66: #{dqn_forward.1} parent=11 // pred_check_branch
          %1573 = sbr.rel (%p1571) target = $region68
        $region67: #{dqn_forward.1} parent=11 // pred_region
          _
        $region68: #{dqn_forward.1} parent=11 // pred_fallthru
          _
        // Predicated region
        $region69: #{dqn_forward.1} parent=11 // pred_check
          %p1574 = pneg %p483
        $region70: #{dqn_forward.1} parent=11 // pred_check_branch
          %1576 = sbr.rel (%p1574) target = $region72
        $region71: #{dqn_forward.1} parent=11 // pred_region
          _
        $region72: #{dqn_forward.1} parent=11 // pred_fallthru
          _
        // Predicated region
        $region73: #{dqn_forward.1} parent=11 // pred_check
          %p1577 = pneg %p504
        $region74: #{dqn_forward.1} parent=11 // pred_check_branch
          %1579 = sbr.rel (%p1577) target = $region76
        $region75: #{dqn_forward.1} parent=11 // pred_region
          _
        $region76: #{dqn_forward.1} parent=11 // pred_fallthru
          _
        // Predicated region
        $region77: #{dqn_forward.1} parent=11 // pred_check
          %p1580 = pneg %p525
        $region78: #{dqn_forward.1} parent=11 // pred_check_branch
          %1582 = sbr.rel (%p1580) target = $region80
        $region79: #{dqn_forward.1} parent=11 // pred_region
          _
        $region80: #{dqn_forward.1} parent=11 // pred_fallthru
          _
        // Predicated region
        $region81: #{dqn_forward.1} parent=11 // pred_check
          %p1583 = pneg %p546
        $region82: #{dqn_forward.1} parent=11 // pred_check_branch
          %1585 = sbr.rel (%p1583) target = $region84
        $region83: #{dqn_forward.1} parent=11 // pred_region
          _
        $region84: #{dqn_forward.1} parent=11 // pred_fallthru
          _
        // Predicated region
        $region85: #{dqn_forward.1} parent=11 // pred_check
          %p1586 = pneg %p567
        $region86: #{dqn_forward.1} parent=11 // pred_check_branch
          %1588 = sbr.rel (%p1586) target = $region88
        $region87: #{dqn_forward.1} parent=11 // pred_region
          _
        $region88: #{dqn_forward.1} parent=11 // pred_fallthru
          _
        // Predicated region
        $region89: #{dqn_forward.1} parent=11 // pred_check
          %p1589 = pneg %p588
        $region90: #{dqn_forward.1} parent=11 // pred_check_branch
          %1591 = sbr.rel (%p1589) target = $region92
        $region91: #{dqn_forward.1} parent=11 // pred_region
          _
        $region92: #{dqn_forward.1} parent=11 // pred_fallthru
          _
        // Predicated region
        $region93: #{dqn_forward.1} parent=11 // pred_check
          %p1592 = pneg %p609
        $region94: #{dqn_forward.1} parent=11 // pred_check_branch
          %1594 = sbr.rel (%p1592) target = $region96
        $region95: #{dqn_forward.1} parent=11 // pred_region
          _
        $region96: #{dqn_forward.1} parent=11 // pred_fallthru
          _
        // Predicated region
        $region97: #{dqn_forward.1} parent=11 // pred_check
          %p1595 = pneg %p630
        $region98: #{dqn_forward.1} parent=11 // pred_check_branch
          %1597 = sbr.rel (%p1595) target = $region100
        $region99: #{dqn_forward.1} parent=11 // pred_region
          _
        $region100: #{dqn_forward.1} parent=11 // pred_fallthru
          _
        // Predicated region
        $region101: #{dqn_forward.1} parent=11 // pred_check
          %p1598 = pneg %p651
        $region102: #{dqn_forward.1} parent=11 // pred_check_branch
          %1600 = sbr.rel (%p1598) target = $region104
        $region103: #{dqn_forward.1} parent=11 // pred_region
          _
        $region104: #{dqn_forward.1} parent=11 // pred_fallthru
          _
        // Predicated region
        $region105: #{dqn_forward.1} parent=11 // pred_check
          %p1601 = pneg %p672
        $region106: #{dqn_forward.1} parent=11 // pred_check_branch
          %1603 = sbr.rel (%p1601) target = $region108
        $region107: #{dqn_forward.1} parent=11 // pred_region
          _
        $region108: #{dqn_forward.1} parent=11 // pred_fallthru
          _
        // Predicated region
        $region109: #{dqn_forward.1} parent=11 // pred_check
          %p1604 = pneg %p693
        $region110: #{dqn_forward.1} parent=11 // pred_check_branch
          %1606 = sbr.rel (%p1604) target = $region112
        $region111: #{dqn_forward.1} parent=11 // pred_region
          _
        $region112: #{dqn_forward.1} parent=11 // pred_fallthru
          _
        // Predicated region
        $region113: #{dqn_forward.1} parent=11 // pred_check
          %p1607 = pneg %p714
        $region114: #{dqn_forward.1} parent=11 // pred_check_branch
          %1609 = sbr.rel (%p1607) target = $region116
        $region115: #{dqn_forward.1} parent=11 // pred_region
          _
        $region116: #{dqn_forward.1} parent=11 // pred_fallthru
          _
        // Predicated region
        $region117: #{dqn_forward.1} parent=11 // pred_check
          %p1610 = pneg %p735
        $region118: #{dqn_forward.1} parent=11 // pred_check_branch
          %1612 = sbr.rel (%p1610) target = $region120
        $region119: #{dqn_forward.1} parent=11 // pred_region
          _
        $region120: #{dqn_forward.1} parent=11 // pred_fallthru
          _
        // Predicated region
        $region121: #{dqn_forward.1} parent=11 // pred_check
          %p1613 = pneg %p756
        $region122: #{dqn_forward.1} parent=11 // pred_check_branch
          %1615 = sbr.rel (%p1613) target = $region124
        $region123: #{dqn_forward.1} parent=11 // pred_region
          _
        $region124: #{dqn_forward.1} parent=11 // pred_fallthru
          _
        // Predicated region
        $region125: #{dqn_forward.1} parent=11 // pred_check
          %p1616 = pneg %p777
        $region126: #{dqn_forward.1} parent=11 // pred_check_branch
          %1618 = sbr.rel (%p1616) target = $region128
        $region127: #{dqn_forward.1} parent=11 // pred_region
          _
        $region128: #{dqn_forward.1} parent=11 // pred_fallthru
          _
        // Predicated region
        $region129: #{dqn_forward.1} parent=11 // pred_check
          %p1619 = pneg %p798
        $region130: #{dqn_forward.1} parent=11 // pred_check_branch
          %1621 = sbr.rel (%p1619) target = $region132
        $region131: #{dqn_forward.1} parent=11 // pred_region
          _
        $region132: #{dqn_forward.1} parent=11 // pred_fallthru
          _
        // Predicated region
        $region133: #{dqn_forward.1} parent=11 // pred_check
          %p1622 = pneg %p819
        $region134: #{dqn_forward.1} parent=11 // pred_check_branch
          %1624 = sbr.rel (%p1622) target = $region136
        $region135: #{dqn_forward.1} parent=11 // pred_region
          _
        $region136: #{dqn_forward.1} parent=11 // pred_fallthru
          _
        // Predicated region
        $region137: #{dqn_forward.1} parent=11 // pred_check
          %p1625 = pneg %p840
        $region138: #{dqn_forward.1} parent=11 // pred_check_branch
          %1627 = sbr.rel (%p1625) target = $region140
        $region139: #{dqn_forward.1} parent=11 // pred_region
          _
        $region140: #{dqn_forward.1} parent=11 // pred_fallthru
          _
        // Predicated region
        $region141: #{dqn_forward.1} parent=11 // pred_check
          %p1628 = pneg %p861
        $region142: #{dqn_forward.1} parent=11 // pred_check_branch
          %1630 = sbr.rel (%p1628) target = $region144
        $region143: #{dqn_forward.1} parent=11 // pred_region
          _
        $region144: #{dqn_forward.1} parent=11 // pred_fallthru
          _
        // Predicated region
        $region145: #{dqn_forward.1} parent=11 // pred_check
          %p1631 = pneg %p882
        $region146: #{dqn_forward.1} parent=11 // pred_check_branch
          %1633 = sbr.rel (%p1631) target = $region148
        $region147: #{dqn_forward.1} parent=11 // pred_region
          _
        $region148: #{dqn_forward.1} parent=11 // pred_fallthru
          _
        // Predicated region
        $region149: #{dqn_forward.1} parent=11 // pred_check
          %p1634 = pneg %p903
        $region150: #{dqn_forward.1} parent=11 // pred_check_branch
          %1636 = sbr.rel (%p1634) target = $region152
        $region151: #{dqn_forward.1} parent=11 // pred_region
          _
        $region152: #{dqn_forward.1} parent=11 // pred_fallthru
          _
        // Predicated region
        $region153: #{dqn_forward.1} parent=11 // pred_check
          %p1637 = pneg %p924
        $region154: #{dqn_forward.1} parent=11 // pred_check_branch
          %1639 = sbr.rel (%p1637) target = $region156
        $region155: #{dqn_forward.1} parent=11 // pred_region
          _
        $region156: #{dqn_forward.1} parent=11 // pred_fallthru
          _
        // Predicated region
        $region157: #{dqn_forward.1} parent=11 // pred_check
          %p1640 = pneg %p945
        $region158: #{dqn_forward.1} parent=11 // pred_check_branch
          %1642 = sbr.rel (%p1640) target = $region160
        $region159: #{dqn_forward.1} parent=11 // pred_region
          _
        $region160: #{dqn_forward.1} parent=11 // pred_fallthru
          _
        // Predicated region
        $region161: #{dqn_forward.1} parent=11 // pred_check
          %p1643 = pneg %p966
        $region162: #{dqn_forward.1} parent=11 // pred_check_branch
          %1645 = sbr.rel (%p1643) target = $region164
        $region163: #{dqn_forward.1} parent=11 // pred_region
          _
        $region164: #{dqn_forward.1} parent=11 // pred_fallthru
          _
        // Predicated region
        $region165: #{dqn_forward.1} parent=11 // pred_check
          %p1646 = pneg %p987
        $region166: #{dqn_forward.1} parent=11 // pred_check_branch
          %1648 = sbr.rel (%p1646) target = $region168
        $region167: #{dqn_forward.1} parent=11 // pred_region
          _
        $region168: #{dqn_forward.1} parent=11 // pred_fallthru
          _
        // Predicated region
        $region169: #{dqn_forward.1} parent=11 // pred_check
          %p1649 = pneg %p1008
        $region170: #{dqn_forward.1} parent=11 // pred_check_branch
          %1651 = sbr.rel (%p1649) target = $region172
        $region171: #{dqn_forward.1} parent=11 // pred_region
          _
        $region172: #{dqn_forward.1} parent=11 // pred_fallthru
          _
        // Predicated region
        $region173: #{dqn_forward.1} parent=11 // pred_check
          %p1652 = pneg %p1029
        $region174: #{dqn_forward.1} parent=11 // pred_check_branch
          %1654 = sbr.rel (%p1652) target = $region176
        $region175: #{dqn_forward.1} parent=11 // pred_region
          _
        $region176: #{dqn_forward.1} parent=11 // pred_fallthru
          _
        // Predicated region
        $region177: #{dqn_forward.1} parent=11 // pred_check
          %p1655 = pneg %p1050
        $region178: #{dqn_forward.1} parent=11 // pred_check_branch
          %1657 = sbr.rel (%p1655) target = $region180
        $region179: #{dqn_forward.1} parent=11 // pred_region
          _
        $region180: #{dqn_forward.1} parent=11 // pred_fallthru
          _
        // Predicated region
        $region181: #{dqn_forward.1} parent=11 // pred_check
          %p1658 = pneg %p1071
        $region182: #{dqn_forward.1} parent=11 // pred_check_branch
          %1660 = sbr.rel (%p1658) target = $region184
        $region183: #{dqn_forward.1} parent=11 // pred_region
          _
        $region184: #{dqn_forward.1} parent=11 // pred_fallthru
          _
        // Predicated region
        $region185: #{dqn_forward.1} parent=11 // pred_check
          %p1661 = pneg %p1092
        $region186: #{dqn_forward.1} parent=11 // pred_check_branch
          %1663 = sbr.rel (%p1661) target = $region188
        $region187: #{dqn_forward.1} parent=11 // pred_region
          _
        $region188: #{dqn_forward.1} parent=11 // pred_fallthru
          _
        // Predicated region
        $region189: #{dqn_forward.1} parent=11 // pred_check
          %p1664 = pneg %p1113
        $region190: #{dqn_forward.1} parent=11 // pred_check_branch
          %1666 = sbr.rel (%p1664) target = $region192
        $region191: #{dqn_forward.1} parent=11 // pred_region
          _
        $region192: #{dqn_forward.1} parent=11 // pred_fallthru
          _
        // Predicated region
        $region193: #{dqn_forward.1} parent=11 // pred_check
          %p1667 = pneg %p1134
        $region194: #{dqn_forward.1} parent=11 // pred_check_branch
          %1669 = sbr.rel (%p1667) target = $region196
        $region195: #{dqn_forward.1} parent=11 // pred_region
          _
        $region196: #{dqn_forward.1} parent=11 // pred_fallthru
          _
        // Predicated region
        $region197: #{dqn_forward.1} parent=11 // pred_check
          %p1670 = pneg %p1155
        $region198: #{dqn_forward.1} parent=11 // pred_check_branch
          %1672 = sbr.rel (%p1670) target = $region200
        $region199: #{dqn_forward.1} parent=11 // pred_region
          _
        $region200: #{dqn_forward.1} parent=11 // pred_fallthru
          _
        // Predicated region
        $region201: #{dqn_forward.1} parent=11 // pred_check
          %p1673 = pneg %p1176
        $region202: #{dqn_forward.1} parent=11 // pred_check_branch
          %1675 = sbr.rel (%p1673) target = $region204
        $region203: #{dqn_forward.1} parent=11 // pred_region
          %s1677 = ssub.s32 16, 16
          %1678 = vsyncadd [#allocation3], %s1677
          %s1680 = sshll.u32 [#allocation2], 4
          %s1681 = int_to_ptr.vmem [resolvable:$true] %s1680
          %1683 = dma.hbm_to_vmem [thread:$0]  %s97, 16, %s1681, [#allocation3]
        $region204: #{dqn_forward.1} parent=11 // pred_fallthru
          _
        // Predicated region
        $region205: #{dqn_forward.1} parent=11 // pred_check
          %p1684 = pneg %p1197
        $region206: #{dqn_forward.1} parent=11 // pred_check_branch
          %1686 = sbr.rel (%p1684) target = $region208
        $region207: #{dqn_forward.1} parent=11 // pred_region
          _
        $region208: #{dqn_forward.1} parent=11 // pred_fallthru
          _
        // Predicated region
        $region209: #{dqn_forward.1} parent=11 // pred_check
          %p1687 = pneg %p1218
        $region210: #{dqn_forward.1} parent=11 // pred_check_branch
          %1689 = sbr.rel (%p1687) target = $region212
        $region211: #{dqn_forward.1} parent=11 // pred_region
          %s1691 = ssub.s32 16, 16
          %1692 = vsyncadd [#allocation5], %s1691
          %s1694 = sshll.u32 [#allocation4], 4
          %s1695 = int_to_ptr.vmem [resolvable:$true] %s1694
          %1697 = dma.hbm_to_vmem [thread:$0]  %s101, 16, %s1695, [#allocation5]
        $region212: #{dqn_forward.1} parent=11 // pred_fallthru
          _
        // Predicated region
        $region213: #{dqn_forward.1} parent=11 // pred_check
          %p1698 = pneg %p1239
        $region214: #{dqn_forward.1} parent=11 // pred_check_branch
          %1700 = sbr.rel (%p1698) target = $region216
        $region215: #{dqn_forward.1} parent=11 // pred_region
          %s1702 = ssub.s32 16, 16
          %1703 = vsyncadd [#allocation5], %s1702
          %s1705 = sshll.u32 [#allocation6], 4
          %s1706 = int_to_ptr.vmem [resolvable:$true] %s1705
          %1708 = dma.hbm_to_vmem [thread:$0]  %s103, 16, %s1706, [#allocation5]
        $region216: #{dqn_forward.1} parent=11 // pred_fallthru
          _
        // Predicated region
        $region217: #{dqn_forward.1} parent=11 // pred_check
          %p1709 = pneg %p1260
        $region218: #{dqn_forward.1} parent=11 // pred_check_branch
          %1711 = sbr.rel (%p1709) target = $region220
        $region219: #{dqn_forward.1} parent=11 // pred_region
          %s1713 = ssub.s32 16, 16
          %1714 = vsyncadd [#allocation8], %s1713
          %s1716 = sshll.u32 [#allocation7], 4
          %s1717 = int_to_ptr.vmem [resolvable:$true] %s1716
          %1719 = dma.hbm_to_vmem [thread:$0]  %s105, 16, %s1717, [#allocation8]
        $region220: #{dqn_forward.1} parent=11 // pred_fallthru
          _
        // Predicated region
        $region221: #{dqn_forward.1} parent=11 // pred_check
          %p1720 = pneg %p1281
        $region222: #{dqn_forward.1} parent=11 // pred_check_branch
          %1722 = sbr.rel (%p1720) target = $region224
        $region223: #{dqn_forward.1} parent=11 // pred_region
          %s1724 = ssub.s32 16, 16
          %1725 = vsyncadd [#allocation8], %s1724
          %s1727 = sshll.u32 [#allocation9], 4
          %s1728 = int_to_ptr.vmem [resolvable:$true] %s1727
          %1730 = dma.hbm_to_vmem [thread:$0]  %s107, 16, %s1728, [#allocation8]
        $region224: #{dqn_forward.1} parent=11 // pred_fallthru
          _
        // Predicated region
        $region225: #{dqn_forward.1} parent=11 // pred_check
          %p1731 = pneg %p1302
        $region226: #{dqn_forward.1} parent=11 // pred_check_branch
          %1733 = sbr.rel (%p1731) target = $region228
        $region227: #{dqn_forward.1} parent=11 // pred_region
          %s1735 = ssub.s32 16, 16
          %1736 = vsyncadd [#allocation11], %s1735
          %s1738 = sshll.u32 [#allocation10], 4
          %s1739 = int_to_ptr.vmem [resolvable:$true] %s1738
          %1741 = dma.hbm_to_vmem [thread:$0]  %s109, 16, %s1739, [#allocation11]
        $region228: #{dqn_forward.1} parent=11 // pred_fallthru
          _
        // Predicated region
        $region229: #{dqn_forward.1} parent=11 // pred_check
          %p1742 = pneg %p1323
        $region230: #{dqn_forward.1} parent=11 // pred_check_branch
          %1744 = sbr.rel (%p1742) target = $region232
        $region231: #{dqn_forward.1} parent=11 // pred_region
          %s1746 = ssub.s32 16, 16
          %1747 = vsyncadd [#allocation11], %s1746
          %s1749 = sshll.u32 [#allocation12], 4
          %s1750 = int_to_ptr.vmem [resolvable:$true] %s1749
          %1752 = dma.hbm_to_vmem [thread:$0]  %s111, 16, %s1750, [#allocation11]
        $region232: #{dqn_forward.1} parent=11 // pred_fallthru
          _
        // Predicated region
        $region233: #{dqn_forward.1} parent=11 // pred_check
          %p1753 = pneg %p1344
        $region234: #{dqn_forward.1} parent=11 // pred_check_branch
          %1755 = sbr.rel (%p1753) target = $region236
        $region235: #{dqn_forward.1} parent=11 // pred_region
          %s1757 = ssub.s32 16, 16
          %1758 = vsyncadd [#allocation14], %s1757
          %s1760 = sshll.u32 [#allocation13], 4
          %s1761 = int_to_ptr.vmem [resolvable:$true] %s1760
          %1763 = dma.hbm_to_vmem [thread:$0]  %s113, 16, %s1761, [#allocation14]
        $region236: #{dqn_forward.1} parent=11 // pred_fallthru
          _
        // Predicated region
        $region237: #{dqn_forward.1} parent=11 // pred_check
          %p1764 = pneg %p1365
        $region238: #{dqn_forward.1} parent=11 // pred_check_branch
          %1766 = sbr.rel (%p1764) target = $region240
        $region239: #{dqn_forward.1} parent=11 // pred_region
          %s1768 = ssub.s32 16, 16
          %1769 = vsyncadd [#allocation14], %s1768
          %s1771 = sshll.u32 [#allocation15], 4
          %s1772 = int_to_ptr.vmem [resolvable:$true] %s1771
          %1774 = dma.hbm_to_vmem [thread:$0]  %s115, 16, %s1772, [#allocation14]
        $region240: #{dqn_forward.1} parent=11 // pred_fallthru
          _
        // Predicated region
        $region241: #{dqn_forward.1} parent=11 // pred_check
          %p1775 = pneg %p1386
        $region242: #{dqn_forward.1} parent=11 // pred_check_branch
          %1777 = sbr.rel (%p1775) target = $region244
        $region243: #{dqn_forward.1} parent=11 // pred_region
          %s1779 = ssub.s32 16, 16
          %1780 = vsyncadd [#allocation17], %s1779
          %s1782 = sshll.u32 [#allocation16], 4
          %s1783 = int_to_ptr.vmem [resolvable:$true] %s1782
          %1785 = dma.hbm_to_vmem [thread:$0]  %s117, 16, %s1783, [#allocation17]
        $region244: #{dqn_forward.1} parent=11 // pred_fallthru
          _
        // Predicated region
        $region245: #{dqn_forward.1} parent=11 // pred_check
          %p1786 = pneg %p1407
        $region246: #{dqn_forward.1} parent=11 // pred_check_branch
          %1788 = sbr.rel (%p1786) target = $region248
        $region247: #{dqn_forward.1} parent=11 // pred_region
          %s1790 = ssub.s32 16, 16
          %1791 = vsyncadd [#allocation17], %s1790
          %s1793 = sshll.u32 [#allocation18], 4
          %s1794 = int_to_ptr.vmem [resolvable:$true] %s1793
          %1796 = dma.hbm_to_vmem [thread:$0]  %s119, 16, %s1794, [#allocation17]
        $region248: #{dqn_forward.1} parent=11 // pred_fallthru
          _
        // Predicated region
        $region249: #{dqn_forward.1} parent=11 // pred_check
          %p1797 = pneg %p1428
        $region250: #{dqn_forward.1} parent=11 // pred_check_branch
          %1799 = sbr.rel (%p1797) target = $region252
        $region251: #{dqn_forward.1} parent=11 // pred_region
          %s1801 = ssub.s32 16, 16
          %1802 = vsyncadd [#allocation20], %s1801
          %s1804 = sshll.u32 [#allocation19], 4
          %s1805 = int_to_ptr.vmem [resolvable:$true] %s1804
          %1807 = dma.hbm_to_vmem [thread:$0]  %s121, 16, %s1805, [#allocation20]
        $region252: #{dqn_forward.1} parent=11 // pred_fallthru
          _
        // Predicated region
        $region253: #{dqn_forward.1} parent=11 // pred_check
          %p1808 = pneg %p1449
        $region254: #{dqn_forward.1} parent=11 // pred_check_branch
          %1810 = sbr.rel (%p1808) target = $region256
        $region255: #{dqn_forward.1} parent=11 // pred_region
          %s1812 = ssub.s32 16, 16
          %1813 = vsyncadd [#allocation20], %s1812
          %s1815 = sshll.u32 [#allocation21], 4
          %s1816 = int_to_ptr.vmem [resolvable:$true] %s1815
          %1818 = dma.hbm_to_vmem [thread:$0]  %s123, 16, %s1816, [#allocation20]
        $region256: #{dqn_forward.1} parent=11 // pred_fallthru
          _
        // Predicated region
        $region257: #{dqn_forward.1} parent=11 // pred_check
          %p1819 = pneg %p1470
        $region258: #{dqn_forward.1} parent=11 // pred_check_branch
          %1821 = sbr.rel (%p1819) target = $region260
        $region259: #{dqn_forward.1} parent=11 // pred_region
          _
        $region260: #{dqn_forward.1} parent=11 // pred_fallthru
          _
        // Predicated region
        $region261: #{dqn_forward.1} parent=11 // pred_check
          %p1822 = pneg %p1491
        $region262: #{dqn_forward.1} parent=11 // pred_check_branch
          %1824 = sbr.rel (%p1822) target = $region264
        $region263: #{dqn_forward.1} parent=11 // pred_region
          _
        $region264: #{dqn_forward.1} parent=11 // pred_fallthru
          _
      $region12: #{dqn_forward.1} parent=5 // pred_fallthru
        _
      %p1825 = scmp.lt.s32.totalorder %s142, 2
      // Predicated region
      $region265: #{dqn_forward.1} parent=5 // pred_check
        %p1826 = pneg %p1825
      $region266: #{dqn_forward.1} parent=5 // pred_check_branch
        %1828 = sbr.rel (%p1826) target = $region268
      $region267: #{dqn_forward.1} parent=5 // pred_region
        // Predicated region
        $region269: #{dqn_forward.1} parent=267 // pred_check
          %p1829 = pneg %p162
        $region270: #{dqn_forward.1} parent=267 // pred_check_branch
          %1831 = sbr.rel (%p1829) target = $region272
        $region271: #{dqn_forward.1} parent=267 // pred_region
          %s1832 = smul.u32 4, %s142
          %p1833 = scmp.lt.s32.totalorder %s1832, 7
          %s1834 = scalar_select %p1833, %s1832, 7
          %s1835 = smul.addr %s1834, 8
          %s1836 = scalar_lea.vmem %s1, %s1835
          %s1837 = smul.u32 4, %s142
        $region272: #{dqn_forward.1} parent=267 // pred_fallthru
          _
      $region268: #{dqn_forward.1} parent=5 // pred_fallthru
        _
      %p1838 = scmp.le.s32.totalorder 1, %s142
      %p1839 = scmp.lt.s32.totalorder %s142, 3
      %p1840 = pnand %p1838, %p1839
      %p1841 = pneg %p1840
      // Predicated region
      $region273: #{dqn_forward.1} parent=5 // pred_check
        _
      $region274: #{dqn_forward.1} parent=5 // pred_check_branch
        %1843 = sbr.rel (%p1840) target = $region276
      $region275: #{dqn_forward.1} parent=5 // pred_region
        %s1844 = ssub.s32 %s142, 1
        // Predicated region
        $region277: #{dqn_forward.1} parent=275 // pred_check
          %p1845 = pneg %p1176
        $region278: #{dqn_forward.1} parent=275 // pred_check_branch
          %1847 = sbr.rel (%p1845) target = $region280
        $region279: #{dqn_forward.1} parent=275 // pred_region
          %1848 = dma.done [#allocation3], 16
        $region280: #{dqn_forward.1} parent=275 // pred_fallthru
          _
        // Predicated region
        $region281: #{dqn_forward.1} parent=275 // pred_check
          %p1849 = pneg %p1218
        $region282: #{dqn_forward.1} parent=275 // pred_check_branch
          %1851 = sbr.rel (%p1849) target = $region284
        $region283: #{dqn_forward.1} parent=275 // pred_region
          %1852 = dma.done [#allocation5], 16
        $region284: #{dqn_forward.1} parent=275 // pred_fallthru
          _
        // Predicated region
        $region285: #{dqn_forward.1} parent=275 // pred_check
          %p1853 = pneg %p1239
        $region286: #{dqn_forward.1} parent=275 // pred_check_branch
          %1855 = sbr.rel (%p1853) target = $region288
        $region287: #{dqn_forward.1} parent=275 // pred_region
          %1856 = dma.done [#allocation5], 16
        $region288: #{dqn_forward.1} parent=275 // pred_fallthru
          _
        // Predicated region
        $region289: #{dqn_forward.1} parent=275 // pred_check
          %p1857 = pneg %p1260
        $region290: #{dqn_forward.1} parent=275 // pred_check_branch
          %1859 = sbr.rel (%p1857) target = $region292
        $region291: #{dqn_forward.1} parent=275 // pred_region
          %1860 = dma.done [#allocation8], 16
        $region292: #{dqn_forward.1} parent=275 // pred_fallthru
          _
        // Predicated region
        $region293: #{dqn_forward.1} parent=275 // pred_check
          %p1861 = pneg %p1281
        $region294: #{dqn_forward.1} parent=275 // pred_check_branch
          %1863 = sbr.rel (%p1861) target = $region296
        $region295: #{dqn_forward.1} parent=275 // pred_region
          %1864 = dma.done [#allocation8], 16
        $region296: #{dqn_forward.1} parent=275 // pred_fallthru
          _
        // Predicated region
        $region297: #{dqn_forward.1} parent=275 // pred_check
          %p1865 = pneg %p1302
        $region298: #{dqn_forward.1} parent=275 // pred_check_branch
          %1867 = sbr.rel (%p1865) target = $region300
        $region299: #{dqn_forward.1} parent=275 // pred_region
          %1868 = dma.done [#allocation11], 16
        $region300: #{dqn_forward.1} parent=275 // pred_fallthru
          _
        // Predicated region
        $region301: #{dqn_forward.1} parent=275 // pred_check
          %p1869 = pneg %p1323
        $region302: #{dqn_forward.1} parent=275 // pred_check_branch
          %1871 = sbr.rel (%p1869) target = $region304
        $region303: #{dqn_forward.1} parent=275 // pred_region
          %1872 = dma.done [#allocation11], 16
        $region304: #{dqn_forward.1} parent=275 // pred_fallthru
          _
        // Predicated region
        $region305: #{dqn_forward.1} parent=275 // pred_check
          %p1873 = pneg %p1344
        $region306: #{dqn_forward.1} parent=275 // pred_check_branch
          %1875 = sbr.rel (%p1873) target = $region308
        $region307: #{dqn_forward.1} parent=275 // pred_region
          %1876 = dma.done [#allocation14], 16
        $region308: #{dqn_forward.1} parent=275 // pred_fallthru
          _
        // Predicated region
        $region309: #{dqn_forward.1} parent=275 // pred_check
          %p1877 = pneg %p1365
        $region310: #{dqn_forward.1} parent=275 // pred_check_branch
          %1879 = sbr.rel (%p1877) target = $region312
        $region311: #{dqn_forward.1} parent=275 // pred_region
          %1880 = dma.done [#allocation14], 16
        $region312: #{dqn_forward.1} parent=275 // pred_fallthru
          _
        // Predicated region
        $region313: #{dqn_forward.1} parent=275 // pred_check
          %p1881 = pneg %p1386
        $region314: #{dqn_forward.1} parent=275 // pred_check_branch
          %1883 = sbr.rel (%p1881) target = $region316
        $region315: #{dqn_forward.1} parent=275 // pred_region
          %1884 = dma.done [#allocation17], 16
        $region316: #{dqn_forward.1} parent=275 // pred_fallthru
          _
        // Predicated region
        $region317: #{dqn_forward.1} parent=275 // pred_check
          %p1885 = pneg %p1407
        $region318: #{dqn_forward.1} parent=275 // pred_check_branch
          %1887 = sbr.rel (%p1885) target = $region320
        $region319: #{dqn_forward.1} parent=275 // pred_region
          %1888 = dma.done [#allocation17], 16
        $region320: #{dqn_forward.1} parent=275 // pred_fallthru
          _
        // Predicated region
        $region321: #{dqn_forward.1} parent=275 // pred_check
          %p1889 = pneg %p1428
        $region322: #{dqn_forward.1} parent=275 // pred_check_branch
          %1891 = sbr.rel (%p1889) target = $region324
        $region323: #{dqn_forward.1} parent=275 // pred_region
          %1892 = dma.done [#allocation20], 16
        $region324: #{dqn_forward.1} parent=275 // pred_fallthru
          _
        // Predicated region
        $region325: #{dqn_forward.1} parent=275 // pred_check
          %p1893 = pneg %p1449
        $region326: #{dqn_forward.1} parent=275 // pred_check_branch
          %1895 = sbr.rel (%p1893) target = $region328
        $region327: #{dqn_forward.1} parent=275 // pred_region
          %1896 = dma.done [#allocation20], 16
        $region328: #{dqn_forward.1} parent=275 // pred_fallthru
          _
        %s1897 = smul.u32 4, %s147
        %p1898 = scmp.lt.s32.totalorder %s1897, 7
        %s1899 = scalar_select %p1898, %s1897, 7
        %s1900 = smul.addr %s1899, 8
        %s1901 = scalar_lea.vmem %s1, %s1900
        %p1902 = pneg %p168
        %p1903 = pneg %p165
        %p1904 = pneg %p189
        %p1905 = pneg %p186
        %p1906 = pneg %p210
        %p1907 = pneg %p207
        %p1908 = pneg %p231
        %p1909 = pneg %p228
        %p1910 = pneg %p252
        %p1911 = pneg %p249
        %p1912 = pneg %p273
        %p1913 = pneg %p270
        %p1914 = pneg %p294
        %p1915 = pneg %p291
        %p1916 = pneg %p315
        %p1917 = pneg %p312
        %p1918 = pneg %p336
        %p1919 = pneg %p333
        %p1920 = pneg %p357
        %p1921 = pneg %p354
        %p1922 = pneg %p378
        %p1923 = pneg %p375
        %p1924 = pneg %p399
        %p1925 = pneg %p396
        %p1926 = pneg %p420
        %p1927 = pneg %p417
        %p1928 = pneg %p441
        %p1929 = pneg %p438
        %p1930 = pneg %p462
        %p1931 = pneg %p459
        %p1932 = pneg %p483
        %p1933 = pneg %p480
        %p1934 = pneg %p504
        %p1935 = pneg %p501
        %p1936 = pneg %p525
        %p1937 = pneg %p522
        %p1938 = pneg %p546
        %p1939 = pneg %p543
        %p1940 = pneg %p567
        %p1941 = pneg %p564
        %p1942 = pneg %p588
        %p1943 = pneg %p585
        %p1944 = pneg %p609
        %p1945 = pneg %p606
        %p1946 = pneg %p630
        %p1947 = pneg %p627
        %p1948 = pneg %p651
        %p1949 = pneg %p648
        %p1950 = pneg %p672
        %p1951 = pneg %p669
        %p1952 = pneg %p693
        %p1953 = pneg %p690
        %p1954 = pneg %p714
        %p1955 = pneg %p711
        %p1956 = pneg %p735
        %p1957 = pneg %p732
        %p1958 = pneg %p756
        %p1959 = pneg %p753
        %p1960 = pneg %p777
        %p1961 = pneg %p774
        %p1962 = pneg %p798
        %p1963 = pneg %p795
        %p1964 = pneg %p819
        %p1965 = pneg %p816
        %p1966 = pneg %p840
        %p1967 = pneg %p837
        %p1968 = pneg %p861
        %p1969 = pneg %p858
        %p1970 = pneg %p882
        %p1971 = pneg %p879
        %p1972 = pneg %p903
        %p1973 = pneg %p900
        %p1974 = pneg %p924
        %p1975 = pneg %p921
        %p1976 = pneg %p945
        %p1977 = pneg %p942
        %p1978 = pneg %p966
        %p1979 = pneg %p963
        %p1980 = pneg %p987
        %p1981 = pneg %p984
        %p1982 = pneg %p1008
        %p1983 = pneg %p1005
        %p1984 = pneg %p1029
        %p1985 = pneg %p1026
        %p1986 = pneg %p1050
        %p1987 = pneg %p1047
        %p1988 = pneg %p1071
        %p1989 = pneg %p1068
        %p1990 = pneg %p1092
        %p1991 = pneg %p1089
        %p1992 = pneg %p1113
        %p1993 = pneg %p1110
        %p1994 = pneg %p1134
        %p1995 = pneg %p1131
        %p1996 = pneg %p1155
        %p1997 = pneg %p1152
        %p1998 = pneg %p1176
        %p1999 = pneg %p1173
        %p2000 = pneg %p1197
        %p2001 = pneg %p1194
        %p2002 = pneg %p1218
        %p2003 = pneg %p1215
        %p2004 = pneg %p1239
        %p2005 = pneg %p1236
        %p2006 = pneg %p1260
        %p2007 = pneg %p1257
        %p2008 = pneg %p1281
        %p2009 = pneg %p1278
        %p2010 = pneg %p1302
        %p2011 = pneg %p1299
        %p2012 = pneg %p1323
        %p2013 = pneg %p1320
        %p2014 = pneg %p1344
        %p2015 = pneg %p1341
        %p2016 = pneg %p1365
        %p2017 = pneg %p1362
        %p2018 = pneg %p1386
        %p2019 = pneg %p1383
        %p2020 = pneg %p1407
        %p2021 = pneg %p1404
        %p2022 = pneg %p1428
        %p2023 = pneg %p1425
        %p2024 = pneg %p1449
        %p2025 = pneg %p1446
        %p2026 = pneg %p1470
        %p2027 = pneg %p1467
        %p2028 = pneg %p1491
        %p2029 = pneg %p1488
        %p2030 = pneg %p1517
        %p2031 = pneg %p1514
        %s2032 = smul.u32 4, %s147
        %p2033 = scmp.lt.s32.totalorder %s2032, 7
        %s2034 = scalar_select %p2033, %s2032, 7
        %s2035 = smul.addr %s2034, 8
        %s2036 = scalar_lea.vmem %s129, %s2035
        %s2037 = smul.u32 4, %s147
        %p2038 = scmp.lt.s32.totalorder %s2037, 7
        %s2039 = scalar_select %p2038, %s2037, 7
        %s2040 = smul.addr %s2039, 8
        %s2041 = scalar_lea.vmem %s1, %s2040
        %s2042 = smul.u32 4, %s147
        %s2043 = smul.u32 4, %s147
        %p2044 = scmp.lt.s32.totalorder %s2043, 7
        %s2045 = scalar_select %p2044, %s2043, 7
        %s2046 = smul.addr %s2045, 8
        %s2047 = scalar_lea.vmem %s129, %s2046
        %s2048 = smul.u32 4, %s147
        %v2049 = vld [vmem:[%s2041] sm:$0xff]
        %v2050 = vld [vmem:[%s2041 + $0x8] sm:$0xff]
        %v2051 = vld [vmem:[%s2041 + $0x10] sm:$0xff]
        %v2052 = vld [vmem:[%s2041 + $0x18] sm:$0xff]
        %v2053 = vld [vmem:[%s3] sm:$0xff]
        %v2054 = vld [vmem:[%s3 + $0x8] sm:$0xff]
        %v2055 = vld [vmem:[%s3 + $0x10] sm:$0xff]
        %v2056 = vld [vmem:[%s3 + $0x18] sm:$0xff]
        %v2057 = vld [vmem:[%s3 + $0x20] sm:$0xff]
        %v2058 = vld [vmem:[%s3 + $0x28] sm:$0xff]
        %v2059 = vld [vmem:[%s3 + $0x30] sm:$0xff]
        %v2060 = vld [vmem:[%s3 + $0x38] sm:$0xff]
        %v2061 = vld [vmem:[%s3 + $0x40] sm:$0xff]
        %v2062 = vld [vmem:[%s3 + $0x48] sm:$0xff]
        %v2063 = vld [vmem:[%s3 + $0x50] sm:$0xff]
        %v2064 = vld [vmem:[%s3 + $0x58] sm:$0xff]
        %v2065 = vld [vmem:[%s3 + $0x60] sm:$0xff]
        %v2066 = vld [vmem:[%s3 + $0x68] sm:$0xff]
        %v2067 = vld [vmem:[%s3 + $0x70] sm:$0xff]
        %v2068 = vld [vmem:[%s3 + $0x78] sm:$0xff]
        %v2069 = vld [vmem:[%s5] sm:$0xff]
        %v2070 = vld [vmem:[%s5 + $0x8] sm:$0xff]
        %v2071 = vld [vmem:[%s5 + $0x10] sm:$0xff]
        %v2072 = vld [vmem:[%s5 + $0x18] sm:$0xff]
        %v2073 = vld [vmem:[%s5 + $0x20] sm:$0xff]
        %v2074 = vld [vmem:[%s5 + $0x28] sm:$0xff]
        %v2075 = vld [vmem:[%s5 + $0x30] sm:$0xff]
        %v2076 = vld [vmem:[%s5 + $0x38] sm:$0xff]
        %v2077 = vld [vmem:[%s5 + $0x40] sm:$0xff]
        %v2078 = vld [vmem:[%s5 + $0x48] sm:$0xff]
        %v2079 = vld [vmem:[%s5 + $0x50] sm:$0xff]
        %v2080 = vld [vmem:[%s5 + $0x58] sm:$0xff]
        %v2081 = vld [vmem:[%s5 + $0x60] sm:$0xff]
        %v2082 = vld [vmem:[%s5 + $0x68] sm:$0xff]
        %v2083 = vld [vmem:[%s5 + $0x70] sm:$0xff]
        %v2084 = vld [vmem:[%s5 + $0x78] sm:$0xff]
        %v2085 = vld [vmem:[%s9] sm:$0xff]
        %v2086 = vld [vmem:[%s9 + $0x8] sm:$0xff]
        %v2087 = vld [vmem:[%s9 + $0x10] sm:$0xff]
        %v2088 = vld [vmem:[%s9 + $0x18] sm:$0xff]
        %v2089 = vld [vmem:[%s9 + $0x20] sm:$0xff]
        %v2090 = vld [vmem:[%s9 + $0x28] sm:$0xff]
        %v2091 = vld [vmem:[%s9 + $0x30] sm:$0xff]
        %v2092 = vld [vmem:[%s9 + $0x38] sm:$0xff]
        %v2093 = vld [vmem:[%s9 + $0x40] sm:$0xff]
        %v2094 = vld [vmem:[%s9 + $0x48] sm:$0xff]
        %v2095 = vld [vmem:[%s9 + $0x50] sm:$0xff]
        %v2096 = vld [vmem:[%s9 + $0x58] sm:$0xff]
        %v2097 = vld [vmem:[%s9 + $0x60] sm:$0xff]
        %v2098 = vld [vmem:[%s9 + $0x68] sm:$0xff]
        %v2099 = vld [vmem:[%s9 + $0x70] sm:$0xff]
        %v2100 = vld [vmem:[%s9 + $0x78] sm:$0xff]
        %v2101 = vld [vmem:[%s7] sm:$0x1]
        %2103 = vset.pattern.permute.xlu0 0
        %2104 = vperm.xlu0 %2103, %v2085
        %v2105 = vpop.permute.xlu0 %2104
        %2108 = vset.pattern.permute.xlu0 0
        %2109 = vperm.xlu0 %2108, %v2086
        %v2110 = vpop.permute.xlu0 %2109
        %2113 = vset.pattern.permute.xlu0 0
        %2114 = vperm.xlu0 %2113, %v2087
        %v2115 = vpop.permute.xlu0 %2114
        %2118 = vset.pattern.permute.xlu0 0
        %2119 = vperm.xlu0 %2118, %v2088
        %v2120 = vpop.permute.xlu0 %2119
        %2123 = vset.pattern.permute.xlu0 0
        %2124 = vperm.xlu0 %2123, %v2089
        %v2125 = vpop.permute.xlu0 %2124
        %2128 = vset.pattern.permute.xlu0 0
        %2129 = vperm.xlu0 %2128, %v2090
        %v2130 = vpop.permute.xlu0 %2129
        %2133 = vset.pattern.permute.xlu0 0
        %2134 = vperm.xlu0 %2133, %v2091
        %v2135 = vpop.permute.xlu0 %2134
        %2138 = vset.pattern.permute.xlu0 0
        %2139 = vperm.xlu0 %2138, %v2092
        %v2140 = vpop.permute.xlu0 %2139
        %2143 = vset.pattern.permute.xlu0 0
        %2144 = vperm.xlu0 %2143, %v2093
        %v2145 = vpop.permute.xlu0 %2144
        %2148 = vset.pattern.permute.xlu0 0
        %2149 = vperm.xlu0 %2148, %v2094
        %v2150 = vpop.permute.xlu0 %2149
        %2153 = vset.pattern.permute.xlu0 0
        %2154 = vperm.xlu0 %2153, %v2095
        %v2155 = vpop.permute.xlu0 %2154
        %2158 = vset.pattern.permute.xlu0 0
        %2159 = vperm.xlu0 %2158, %v2096
        %v2160 = vpop.permute.xlu0 %2159
        %2163 = vset.pattern.permute.xlu0 0
        %2164 = vperm.xlu0 %2163, %v2097
        %v2165 = vpop.permute.xlu0 %2164
        %2168 = vset.pattern.permute.xlu0 0
        %2169 = vperm.xlu0 %2168, %v2098
        %v2170 = vpop.permute.xlu0 %2169
        %2173 = vset.pattern.permute.xlu0 0
        %2174 = vperm.xlu0 %2173, %v2099
        %v2175 = vpop.permute.xlu0 %2174
        %2178 = vset.pattern.permute.xlu0 0
        %2179 = vperm.xlu0 %2178, %v2100
        %v2180 = vpop.permute.xlu0 %2179
        %v2183 = vlaneseq
        %v2184 = vshrl.u32 %v2183, 7
        %v2185 = vsub.s32 0, %v2184
        %v2186 = vrot.slane %v2101, %v2185
        %v2188 = vmul.f32 %v2105, %v2186
        %v2189 = vmul.f32 %v2110, %v2186
        %v2190 = vmul.f32 %v2115, %v2186
        %v2191 = vmul.f32 %v2120, %v2186
        %v2192 = vmul.f32 %v2125, %v2186
        %v2193 = vmul.f32 %v2130, %v2186
        %v2194 = vmul.f32 %v2135, %v2186
        %v2195 = vmul.f32 %v2140, %v2186
        %v2196 = vmul.f32 %v2145, %v2186
        %v2197 = vmul.f32 %v2150, %v2186
        %v2198 = vmul.f32 %v2155, %v2186
        %v2199 = vmul.f32 %v2160, %v2186
        %v2200 = vmul.f32 %v2165, %v2186
        %v2201 = vmul.f32 %v2170, %v2186
        %v2202 = vmul.f32 %v2175, %v2186
        %v2203 = vmul.f32 %v2180, %v2186
        %v2204 = vmul.f32 %v2069, %v2188
        %v2205 = vmul.f32 %v2070, %v2189
        %v2206 = vmul.f32 %v2071, %v2190
        %v2207 = vmul.f32 %v2072, %v2191
        %v2208 = vmul.f32 %v2073, %v2192
        %v2209 = vmul.f32 %v2074, %v2193
        %v2210 = vmul.f32 %v2075, %v2194
        %v2211 = vmul.f32 %v2076, %v2195
        %v2212 = vmul.f32 %v2077, %v2196
        %v2213 = vmul.f32 %v2078, %v2197
        %v2214 = vmul.f32 %v2079, %v2198
        %v2215 = vmul.f32 %v2080, %v2199
        %v2216 = vmul.f32 %v2081, %v2200
        %v2217 = vmul.f32 %v2082, %v2201
        %v2218 = vmul.f32 %v2083, %v2202
        %v2219 = vmul.f32 %v2084, %v2203
        %v2220 = vadd.f32 %v2053, %v2204
        %v2221 = vadd.f32 %v2054, %v2205
        %v2222 = vadd.f32 %v2055, %v2206
        %v2223 = vadd.f32 %v2056, %v2207
        %v2224 = vadd.f32 %v2057, %v2208
        %v2225 = vadd.f32 %v2058, %v2209
        %v2226 = vadd.f32 %v2059, %v2210
        %v2227 = vadd.f32 %v2060, %v2211
        %v2228 = vadd.f32 %v2061, %v2212
        %v2229 = vadd.f32 %v2062, %v2213
        %v2230 = vadd.f32 %v2063, %v2214
        %v2231 = vadd.f32 %v2064, %v2215
        %v2232 = vadd.f32 %v2065, %v2216
        %v2233 = vadd.f32 %v2066, %v2217
        %v2234 = vadd.f32 %v2067, %v2218
        %v2235 = vadd.f32 %v2068, %v2219
        %v2236 = vld [vmem:[%s11] sm:$0x1]
        %v2237 = vld [vmem:[%s13] sm:$0x1]
        %v2238 = vld [vmem:[%s15] sm:$0x1]
        %v2239 = vmul.f32 %v2237, %v2238
        %v2240 = vadd.f32 %v2236, %v2239
        %v2242 = vlaneseq
        %v2243 = vshrl.u32 %v2242, 7
        %v2244 = vsub.s32 0, %v2243
        %v2245 = vrot.slane %v2240, %v2244
        %2247 = vmatprep.subr.mxu0 0.0
        %2248 = vmatpush1.xpose.msra.mxu0 %v2235
        %2249 = vmatprep.subr.mxu0 0.0
        %2250 = vmatpush1.xpose.msra.mxu0 %v2234
        %2251 = vmatprep.subr.mxu0 0.0
        %2252 = vmatpush1.xpose.msra.mxu0 %v2233
        %2253 = vmatprep.subr.mxu0 0.0
        %2254 = vmatpush1.xpose.msra.mxu0 %v2232
        %2255 = vmatprep.subr.mxu0 0.0
        %2256 = vmatpush1.xpose.msra.mxu0 %v2231
        %2257 = vmatprep.subr.mxu0 0.0
        %2258 = vmatpush1.xpose.msra.mxu0 %v2230
        %2259 = vmatprep.subr.mxu0 0.0
        %2260 = vmatpush1.xpose.msra.mxu0 %v2229
        %2261 = vmatprep.subr.mxu0 0.0
        %2262 = vmatpush1.xpose.msra.mxu0 %v2228
        %2263 = vmatprep.subr.mxu0 0.0
        %2264 = vmatpush1.xpose.msra.mxu0 %v2227
        %2265 = vmatprep.subr.mxu0 0.0
        %2266 = vmatpush1.xpose.msra.mxu0 %v2226
        %2267 = vmatprep.subr.mxu0 0.0
        %2268 = vmatpush1.xpose.msra.mxu0 %v2225
        %2269 = vmatprep.subr.mxu0 0.0
        %2270 = vmatpush1.xpose.msra.mxu0 %v2224
        %2271 = vmatprep.subr.mxu0 0.0
        %2272 = vmatpush1.xpose.msra.mxu0 %v2223
        %2273 = vmatprep.subr.mxu0 0.0
        %2274 = vmatpush1.xpose.msra.mxu0 %v2222
        %2275 = vmatprep.subr.mxu0 0.0
        %2276 = vmatpush1.xpose.msra.mxu0 %v2221
        %2277 = vmatprep.subr.mxu0 0.0
        %2278 = vmatpush1.xpose.msra.mxu0 %v2220
        %2279 = vmatprep.subr.mxu0 0.0
        %2280 = vmatpush2.xpose.msra.mxu0 0.0
        %2281 = vmatprep.subr.mxu0 0.0
        %2282 = vmatpush2.xpose.msra.mxu0 0.0
        %2283 = vmatprep.subr.mxu0 0.0
        %2284 = vmatpush2.xpose.msra.mxu0 0.0
        %2285 = vmatprep.subr.mxu0 0.0
        %2286 = vmatpush2.xpose.msra.mxu0 0.0
        %2287 = vmatprep.subr.mxu0 0.0
        %2288 = vmatpush2.xpose.msra.mxu0 0.0
        %2289 = vmatprep.subr.mxu0 0.0
        %2290 = vmatpush2.xpose.msra.mxu0 0.0
        %2291 = vmatprep.subr.mxu0 0.0
        %2292 = vmatpush2.xpose.msra.mxu0 0.0
        %2293 = vmatprep.subr.mxu0 0.0
        %2294 = vmatpush2.xpose.msra.mxu0 0.0
        %2295 = vmatprep.subr.mxu0 0.0
        %2296 = vmatpush2.xpose.msra.mxu0 0.0
        %2297 = vmatprep.subr.mxu0 0.0
        %2298 = vmatpush2.xpose.msra.mxu0 0.0
        %2299 = vmatprep.subr.mxu0 0.0
        %2300 = vmatpush2.xpose.msra.mxu0 0.0
        %2301 = vmatprep.subr.mxu0 0.0
        %2302 = vmatpush2.xpose.msra.mxu0 0.0
        %2303 = vmatprep.subr.mxu0 0.0
        %2304 = vmatpush2.xpose.msra.mxu0 0.0
        %2305 = vmatprep.subr.mxu0 0.0
        %2306 = vmatpush2.xpose.msra.mxu0 0.0
        %2307 = vmatprep.subr.mxu0 0.0
        %2308 = vmatpush2.xpose.msra.mxu0 0.0
        %2309 = vmatprep.subr.mxu0 0.0
        %2310 = vmatpush2.xpose.msra.mxu0 0.0
        %2311 = vmatprep.mubr.f32.mxu0 0.0
        %2312 = vmatmul.mubr.f32.gmra.mxu0 %v2049
        %v2313 = vpop.f32.mrf.mxu0
        %v2314 = vadd.f32 %v2245, %v2313
        %v2315 = vpop.f32.mrf.mxu0
        %2316 = vmatprep.mubr.f32.mxu0 0.0
        %2317 = vmatmul.mubr.f32.gmra.mxu0 %v2050
        %v2318 = vpop.f32.mrf.mxu0
        %v2319 = vadd.f32 %v2245, %v2318
        %v2320 = vpop.f32.mrf.mxu0
        %2321 = vmatprep.mubr.f32.mxu0 0.0
        %2322 = vmatmul.mubr.f32.gmra.mxu0 %v2051
        %v2323 = vpop.f32.mrf.mxu0
        %v2324 = vadd.f32 %v2245, %v2323
        %v2325 = vpop.f32.mrf.mxu0
        %2326 = vmatprep.mubr.f32.mxu0 0.0
        %2327 = vmatmul.mubr.f32.gmra.mxu0 %v2052
        %v2328 = vpop.f32.mrf.mxu0
        %v2329 = vadd.f32 %v2245, %v2328
        %v2330 = vpop.f32.mrf.mxu0
        %2331 = vdwg.mxu0
        %v2332 = vmax.f32 %v2314, 0.0
        %v2333 = vmax.f32 %v2319, 0.0
        %v2334 = vmax.f32 %v2324, 0.0
        %v2335 = vmax.f32 %v2329, 0.0
        %v2336 = vld [vmem:[%s17] sm:$0xff]
        %v2337 = vld [vmem:[%s17 + $0x8] sm:$0xff]
        %v2338 = vld [vmem:[%s17 + $0x10] sm:$0xff]
        %v2339 = vld [vmem:[%s17 + $0x18] sm:$0xff]
        %v2340 = vld [vmem:[%s17 + $0x20] sm:$0xff]
        %v2341 = vld [vmem:[%s17 + $0x28] sm:$0xff]
        %v2342 = vld [vmem:[%s17 + $0x30] sm:$0xff]
        %v2343 = vld [vmem:[%s17 + $0x38] sm:$0xff]
        %v2344 = vld [vmem:[%s17 + $0x40] sm:$0xff]
        %v2345 = vld [vmem:[%s17 + $0x48] sm:$0xff]
        %v2346 = vld [vmem:[%s17 + $0x50] sm:$0xff]
        %v2347 = vld [vmem:[%s17 + $0x58] sm:$0xff]
        %v2348 = vld [vmem:[%s17 + $0x60] sm:$0xff]
        %v2349 = vld [vmem:[%s17 + $0x68] sm:$0xff]
        %v2350 = vld [vmem:[%s17 + $0x70] sm:$0xff]
        %v2351 = vld [vmem:[%s17 + $0x78] sm:$0xff]
        %v2352 = vld [vmem:[%s19] sm:$0xff]
        %v2353 = vld [vmem:[%s19 + $0x8] sm:$0xff]
        %v2354 = vld [vmem:[%s19 + $0x10] sm:$0xff]
        %v2355 = vld [vmem:[%s19 + $0x18] sm:$0xff]
        %v2356 = vld [vmem:[%s19 + $0x20] sm:$0xff]
        %v2357 = vld [vmem:[%s19 + $0x28] sm:$0xff]
        %v2358 = vld [vmem:[%s19 + $0x30] sm:$0xff]
        %v2359 = vld [vmem:[%s19 + $0x38] sm:$0xff]
        %v2360 = vld [vmem:[%s19 + $0x40] sm:$0xff]
        %v2361 = vld [vmem:[%s19 + $0x48] sm:$0xff]
        %v2362 = vld [vmem:[%s19 + $0x50] sm:$0xff]
        %v2363 = vld [vmem:[%s19 + $0x58] sm:$0xff]
        %v2364 = vld [vmem:[%s19 + $0x60] sm:$0xff]
        %v2365 = vld [vmem:[%s19 + $0x68] sm:$0xff]
        %v2366 = vld [vmem:[%s19 + $0x70] sm:$0xff]
        %v2367 = vld [vmem:[%s19 + $0x78] sm:$0xff]
        %v2368 = vld [vmem:[%s23] sm:$0xff]
        %v2369 = vld [vmem:[%s23 + $0x8] sm:$0xff]
        %v2370 = vld [vmem:[%s23 + $0x10] sm:$0xff]
        %v2371 = vld [vmem:[%s23 + $0x18] sm:$0xff]
        %v2372 = vld [vmem:[%s23 + $0x20] sm:$0xff]
        %v2373 = vld [vmem:[%s23 + $0x28] sm:$0xff]
        %v2374 = vld [vmem:[%s23 + $0x30] sm:$0xff]
        %v2375 = vld [vmem:[%s23 + $0x38] sm:$0xff]
        %v2376 = vld [vmem:[%s23 + $0x40] sm:$0xff]
        %v2377 = vld [vmem:[%s23 + $0x48] sm:$0xff]
        %v2378 = vld [vmem:[%s23 + $0x50] sm:$0xff]
        %v2379 = vld [vmem:[%s23 + $0x58] sm:$0xff]
        %v2380 = vld [vmem:[%s23 + $0x60] sm:$0xff]
        %v2381 = vld [vmem:[%s23 + $0x68] sm:$0xff]
        %v2382 = vld [vmem:[%s23 + $0x70] sm:$0xff]
        %v2383 = vld [vmem:[%s23 + $0x78] sm:$0xff]
        %v2384 = vld [vmem:[%s21] sm:$0x1]
        %2386 = vset.pattern.permute.xlu0 0
        %2387 = vperm.xlu0 %2386, %v2368
        %v2388 = vpop.permute.xlu0 %2387
        %2391 = vset.pattern.permute.xlu0 0
        %2392 = vperm.xlu0 %2391, %v2369
        %v2393 = vpop.permute.xlu0 %2392
        %2396 = vset.pattern.permute.xlu0 0
        %2397 = vperm.xlu0 %2396, %v2370
        %v2398 = vpop.permute.xlu0 %2397
        %2401 = vset.pattern.permute.xlu0 0
        %2402 = vperm.xlu0 %2401, %v2371
        %v2403 = vpop.permute.xlu0 %2402
        %2406 = vset.pattern.permute.xlu0 0
        %2407 = vperm.xlu0 %2406, %v2372
        %v2408 = vpop.permute.xlu0 %2407
        %2411 = vset.pattern.permute.xlu0 0
        %2412 = vperm.xlu0 %2411, %v2373
        %v2413 = vpop.permute.xlu0 %2412
        %2416 = vset.pattern.permute.xlu0 0
        %2417 = vperm.xlu0 %2416, %v2374
        %v2418 = vpop.permute.xlu0 %2417
        %2421 = vset.pattern.permute.xlu0 0
        %2422 = vperm.xlu0 %2421, %v2375
        %v2423 = vpop.permute.xlu0 %2422
        %2426 = vset.pattern.permute.xlu0 0
        %2427 = vperm.xlu0 %2426, %v2376
        %v2428 = vpop.permute.xlu0 %2427
        %2431 = vset.pattern.permute.xlu0 0
        %2432 = vperm.xlu0 %2431, %v2377
        %v2433 = vpop.permute.xlu0 %2432
        %2436 = vset.pattern.permute.xlu0 0
        %2437 = vperm.xlu0 %2436, %v2378
        %v2438 = vpop.permute.xlu0 %2437
        %2441 = vset.pattern.permute.xlu0 0
        %2442 = vperm.xlu0 %2441, %v2379
        %v2443 = vpop.permute.xlu0 %2442
        %2446 = vset.pattern.permute.xlu0 0
        %2447 = vperm.xlu0 %2446, %v2380
        %v2448 = vpop.permute.xlu0 %2447
        %2451 = vset.pattern.permute.xlu0 0
        %2452 = vperm.xlu0 %2451, %v2381
        %v2453 = vpop.permute.xlu0 %2452
        %2456 = vset.pattern.permute.xlu0 0
        %2457 = vperm.xlu0 %2456, %v2382
        %v2458 = vpop.permute.xlu0 %2457
        %2461 = vset.pattern.permute.xlu0 0
        %2462 = vperm.xlu0 %2461, %v2383
        %v2463 = vpop.permute.xlu0 %2462
        %v2466 = vlaneseq
        %v2467 = vshrl.u32 %v2466, 7
        %v2468 = vsub.s32 0, %v2467
        %v2469 = vrot.slane %v2384, %v2468
        %v2471 = vmul.f32 %v2388, %v2469
        %v2472 = vmul.f32 %v2393, %v2469
        %v2473 = vmul.f32 %v2398, %v2469
        %v2474 = vmul.f32 %v2403, %v2469
        %v2475 = vmul.f32 %v2408, %v2469
        %v2476 = vmul.f32 %v2413, %v2469
        %v2477 = vmul.f32 %v2418, %v2469
        %v2478 = vmul.f32 %v2423, %v2469
        %v2479 = vmul.f32 %v2428, %v2469
        %v2480 = vmul.f32 %v2433, %v2469
        %v2481 = vmul.f32 %v2438, %v2469
        %v2482 = vmul.f32 %v2443, %v2469
        %v2483 = vmul.f32 %v2448, %v2469
        %v2484 = vmul.f32 %v2453, %v2469
        %v2485 = vmul.f32 %v2458, %v2469
        %v2486 = vmul.f32 %v2463, %v2469
        %v2487 = vmul.f32 %v2352, %v2471
        %v2488 = vmul.f32 %v2353, %v2472
        %v2489 = vmul.f32 %v2354, %v2473
        %v2490 = vmul.f32 %v2355, %v2474
        %v2491 = vmul.f32 %v2356, %v2475
        %v2492 = vmul.f32 %v2357, %v2476
        %v2493 = vmul.f32 %v2358, %v2477
        %v2494 = vmul.f32 %v2359, %v2478
        %v2495 = vmul.f32 %v2360, %v2479
        %v2496 = vmul.f32 %v2361, %v2480
        %v2497 = vmul.f32 %v2362, %v2481
        %v2498 = vmul.f32 %v2363, %v2482
        %v2499 = vmul.f32 %v2364, %v2483
        %v2500 = vmul.f32 %v2365, %v2484
        %v2501 = vmul.f32 %v2366, %v2485
        %v2502 = vmul.f32 %v2367, %v2486
        %v2503 = vadd.f32 %v2336, %v2487
        %v2504 = vadd.f32 %v2337, %v2488
        %v2505 = vadd.f32 %v2338, %v2489
        %v2506 = vadd.f32 %v2339, %v2490
        %v2507 = vadd.f32 %v2340, %v2491
        %v2508 = vadd.f32 %v2341, %v2492
        %v2509 = vadd.f32 %v2342, %v2493
        %v2510 = vadd.f32 %v2343, %v2494
        %v2511 = vadd.f32 %v2344, %v2495
        %v2512 = vadd.f32 %v2345, %v2496
        %v2513 = vadd.f32 %v2346, %v2497
        %v2514 = vadd.f32 %v2347, %v2498
        %v2515 = vadd.f32 %v2348, %v2499
        %v2516 = vadd.f32 %v2349, %v2500
        %v2517 = vadd.f32 %v2350, %v2501
        %v2518 = vadd.f32 %v2351, %v2502
        %v2519 = vld [vmem:[%s25] sm:$0x1]
        %v2520 = vld [vmem:[%s27] sm:$0x1]
        %v2521 = vld [vmem:[%s29] sm:$0x1]
        %v2522 = vmul.f32 %v2520, %v2521
        %v2523 = vadd.f32 %v2519, %v2522
        %v2525 = vlaneseq
        %v2526 = vshrl.u32 %v2525, 7
        %v2527 = vsub.s32 0, %v2526
        %v2528 = vrot.slane %v2523, %v2527
        %2530 = vmatprep.subr.mxu0 0.0
        %2531 = vmatpush1.xpose.msra.mxu0 %v2518
        %2532 = vmatprep.subr.mxu0 0.0
        %2533 = vmatpush1.xpose.msra.mxu0 %v2517
        %2534 = vmatprep.subr.mxu0 0.0
        %2535 = vmatpush1.xpose.msra.mxu0 %v2516
        %2536 = vmatprep.subr.mxu0 0.0
        %2537 = vmatpush1.xpose.msra.mxu0 %v2515
        %2538 = vmatprep.subr.mxu0 0.0
        %2539 = vmatpush1.xpose.msra.mxu0 %v2514
        %2540 = vmatprep.subr.mxu0 0.0
        %2541 = vmatpush1.xpose.msra.mxu0 %v2513
        %2542 = vmatprep.subr.mxu0 0.0
        %2543 = vmatpush1.xpose.msra.mxu0 %v2512
        %2544 = vmatprep.subr.mxu0 0.0
        %2545 = vmatpush1.xpose.msra.mxu0 %v2511
        %2546 = vmatprep.subr.mxu0 0.0
        %2547 = vmatpush1.xpose.msra.mxu0 %v2510
        %2548 = vmatprep.subr.mxu0 0.0
        %2549 = vmatpush1.xpose.msra.mxu0 %v2509
        %2550 = vmatprep.subr.mxu0 0.0
        %2551 = vmatpush1.xpose.msra.mxu0 %v2508
        %2552 = vmatprep.subr.mxu0 0.0
        %2553 = vmatpush1.xpose.msra.mxu0 %v2507
        %2554 = vmatprep.subr.mxu0 0.0
        %2555 = vmatpush1.xpose.msra.mxu0 %v2506
        %2556 = vmatprep.subr.mxu0 0.0
        %2557 = vmatpush1.xpose.msra.mxu0 %v2505
        %2558 = vmatprep.subr.mxu0 0.0
        %2559 = vmatpush1.xpose.msra.mxu0 %v2504
        %2560 = vmatprep.subr.mxu0 0.0
        %2561 = vmatpush1.xpose.msra.mxu0 %v2503
        %2562 = vmatprep.subr.mxu0 0.0
        %2563 = vmatpush2.xpose.msra.mxu0 0.0
        %2564 = vmatprep.subr.mxu0 0.0
        %2565 = vmatpush2.xpose.msra.mxu0 0.0
        %2566 = vmatprep.subr.mxu0 0.0
        %2567 = vmatpush2.xpose.msra.mxu0 0.0
        %2568 = vmatprep.subr.mxu0 0.0
        %2569 = vmatpush2.xpose.msra.mxu0 0.0
        %2570 = vmatprep.subr.mxu0 0.0
        %2571 = vmatpush2.xpose.msra.mxu0 0.0
        %2572 = vmatprep.subr.mxu0 0.0
        %2573 = vmatpush2.xpose.msra.mxu0 0.0
        %2574 = vmatprep.subr.mxu0 0.0
        %2575 = vmatpush2.xpose.msra.mxu0 0.0
        %2576 = vmatprep.subr.mxu0 0.0
        %2577 = vmatpush2.xpose.msra.mxu0 0.0
        %2578 = vmatprep.subr.mxu0 0.0
        %2579 = vmatpush2.xpose.msra.mxu0 0.0
        %2580 = vmatprep.subr.mxu0 0.0
        %2581 = vmatpush2.xpose.msra.mxu0 0.0
        %2582 = vmatprep.subr.mxu0 0.0
        %2583 = vmatpush2.xpose.msra.mxu0 0.0
        %2584 = vmatprep.subr.mxu0 0.0
        %2585 = vmatpush2.xpose.msra.mxu0 0.0
        %2586 = vmatprep.subr.mxu0 0.0
        %2587 = vmatpush2.xpose.msra.mxu0 0.0
        %2588 = vmatprep.subr.mxu0 0.0
        %2589 = vmatpush2.xpose.msra.mxu0 0.0
        %2590 = vmatprep.subr.mxu0 0.0
        %2591 = vmatpush2.xpose.msra.mxu0 0.0
        %2592 = vmatprep.subr.mxu0 0.0
        %2593 = vmatpush2.xpose.msra.mxu0 0.0
        %2594 = vmatprep.mubr.f32.mxu0 0.0
        %2595 = vmatmul.mubr.f32.gmra.mxu0 %v2332
        %v2596 = vpop.f32.mrf.mxu0
        %v2597 = vadd.f32 %v2528, %v2596
        %v2598 = vpop.f32.mrf.mxu0
        %2599 = vmatprep.mubr.f32.mxu0 0.0
        %2600 = vmatmul.mubr.f32.gmra.mxu0 %v2333
        %v2601 = vpop.f32.mrf.mxu0
        %v2602 = vadd.f32 %v2528, %v2601
        %v2603 = vpop.f32.mrf.mxu0
        %2604 = vmatprep.mubr.f32.mxu0 0.0
        %2605 = vmatmul.mubr.f32.gmra.mxu0 %v2334
        %v2606 = vpop.f32.mrf.mxu0
        %v2607 = vadd.f32 %v2528, %v2606
        %v2608 = vpop.f32.mrf.mxu0
        %2609 = vmatprep.mubr.f32.mxu0 0.0
        %2610 = vmatmul.mubr.f32.gmra.mxu0 %v2335
        %v2611 = vpop.f32.mrf.mxu0
        %v2612 = vadd.f32 %v2528, %v2611
        %v2613 = vpop.f32.mrf.mxu0
        %2614 = vdwg.mxu0
        %2615 = vadd.xlane.f32.xlu0 %v2597
        %v2616 = vpop.xlane.xlu0 %2615
        %2617 = vadd.xlane.f32.xlu0 %v2602
        %v2618 = vpop.xlane.xlu0 %2617
        %2619 = vadd.xlane.f32.xlu0 %v2607
        %v2620 = vpop.xlane.xlu0 %2619
        %2621 = vadd.xlane.f32.xlu0 %v2612
        %v2622 = vpop.xlane.xlu0 %2621
        %v2623 = vrcp.pop 128.0
        %v2624 = vmul.f32 %v2616, %v2623
        %v2625 = vmul.f32 %v2618, %v2623
        %v2626 = vmul.f32 %v2620, %v2623
        %v2627 = vmul.f32 %v2622, %v2623
        %v2628 = vsub.f32 %v2597, %v2624
        %v2629 = vsub.f32 %v2602, %v2625
        %v2630 = vsub.f32 %v2607, %v2626
        %v2631 = vsub.f32 %v2612, %v2627
        %v2632 = vmul.f32 %v2628, %v2628
        %v2633 = vmul.f32 %v2629, %v2629
        %v2634 = vmul.f32 %v2630, %v2630
        %v2635 = vmul.f32 %v2631, %v2631
        %2636 = vadd.xlane.f32.xlu0 %v2632
        %v2637 = vpop.xlane.xlu0 %2636
        %2638 = vadd.xlane.f32.xlu0 %v2633
        %v2639 = vpop.xlane.xlu0 %2638
        %2640 = vadd.xlane.f32.xlu0 %v2634
        %v2641 = vpop.xlane.xlu0 %2640
        %2642 = vadd.xlane.f32.xlu0 %v2635
        %v2643 = vpop.xlane.xlu0 %2642
        %v2644 = vmul.f32 %v2637, %v2623
        %v2645 = vmul.f32 %v2639, %v2623
        %v2646 = vmul.f32 %v2641, %v2623
        %v2647 = vmul.f32 %v2643, %v2623
        %v2648 = vadd.f32 %v2644, 1e-05
        %v2649 = vadd.f32 %v2645, 1e-05
        %v2650 = vadd.f32 %v2646, 1e-05
        %v2651 = vadd.f32 %v2647, 1e-05
        %v2652 = vrsqrt.pop %v2648
        %v2653 = vrsqrt.pop %v2649
        %v2654 = vrsqrt.pop %v2650
        %v2655 = vrsqrt.pop %v2651
        %v2656 = vmul.f32 %v2628, %v2652
        %v2657 = vmul.f32 %v2629, %v2653
        %v2658 = vmul.f32 %v2630, %v2654
        %v2659 = vmul.f32 %v2631, %v2655
        %v2660 = vld [vmem:[#allocation4] sm:$0x1]
        %v2662 = vlaneseq
        %v2663 = vshrl.u32 %v2662, 7
        %v2664 = vsub.s32 0, %v2663
        %v2665 = vrot.slane %v2660, %v2664
        %v2667 = vmul.f32 %v2656, %v2665
        %v2668 = vmul.f32 %v2657, %v2665
        %v2669 = vmul.f32 %v2658, %v2665
        %v2670 = vmul.f32 %v2659, %v2665
        %v2671 = vld [vmem:[#allocation6] sm:$0x1]
        %v2673 = vlaneseq
        %v2674 = vshrl.u32 %v2673, 7
        %v2675 = vsub.s32 0, %v2674
        %v2676 = vrot.slane %v2671, %v2675
        %v2678 = vadd.f32 %v2667, %v2676
        %v2679 = vadd.f32 %v2668, %v2676
        %v2680 = vadd.f32 %v2669, %v2676
        %v2681 = vadd.f32 %v2670, %v2676
        %v2682 = vmax.f32 %v2678, 0.0
        %v2683 = vmax.f32 %v2679, 0.0
        %v2684 = vmax.f32 %v2680, 0.0
        %v2685 = vmax.f32 %v2681, 0.0
        %v2686 = vld [vmem:[%s31] sm:$0xff]
        %v2687 = vld [vmem:[%s31 + $0x8] sm:$0xff]
        %v2688 = vld [vmem:[%s31 + $0x10] sm:$0xff]
        %v2689 = vld [vmem:[%s31 + $0x18] sm:$0xff]
        %v2690 = vld [vmem:[%s31 + $0x20] sm:$0xff]
        %v2691 = vld [vmem:[%s31 + $0x28] sm:$0xff]
        %v2692 = vld [vmem:[%s31 + $0x30] sm:$0xff]
        %v2693 = vld [vmem:[%s31 + $0x38] sm:$0xff]
        %v2694 = vld [vmem:[%s31 + $0x40] sm:$0xff]
        %v2695 = vld [vmem:[%s31 + $0x48] sm:$0xff]
        %v2696 = vld [vmem:[%s31 + $0x50] sm:$0xff]
        %v2697 = vld [vmem:[%s31 + $0x58] sm:$0xff]
        %v2698 = vld [vmem:[%s31 + $0x60] sm:$0xff]
        %v2699 = vld [vmem:[%s31 + $0x68] sm:$0xff]
        %v2700 = vld [vmem:[%s31 + $0x70] sm:$0xff]
        %v2701 = vld [vmem:[%s31 + $0x78] sm:$0xff]
        %v2702 = vld [vmem:[%s33] sm:$0xff]
        %v2703 = vld [vmem:[%s33 + $0x8] sm:$0xff]
        %v2704 = vld [vmem:[%s33 + $0x10] sm:$0xff]
        %v2705 = vld [vmem:[%s33 + $0x18] sm:$0xff]
        %v2706 = vld [vmem:[%s33 + $0x20] sm:$0xff]
        %v2707 = vld [vmem:[%s33 + $0x28] sm:$0xff]
        %v2708 = vld [vmem:[%s33 + $0x30] sm:$0xff]
        %v2709 = vld [vmem:[%s33 + $0x38] sm:$0xff]
        %v2710 = vld [vmem:[%s33 + $0x40] sm:$0xff]
        %v2711 = vld [vmem:[%s33 + $0x48] sm:$0xff]
        %v2712 = vld [vmem:[%s33 + $0x50] sm:$0xff]
        %v2713 = vld [vmem:[%s33 + $0x58] sm:$0xff]
        %v2714 = vld [vmem:[%s33 + $0x60] sm:$0xff]
        %v2715 = vld [vmem:[%s33 + $0x68] sm:$0xff]
        %v2716 = vld [vmem:[%s33 + $0x70] sm:$0xff]
        %v2717 = vld [vmem:[%s33 + $0x78] sm:$0xff]
        %v2718 = vld [vmem:[%s37] sm:$0xff]
        %v2719 = vld [vmem:[%s37 + $0x8] sm:$0xff]
        %v2720 = vld [vmem:[%s37 + $0x10] sm:$0xff]
        %v2721 = vld [vmem:[%s37 + $0x18] sm:$0xff]
        %v2722 = vld [vmem:[%s37 + $0x20] sm:$0xff]
        %v2723 = vld [vmem:[%s37 + $0x28] sm:$0xff]
        %v2724 = vld [vmem:[%s37 + $0x30] sm:$0xff]
        %v2725 = vld [vmem:[%s37 + $0x38] sm:$0xff]
        %v2726 = vld [vmem:[%s37 + $0x40] sm:$0xff]
        %v2727 = vld [vmem:[%s37 + $0x48] sm:$0xff]
        %v2728 = vld [vmem:[%s37 + $0x50] sm:$0xff]
        %v2729 = vld [vmem:[%s37 + $0x58] sm:$0xff]
        %v2730 = vld [vmem:[%s37 + $0x60] sm:$0xff]
        %v2731 = vld [vmem:[%s37 + $0x68] sm:$0xff]
        %v2732 = vld [vmem:[%s37 + $0x70] sm:$0xff]
        %v2733 = vld [vmem:[%s37 + $0x78] sm:$0xff]
        %v2734 = vld [vmem:[%s35] sm:$0x1]
        %2736 = vset.pattern.permute.xlu0 0
        %2737 = vperm.xlu0 %2736, %v2718
        %v2738 = vpop.permute.xlu0 %2737
        %2741 = vset.pattern.permute.xlu0 0
        %2742 = vperm.xlu0 %2741, %v2719
        %v2743 = vpop.permute.xlu0 %2742
        %2746 = vset.pattern.permute.xlu0 0
        %2747 = vperm.xlu0 %2746, %v2720
        %v2748 = vpop.permute.xlu0 %2747
        %2751 = vset.pattern.permute.xlu0 0
        %2752 = vperm.xlu0 %2751, %v2721
        %v2753 = vpop.permute.xlu0 %2752
        %2756 = vset.pattern.permute.xlu0 0
        %2757 = vperm.xlu0 %2756, %v2722
        %v2758 = vpop.permute.xlu0 %2757
        %2761 = vset.pattern.permute.xlu0 0
        %2762 = vperm.xlu0 %2761, %v2723
        %v2763 = vpop.permute.xlu0 %2762
        %2766 = vset.pattern.permute.xlu0 0
        %2767 = vperm.xlu0 %2766, %v2724
        %v2768 = vpop.permute.xlu0 %2767
        %2771 = vset.pattern.permute.xlu0 0
        %2772 = vperm.xlu0 %2771, %v2725
        %v2773 = vpop.permute.xlu0 %2772
        %2776 = vset.pattern.permute.xlu0 0
        %2777 = vperm.xlu0 %2776, %v2726
        %v2778 = vpop.permute.xlu0 %2777
        %2781 = vset.pattern.permute.xlu0 0
        %2782 = vperm.xlu0 %2781, %v2727
        %v2783 = vpop.permute.xlu0 %2782
        %2786 = vset.pattern.permute.xlu0 0
        %2787 = vperm.xlu0 %2786, %v2728
        %v2788 = vpop.permute.xlu0 %2787
        %2791 = vset.pattern.permute.xlu0 0
        %2792 = vperm.xlu0 %2791, %v2729
        %v2793 = vpop.permute.xlu0 %2792
        %2796 = vset.pattern.permute.xlu0 0
        %2797 = vperm.xlu0 %2796, %v2730
        %v2798 = vpop.permute.xlu0 %2797
        %2801 = vset.pattern.permute.xlu0 0
        %2802 = vperm.xlu0 %2801, %v2731
        %v2803 = vpop.permute.xlu0 %2802
        %2806 = vset.pattern.permute.xlu0 0
        %2807 = vperm.xlu0 %2806, %v2732
        %v2808 = vpop.permute.xlu0 %2807
        %2811 = vset.pattern.permute.xlu0 0
        %2812 = vperm.xlu0 %2811, %v2733
        %v2813 = vpop.permute.xlu0 %2812
        %v2816 = vlaneseq
        %v2817 = vshrl.u32 %v2816, 7
        %v2818 = vsub.s32 0, %v2817
        %v2819 = vrot.slane %v2734, %v2818
        %v2821 = vmul.f32 %v2738, %v2819
        %v2822 = vmul.f32 %v2743, %v2819
        %v2823 = vmul.f32 %v2748, %v2819
        %v2824 = vmul.f32 %v2753, %v2819
        %v2825 = vmul.f32 %v2758, %v2819
        %v2826 = vmul.f32 %v2763, %v2819
        %v2827 = vmul.f32 %v2768, %v2819
        %v2828 = vmul.f32 %v2773, %v2819
        %v2829 = vmul.f32 %v2778, %v2819
        %v2830 = vmul.f32 %v2783, %v2819
        %v2831 = vmul.f32 %v2788, %v2819
        %v2832 = vmul.f32 %v2793, %v2819
        %v2833 = vmul.f32 %v2798, %v2819
        %v2834 = vmul.f32 %v2803, %v2819
        %v2835 = vmul.f32 %v2808, %v2819
        %v2836 = vmul.f32 %v2813, %v2819
        %v2837 = vmul.f32 %v2702, %v2821
        %v2838 = vmul.f32 %v2703, %v2822
        %v2839 = vmul.f32 %v2704, %v2823
        %v2840 = vmul.f32 %v2705, %v2824
        %v2841 = vmul.f32 %v2706, %v2825
        %v2842 = vmul.f32 %v2707, %v2826
        %v2843 = vmul.f32 %v2708, %v2827
        %v2844 = vmul.f32 %v2709, %v2828
        %v2845 = vmul.f32 %v2710, %v2829
        %v2846 = vmul.f32 %v2711, %v2830
        %v2847 = vmul.f32 %v2712, %v2831
        %v2848 = vmul.f32 %v2713, %v2832
        %v2849 = vmul.f32 %v2714, %v2833
        %v2850 = vmul.f32 %v2715, %v2834
        %v2851 = vmul.f32 %v2716, %v2835
        %v2852 = vmul.f32 %v2717, %v2836
        %v2853 = vadd.f32 %v2686, %v2837
        %v2854 = vadd.f32 %v2687, %v2838
        %v2855 = vadd.f32 %v2688, %v2839
        %v2856 = vadd.f32 %v2689, %v2840
        %v2857 = vadd.f32 %v2690, %v2841
        %v2858 = vadd.f32 %v2691, %v2842
        %v2859 = vadd.f32 %v2692, %v2843
        %v2860 = vadd.f32 %v2693, %v2844
        %v2861 = vadd.f32 %v2694, %v2845
        %v2862 = vadd.f32 %v2695, %v2846
        %v2863 = vadd.f32 %v2696, %v2847
        %v2864 = vadd.f32 %v2697, %v2848
        %v2865 = vadd.f32 %v2698, %v2849
        %v2866 = vadd.f32 %v2699, %v2850
        %v2867 = vadd.f32 %v2700, %v2851
        %v2868 = vadd.f32 %v2701, %v2852
        %v2869 = vld [vmem:[%s39] sm:$0x1]
        %v2870 = vld [vmem:[%s41] sm:$0x1]
        %v2871 = vld [vmem:[%s43] sm:$0x1]
        %v2872 = vmul.f32 %v2870, %v2871
        %v2873 = vadd.f32 %v2869, %v2872
        %v2875 = vlaneseq
        %v2876 = vshrl.u32 %v2875, 7
        %v2877 = vsub.s32 0, %v2876
        %v2878 = vrot.slane %v2873, %v2877
        %2880 = vmatprep.subr.mxu0 0.0
        %2881 = vmatpush1.xpose.msra.mxu0 %v2868
        %2882 = vmatprep.subr.mxu0 0.0
        %2883 = vmatpush1.xpose.msra.mxu0 %v2867
        %2884 = vmatprep.subr.mxu0 0.0
        %2885 = vmatpush1.xpose.msra.mxu0 %v2866
        %2886 = vmatprep.subr.mxu0 0.0
        %2887 = vmatpush1.xpose.msra.mxu0 %v2865
        %2888 = vmatprep.subr.mxu0 0.0
        %2889 = vmatpush1.xpose.msra.mxu0 %v2864
        %2890 = vmatprep.subr.mxu0 0.0
        %2891 = vmatpush1.xpose.msra.mxu0 %v2863
        %2892 = vmatprep.subr.mxu0 0.0
        %2893 = vmatpush1.xpose.msra.mxu0 %v2862
        %2894 = vmatprep.subr.mxu0 0.0
        %2895 = vmatpush1.xpose.msra.mxu0 %v2861
        %2896 = vmatprep.subr.mxu0 0.0
        %2897 = vmatpush1.xpose.msra.mxu0 %v2860
        %2898 = vmatprep.subr.mxu0 0.0
        %2899 = vmatpush1.xpose.msra.mxu0 %v2859
        %2900 = vmatprep.subr.mxu0 0.0
        %2901 = vmatpush1.xpose.msra.mxu0 %v2858
        %2902 = vmatprep.subr.mxu0 0.0
        %2903 = vmatpush1.xpose.msra.mxu0 %v2857
        %2904 = vmatprep.subr.mxu0 0.0
        %2905 = vmatpush1.xpose.msra.mxu0 %v2856
        %2906 = vmatprep.subr.mxu0 0.0
        %2907 = vmatpush1.xpose.msra.mxu0 %v2855
        %2908 = vmatprep.subr.mxu0 0.0
        %2909 = vmatpush1.xpose.msra.mxu0 %v2854
        %2910 = vmatprep.subr.mxu0 0.0
        %2911 = vmatpush1.xpose.msra.mxu0 %v2853
        %2912 = vmatprep.subr.mxu0 0.0
        %2913 = vmatpush2.xpose.msra.mxu0 0.0
        %2914 = vmatprep.subr.mxu0 0.0
        %2915 = vmatpush2.xpose.msra.mxu0 0.0
        %2916 = vmatprep.subr.mxu0 0.0
        %2917 = vmatpush2.xpose.msra.mxu0 0.0
        %2918 = vmatprep.subr.mxu0 0.0
        %2919 = vmatpush2.xpose.msra.mxu0 0.0
        %2920 = vmatprep.subr.mxu0 0.0
        %2921 = vmatpush2.xpose.msra.mxu0 0.0
        %2922 = vmatprep.subr.mxu0 0.0
        %2923 = vmatpush2.xpose.msra.mxu0 0.0
        %2924 = vmatprep.subr.mxu0 0.0
        %2925 = vmatpush2.xpose.msra.mxu0 0.0
        %2926 = vmatprep.subr.mxu0 0.0
        %2927 = vmatpush2.xpose.msra.mxu0 0.0
        %2928 = vmatprep.subr.mxu0 0.0
        %2929 = vmatpush2.xpose.msra.mxu0 0.0
        %2930 = vmatprep.subr.mxu0 0.0
        %2931 = vmatpush2.xpose.msra.mxu0 0.0
        %2932 = vmatprep.subr.mxu0 0.0
        %2933 = vmatpush2.xpose.msra.mxu0 0.0
        %2934 = vmatprep.subr.mxu0 0.0
        %2935 = vmatpush2.xpose.msra.mxu0 0.0
        %2936 = vmatprep.subr.mxu0 0.0
        %2937 = vmatpush2.xpose.msra.mxu0 0.0
        %2938 = vmatprep.subr.mxu0 0.0
        %2939 = vmatpush2.xpose.msra.mxu0 0.0
        %2940 = vmatprep.subr.mxu0 0.0
        %2941 = vmatpush2.xpose.msra.mxu0 0.0
        %2942 = vmatprep.subr.mxu0 0.0
        %2943 = vmatpush2.xpose.msra.mxu0 0.0
        %2944 = vmatprep.mubr.f32.mxu0 0.0
        %2945 = vmatmul.mubr.f32.gmra.mxu0 %v2682
        %v2946 = vpop.f32.mrf.mxu0
        %v2947 = vadd.f32 %v2878, %v2946
        %v2948 = vpop.f32.mrf.mxu0
        %2949 = vmatprep.mubr.f32.mxu0 0.0
        %2950 = vmatmul.mubr.f32.gmra.mxu0 %v2683
        %v2951 = vpop.f32.mrf.mxu0
        %v2952 = vadd.f32 %v2878, %v2951
        %v2953 = vpop.f32.mrf.mxu0
        %2954 = vmatprep.mubr.f32.mxu0 0.0
        %2955 = vmatmul.mubr.f32.gmra.mxu0 %v2684
        %v2956 = vpop.f32.mrf.mxu0
        %v2957 = vadd.f32 %v2878, %v2956
        %v2958 = vpop.f32.mrf.mxu0
        %2959 = vmatprep.mubr.f32.mxu0 0.0
        %2960 = vmatmul.mubr.f32.gmra.mxu0 %v2685
        %v2961 = vpop.f32.mrf.mxu0
        %v2962 = vadd.f32 %v2878, %v2961
        %v2963 = vpop.f32.mrf.mxu0
        %2964 = vdwg.mxu0
        %2965 = vadd.xlane.f32.xlu0 %v2947
        %v2966 = vpop.xlane.xlu0 %2965
        %2967 = vadd.xlane.f32.xlu0 %v2952
        %v2968 = vpop.xlane.xlu0 %2967
        %2969 = vadd.xlane.f32.xlu0 %v2957
        %v2970 = vpop.xlane.xlu0 %2969
        %2971 = vadd.xlane.f32.xlu0 %v2962
        %v2972 = vpop.xlane.xlu0 %2971
        %v2973 = vmul.f32 %v2966, %v2623
        %v2974 = vmul.f32 %v2968, %v2623
        %v2975 = vmul.f32 %v2970, %v2623
        %v2976 = vmul.f32 %v2972, %v2623
        %v2977 = vsub.f32 %v2947, %v2973
        %v2978 = vsub.f32 %v2952, %v2974
        %v2979 = vsub.f32 %v2957, %v2975
        %v2980 = vsub.f32 %v2962, %v2976
        %v2981 = vmul.f32 %v2977, %v2977
        %v2982 = vmul.f32 %v2978, %v2978
        %v2983 = vmul.f32 %v2979, %v2979
        %v2984 = vmul.f32 %v2980, %v2980
        %2985 = vadd.xlane.f32.xlu0 %v2981
        %v2986 = vpop.xlane.xlu0 %2985
        %2987 = vadd.xlane.f32.xlu0 %v2982
        %v2988 = vpop.xlane.xlu0 %2987
        %2989 = vadd.xlane.f32.xlu0 %v2983
        %v2990 = vpop.xlane.xlu0 %2989
        %2991 = vadd.xlane.f32.xlu0 %v2984
        %v2992 = vpop.xlane.xlu0 %2991
        %v2993 = vmul.f32 %v2986, %v2623
        %v2994 = vmul.f32 %v2988, %v2623
        %v2995 = vmul.f32 %v2990, %v2623
        %v2996 = vmul.f32 %v2992, %v2623
        %v2997 = vadd.f32 %v2993, 1e-05
        %v2998 = vadd.f32 %v2994, 1e-05
        %v2999 = vadd.f32 %v2995, 1e-05
        %v3000 = vadd.f32 %v2996, 1e-05
        %v3001 = vrsqrt.pop %v2997
        %v3002 = vrsqrt.pop %v2998
        %v3003 = vrsqrt.pop %v2999
        %v3004 = vrsqrt.pop %v3000
        %v3005 = vmul.f32 %v2977, %v3001
        %v3006 = vmul.f32 %v2978, %v3002
        %v3007 = vmul.f32 %v2979, %v3003
        %v3008 = vmul.f32 %v2980, %v3004
        %v3009 = vld [vmem:[#allocation7] sm:$0x1]
        %v3011 = vlaneseq
        %v3012 = vshrl.u32 %v3011, 7
        %v3013 = vsub.s32 0, %v3012
        %v3014 = vrot.slane %v3009, %v3013
        %v3016 = vmul.f32 %v3005, %v3014
        %v3017 = vmul.f32 %v3006, %v3014
        %v3018 = vmul.f32 %v3007, %v3014
        %v3019 = vmul.f32 %v3008, %v3014
        %v3020 = vld [vmem:[#allocation9] sm:$0x1]
        %v3022 = vlaneseq
        %v3023 = vshrl.u32 %v3022, 7
        %v3024 = vsub.s32 0, %v3023
        %v3025 = vrot.slane %v3020, %v3024
        %v3027 = vadd.f32 %v3016, %v3025
        %v3028 = vadd.f32 %v3017, %v3025
        %v3029 = vadd.f32 %v3018, %v3025
        %v3030 = vadd.f32 %v3019, %v3025
        %v3031 = vadd.f32 %v2332, %v3027
        %v3032 = vadd.f32 %v2333, %v3028
        %v3033 = vadd.f32 %v2334, %v3029
        %v3034 = vadd.f32 %v2335, %v3030
        %v3035 = vmax.f32 %v3031, 0.0
        %v3036 = vmax.f32 %v3032, 0.0
        %v3037 = vmax.f32 %v3033, 0.0
        %v3038 = vmax.f32 %v3034, 0.0
        %v3039 = vld [vmem:[%s45] sm:$0xff]
        %v3040 = vld [vmem:[%s45 + $0x8] sm:$0xff]
        %v3041 = vld [vmem:[%s45 + $0x10] sm:$0xff]
        %v3042 = vld [vmem:[%s45 + $0x18] sm:$0xff]
        %v3043 = vld [vmem:[%s45 + $0x20] sm:$0xff]
        %v3044 = vld [vmem:[%s45 + $0x28] sm:$0xff]
        %v3045 = vld [vmem:[%s45 + $0x30] sm:$0xff]
        %v3046 = vld [vmem:[%s45 + $0x38] sm:$0xff]
        %v3047 = vld [vmem:[%s45 + $0x40] sm:$0xff]
        %v3048 = vld [vmem:[%s45 + $0x48] sm:$0xff]
        %v3049 = vld [vmem:[%s45 + $0x50] sm:$0xff]
        %v3050 = vld [vmem:[%s45 + $0x58] sm:$0xff]
        %v3051 = vld [vmem:[%s45 + $0x60] sm:$0xff]
        %v3052 = vld [vmem:[%s45 + $0x68] sm:$0xff]
        %v3053 = vld [vmem:[%s45 + $0x70] sm:$0xff]
        %v3054 = vld [vmem:[%s45 + $0x78] sm:$0xff]
        %v3055 = vld [vmem:[%s47] sm:$0xff]
        %v3056 = vld [vmem:[%s47 + $0x8] sm:$0xff]
        %v3057 = vld [vmem:[%s47 + $0x10] sm:$0xff]
        %v3058 = vld [vmem:[%s47 + $0x18] sm:$0xff]
        %v3059 = vld [vmem:[%s47 + $0x20] sm:$0xff]
        %v3060 = vld [vmem:[%s47 + $0x28] sm:$0xff]
        %v3061 = vld [vmem:[%s47 + $0x30] sm:$0xff]
        %v3062 = vld [vmem:[%s47 + $0x38] sm:$0xff]
        %v3063 = vld [vmem:[%s47 + $0x40] sm:$0xff]
        %v3064 = vld [vmem:[%s47 + $0x48] sm:$0xff]
        %v3065 = vld [vmem:[%s47 + $0x50] sm:$0xff]
        %v3066 = vld [vmem:[%s47 + $0x58] sm:$0xff]
        %v3067 = vld [vmem:[%s47 + $0x60] sm:$0xff]
        %v3068 = vld [vmem:[%s47 + $0x68] sm:$0xff]
        %v3069 = vld [vmem:[%s47 + $0x70] sm:$0xff]
        %v3070 = vld [vmem:[%s47 + $0x78] sm:$0xff]
        %v3071 = vld [vmem:[%s51] sm:$0xff]
        %v3072 = vld [vmem:[%s51 + $0x8] sm:$0xff]
        %v3073 = vld [vmem:[%s51 + $0x10] sm:$0xff]
        %v3074 = vld [vmem:[%s51 + $0x18] sm:$0xff]
        %v3075 = vld [vmem:[%s51 + $0x20] sm:$0xff]
        %v3076 = vld [vmem:[%s51 + $0x28] sm:$0xff]
        %v3077 = vld [vmem:[%s51 + $0x30] sm:$0xff]
        %v3078 = vld [vmem:[%s51 + $0x38] sm:$0xff]
        %v3079 = vld [vmem:[%s51 + $0x40] sm:$0xff]
        %v3080 = vld [vmem:[%s51 + $0x48] sm:$0xff]
        %v3081 = vld [vmem:[%s51 + $0x50] sm:$0xff]
        %v3082 = vld [vmem:[%s51 + $0x58] sm:$0xff]
        %v3083 = vld [vmem:[%s51 + $0x60] sm:$0xff]
        %v3084 = vld [vmem:[%s51 + $0x68] sm:$0xff]
        %v3085 = vld [vmem:[%s51 + $0x70] sm:$0xff]
        %v3086 = vld [vmem:[%s51 + $0x78] sm:$0xff]
        %v3087 = vld [vmem:[%s49] sm:$0x1]
        %3089 = vset.pattern.permute.xlu0 0
        %3090 = vperm.xlu0 %3089, %v3071
        %v3091 = vpop.permute.xlu0 %3090
        %3094 = vset.pattern.permute.xlu0 0
        %3095 = vperm.xlu0 %3094, %v3072
        %v3096 = vpop.permute.xlu0 %3095
        %3099 = vset.pattern.permute.xlu0 0
        %3100 = vperm.xlu0 %3099, %v3073
        %v3101 = vpop.permute.xlu0 %3100
        %3104 = vset.pattern.permute.xlu0 0
        %3105 = vperm.xlu0 %3104, %v3074
        %v3106 = vpop.permute.xlu0 %3105
        %3109 = vset.pattern.permute.xlu0 0
        %3110 = vperm.xlu0 %3109, %v3075
        %v3111 = vpop.permute.xlu0 %3110
        %3114 = vset.pattern.permute.xlu0 0
        %3115 = vperm.xlu0 %3114, %v3076
        %v3116 = vpop.permute.xlu0 %3115
        %3119 = vset.pattern.permute.xlu0 0
        %3120 = vperm.xlu0 %3119, %v3077
        %v3121 = vpop.permute.xlu0 %3120
        %3124 = vset.pattern.permute.xlu0 0
        %3125 = vperm.xlu0 %3124, %v3078
        %v3126 = vpop.permute.xlu0 %3125
        %3129 = vset.pattern.permute.xlu0 0
        %3130 = vperm.xlu0 %3129, %v3079
        %v3131 = vpop.permute.xlu0 %3130
        %3134 = vset.pattern.permute.xlu0 0
        %3135 = vperm.xlu0 %3134, %v3080
        %v3136 = vpop.permute.xlu0 %3135
        %3139 = vset.pattern.permute.xlu0 0
        %3140 = vperm.xlu0 %3139, %v3081
        %v3141 = vpop.permute.xlu0 %3140
        %3144 = vset.pattern.permute.xlu0 0
        %3145 = vperm.xlu0 %3144, %v3082
        %v3146 = vpop.permute.xlu0 %3145
        %3149 = vset.pattern.permute.xlu0 0
        %3150 = vperm.xlu0 %3149, %v3083
        %v3151 = vpop.permute.xlu0 %3150
        %3154 = vset.pattern.permute.xlu0 0
        %3155 = vperm.xlu0 %3154, %v3084
        %v3156 = vpop.permute.xlu0 %3155
        %3159 = vset.pattern.permute.xlu0 0
        %3160 = vperm.xlu0 %3159, %v3085
        %v3161 = vpop.permute.xlu0 %3160
        %3164 = vset.pattern.permute.xlu0 0
        %3165 = vperm.xlu0 %3164, %v3086
        %v3166 = vpop.permute.xlu0 %3165
        %v3169 = vlaneseq
        %v3170 = vshrl.u32 %v3169, 7
        %v3171 = vsub.s32 0, %v3170
        %v3172 = vrot.slane %v3087, %v3171
        %v3174 = vmul.f32 %v3091, %v3172
        %v3175 = vmul.f32 %v3096, %v3172
        %v3176 = vmul.f32 %v3101, %v3172
        %v3177 = vmul.f32 %v3106, %v3172
        %v3178 = vmul.f32 %v3111, %v3172
        %v3179 = vmul.f32 %v3116, %v3172
        %v3180 = vmul.f32 %v3121, %v3172
        %v3181 = vmul.f32 %v3126, %v3172
        %v3182 = vmul.f32 %v3131, %v3172
        %v3183 = vmul.f32 %v3136, %v3172
        %v3184 = vmul.f32 %v3141, %v3172
        %v3185 = vmul.f32 %v3146, %v3172
        %v3186 = vmul.f32 %v3151, %v3172
        %v3187 = vmul.f32 %v3156, %v3172
        %v3188 = vmul.f32 %v3161, %v3172
        %v3189 = vmul.f32 %v3166, %v3172
        %v3190 = vmul.f32 %v3055, %v3174
        %v3191 = vmul.f32 %v3056, %v3175
        %v3192 = vmul.f32 %v3057, %v3176
        %v3193 = vmul.f32 %v3058, %v3177
        %v3194 = vmul.f32 %v3059, %v3178
        %v3195 = vmul.f32 %v3060, %v3179
        %v3196 = vmul.f32 %v3061, %v3180
        %v3197 = vmul.f32 %v3062, %v3181
        %v3198 = vmul.f32 %v3063, %v3182
        %v3199 = vmul.f32 %v3064, %v3183
        %v3200 = vmul.f32 %v3065, %v3184
        %v3201 = vmul.f32 %v3066, %v3185
        %v3202 = vmul.f32 %v3067, %v3186
        %v3203 = vmul.f32 %v3068, %v3187
        %v3204 = vmul.f32 %v3069, %v3188
        %v3205 = vmul.f32 %v3070, %v3189
        %v3206 = vadd.f32 %v3039, %v3190
        %v3207 = vadd.f32 %v3040, %v3191
        %v3208 = vadd.f32 %v3041, %v3192
        %v3209 = vadd.f32 %v3042, %v3193
        %v3210 = vadd.f32 %v3043, %v3194
        %v3211 = vadd.f32 %v3044, %v3195
        %v3212 = vadd.f32 %v3045, %v3196
        %v3213 = vadd.f32 %v3046, %v3197
        %v3214 = vadd.f32 %v3047, %v3198
        %v3215 = vadd.f32 %v3048, %v3199
        %v3216 = vadd.f32 %v3049, %v3200
        %v3217 = vadd.f32 %v3050, %v3201
        %v3218 = vadd.f32 %v3051, %v3202
        %v3219 = vadd.f32 %v3052, %v3203
        %v3220 = vadd.f32 %v3053, %v3204
        %v3221 = vadd.f32 %v3054, %v3205
        %v3222 = vld [vmem:[%s53] sm:$0x1]
        %v3223 = vld [vmem:[%s55] sm:$0x1]
        %v3224 = vld [vmem:[%s57] sm:$0x1]
        %v3225 = vmul.f32 %v3223, %v3224
        %v3226 = vadd.f32 %v3222, %v3225
        %v3228 = vlaneseq
        %v3229 = vshrl.u32 %v3228, 7
        %v3230 = vsub.s32 0, %v3229
        %v3231 = vrot.slane %v3226, %v3230
        %3233 = vmatprep.subr.mxu0 0.0
        %3234 = vmatpush1.xpose.msra.mxu0 %v3221
        %3235 = vmatprep.subr.mxu0 0.0
        %3236 = vmatpush1.xpose.msra.mxu0 %v3220
        %3237 = vmatprep.subr.mxu0 0.0
        %3238 = vmatpush1.xpose.msra.mxu0 %v3219
        %3239 = vmatprep.subr.mxu0 0.0
        %3240 = vmatpush1.xpose.msra.mxu0 %v3218
        %3241 = vmatprep.subr.mxu0 0.0
        %3242 = vmatpush1.xpose.msra.mxu0 %v3217
        %3243 = vmatprep.subr.mxu0 0.0
        %3244 = vmatpush1.xpose.msra.mxu0 %v3216
        %3245 = vmatprep.subr.mxu0 0.0
        %3246 = vmatpush1.xpose.msra.mxu0 %v3215
        %3247 = vmatprep.subr.mxu0 0.0
        %3248 = vmatpush1.xpose.msra.mxu0 %v3214
        %3249 = vmatprep.subr.mxu0 0.0
        %3250 = vmatpush1.xpose.msra.mxu0 %v3213
        %3251 = vmatprep.subr.mxu0 0.0
        %3252 = vmatpush1.xpose.msra.mxu0 %v3212
        %3253 = vmatprep.subr.mxu0 0.0
        %3254 = vmatpush1.xpose.msra.mxu0 %v3211
        %3255 = vmatprep.subr.mxu0 0.0
        %3256 = vmatpush1.xpose.msra.mxu0 %v3210
        %3257 = vmatprep.subr.mxu0 0.0
        %3258 = vmatpush1.xpose.msra.mxu0 %v3209
        %3259 = vmatprep.subr.mxu0 0.0
        %3260 = vmatpush1.xpose.msra.mxu0 %v3208
        %3261 = vmatprep.subr.mxu0 0.0
        %3262 = vmatpush1.xpose.msra.mxu0 %v3207
        %3263 = vmatprep.subr.mxu0 0.0
        %3264 = vmatpush1.xpose.msra.mxu0 %v3206
        %3265 = vmatprep.subr.mxu0 0.0
        %3266 = vmatpush2.xpose.msra.mxu0 0.0
        %3267 = vmatprep.subr.mxu0 0.0
        %3268 = vmatpush2.xpose.msra.mxu0 0.0
        %3269 = vmatprep.subr.mxu0 0.0
        %3270 = vmatpush2.xpose.msra.mxu0 0.0
        %3271 = vmatprep.subr.mxu0 0.0
        %3272 = vmatpush2.xpose.msra.mxu0 0.0
        %3273 = vmatprep.subr.mxu0 0.0
        %3274 = vmatpush2.xpose.msra.mxu0 0.0
        %3275 = vmatprep.subr.mxu0 0.0
        %3276 = vmatpush2.xpose.msra.mxu0 0.0
        %3277 = vmatprep.subr.mxu0 0.0
        %3278 = vmatpush2.xpose.msra.mxu0 0.0
        %3279 = vmatprep.subr.mxu0 0.0
        %3280 = vmatpush2.xpose.msra.mxu0 0.0
        %3281 = vmatprep.subr.mxu0 0.0
        %3282 = vmatpush2.xpose.msra.mxu0 0.0
        %3283 = vmatprep.subr.mxu0 0.0
        %3284 = vmatpush2.xpose.msra.mxu0 0.0
        %3285 = vmatprep.subr.mxu0 0.0
        %3286 = vmatpush2.xpose.msra.mxu0 0.0
        %3287 = vmatprep.subr.mxu0 0.0
        %3288 = vmatpush2.xpose.msra.mxu0 0.0
        %3289 = vmatprep.subr.mxu0 0.0
        %3290 = vmatpush2.xpose.msra.mxu0 0.0
        %3291 = vmatprep.subr.mxu0 0.0
        %3292 = vmatpush2.xpose.msra.mxu0 0.0
        %3293 = vmatprep.subr.mxu0 0.0
        %3294 = vmatpush2.xpose.msra.mxu0 0.0
        %3295 = vmatprep.subr.mxu0 0.0
        %3296 = vmatpush2.xpose.msra.mxu0 0.0
        %3297 = vmatprep.mubr.f32.mxu0 0.0
        %3298 = vmatmul.mubr.f32.gmra.mxu0 %v3035
        %v3299 = vpop.f32.mrf.mxu0
        %v3300 = vadd.f32 %v3231, %v3299
        %v3301 = vpop.f32.mrf.mxu0
        %3302 = vmatprep.mubr.f32.mxu0 0.0
        %3303 = vmatmul.mubr.f32.gmra.mxu0 %v3036
        %v3304 = vpop.f32.mrf.mxu0
        %v3305 = vadd.f32 %v3231, %v3304
        %v3306 = vpop.f32.mrf.mxu0
        %3307 = vmatprep.mubr.f32.mxu0 0.0
        %3308 = vmatmul.mubr.f32.gmra.mxu0 %v3037
        %v3309 = vpop.f32.mrf.mxu0
        %v3310 = vadd.f32 %v3231, %v3309
        %v3311 = vpop.f32.mrf.mxu0
        %3312 = vmatprep.mubr.f32.mxu0 0.0
        %3313 = vmatmul.mubr.f32.gmra.mxu0 %v3038
        %v3314 = vpop.f32.mrf.mxu0
        %v3315 = vadd.f32 %v3231, %v3314
        %v3316 = vpop.f32.mrf.mxu0
        %3317 = vdwg.mxu0
        %3318 = vadd.xlane.f32.xlu0 %v3300
        %v3319 = vpop.xlane.xlu0 %3318
        %3320 = vadd.xlane.f32.xlu0 %v3305
        %v3321 = vpop.xlane.xlu0 %3320
        %3322 = vadd.xlane.f32.xlu0 %v3310
        %v3323 = vpop.xlane.xlu0 %3322
        %3324 = vadd.xlane.f32.xlu0 %v3315
        %v3325 = vpop.xlane.xlu0 %3324
        %v3326 = vmul.f32 %v3319, %v2623
        %v3327 = vmul.f32 %v3321, %v2623
        %v3328 = vmul.f32 %v3323, %v2623
        %v3329 = vmul.f32 %v3325, %v2623
        %v3330 = vsub.f32 %v3300, %v3326
        %v3331 = vsub.f32 %v3305, %v3327
        %v3332 = vsub.f32 %v3310, %v3328
        %v3333 = vsub.f32 %v3315, %v3329
        %v3334 = vmul.f32 %v3330, %v3330
        %v3335 = vmul.f32 %v3331, %v3331
        %v3336 = vmul.f32 %v3332, %v3332
        %v3337 = vmul.f32 %v3333, %v3333
        %3338 = vadd.xlane.f32.xlu0 %v3334
        %v3339 = vpop.xlane.xlu0 %3338
        %3340 = vadd.xlane.f32.xlu0 %v3335
        %v3341 = vpop.xlane.xlu0 %3340
        %3342 = vadd.xlane.f32.xlu0 %v3336
        %v3343 = vpop.xlane.xlu0 %3342
        %3344 = vadd.xlane.f32.xlu0 %v3337
        %v3345 = vpop.xlane.xlu0 %3344
        %v3346 = vmul.f32 %v3339, %v2623
        %v3347 = vmul.f32 %v3341, %v2623
        %v3348 = vmul.f32 %v3343, %v2623
        %v3349 = vmul.f32 %v3345, %v2623
        %v3350 = vadd.f32 %v3346, 1e-05
        %v3351 = vadd.f32 %v3347, 1e-05
        %v3352 = vadd.f32 %v3348, 1e-05
        %v3353 = vadd.f32 %v3349, 1e-05
        %v3354 = vrsqrt.pop %v3350
        %v3355 = vrsqrt.pop %v3351
        %v3356 = vrsqrt.pop %v3352
        %v3357 = vrsqrt.pop %v3353
        %v3358 = vmul.f32 %v3330, %v3354
        %v3359 = vmul.f32 %v3331, %v3355
        %v3360 = vmul.f32 %v3332, %v3356
        %v3361 = vmul.f32 %v3333, %v3357
        %v3362 = vld [vmem:[#allocation10] sm:$0x1]
        %v3364 = vlaneseq
        %v3365 = vshrl.u32 %v3364, 7
        %v3366 = vsub.s32 0, %v3365
        %v3367 = vrot.slane %v3362, %v3366
        %v3369 = vmul.f32 %v3358, %v3367
        %v3370 = vmul.f32 %v3359, %v3367
        %v3371 = vmul.f32 %v3360, %v3367
        %v3372 = vmul.f32 %v3361, %v3367
        %v3373 = vld [vmem:[#allocation12] sm:$0x1]
        %v3375 = vlaneseq
        %v3376 = vshrl.u32 %v3375, 7
        %v3377 = vsub.s32 0, %v3376
        %v3378 = vrot.slane %v3373, %v3377
        %v3380 = vadd.f32 %v3369, %v3378
        %v3381 = vadd.f32 %v3370, %v3378
        %v3382 = vadd.f32 %v3371, %v3378
        %v3383 = vadd.f32 %v3372, %v3378
        %v3384 = vmax.f32 %v3380, 0.0
        %v3385 = vmax.f32 %v3381, 0.0
        %v3386 = vmax.f32 %v3382, 0.0
        %v3387 = vmax.f32 %v3383, 0.0
        %v3388 = vld [vmem:[%s59] sm:$0xff]
        %v3389 = vld [vmem:[%s59 + $0x8] sm:$0xff]
        %v3390 = vld [vmem:[%s59 + $0x10] sm:$0xff]
        %v3391 = vld [vmem:[%s59 + $0x18] sm:$0xff]
        %v3392 = vld [vmem:[%s59 + $0x20] sm:$0xff]
        %v3393 = vld [vmem:[%s59 + $0x28] sm:$0xff]
        %v3394 = vld [vmem:[%s59 + $0x30] sm:$0xff]
        %v3395 = vld [vmem:[%s59 + $0x38] sm:$0xff]
        %v3396 = vld [vmem:[%s59 + $0x40] sm:$0xff]
        %v3397 = vld [vmem:[%s59 + $0x48] sm:$0xff]
        %v3398 = vld [vmem:[%s59 + $0x50] sm:$0xff]
        %v3399 = vld [vmem:[%s59 + $0x58] sm:$0xff]
        %v3400 = vld [vmem:[%s59 + $0x60] sm:$0xff]
        %v3401 = vld [vmem:[%s59 + $0x68] sm:$0xff]
        %v3402 = vld [vmem:[%s59 + $0x70] sm:$0xff]
        %v3403 = vld [vmem:[%s59 + $0x78] sm:$0xff]
        %v3404 = vld [vmem:[%s61] sm:$0xff]
        %v3405 = vld [vmem:[%s61 + $0x8] sm:$0xff]
        %v3406 = vld [vmem:[%s61 + $0x10] sm:$0xff]
        %v3407 = vld [vmem:[%s61 + $0x18] sm:$0xff]
        %v3408 = vld [vmem:[%s61 + $0x20] sm:$0xff]
        %v3409 = vld [vmem:[%s61 + $0x28] sm:$0xff]
        %v3410 = vld [vmem:[%s61 + $0x30] sm:$0xff]
        %v3411 = vld [vmem:[%s61 + $0x38] sm:$0xff]
        %v3412 = vld [vmem:[%s61 + $0x40] sm:$0xff]
        %v3413 = vld [vmem:[%s61 + $0x48] sm:$0xff]
        %v3414 = vld [vmem:[%s61 + $0x50] sm:$0xff]
        %v3415 = vld [vmem:[%s61 + $0x58] sm:$0xff]
        %v3416 = vld [vmem:[%s61 + $0x60] sm:$0xff]
        %v3417 = vld [vmem:[%s61 + $0x68] sm:$0xff]
        %v3418 = vld [vmem:[%s61 + $0x70] sm:$0xff]
        %v3419 = vld [vmem:[%s61 + $0x78] sm:$0xff]
        %v3420 = vld [vmem:[%s65] sm:$0xff]
        %v3421 = vld [vmem:[%s65 + $0x8] sm:$0xff]
        %v3422 = vld [vmem:[%s65 + $0x10] sm:$0xff]
        %v3423 = vld [vmem:[%s65 + $0x18] sm:$0xff]
        %v3424 = vld [vmem:[%s65 + $0x20] sm:$0xff]
        %v3425 = vld [vmem:[%s65 + $0x28] sm:$0xff]
        %v3426 = vld [vmem:[%s65 + $0x30] sm:$0xff]
        %v3427 = vld [vmem:[%s65 + $0x38] sm:$0xff]
        %v3428 = vld [vmem:[%s65 + $0x40] sm:$0xff]
        %v3429 = vld [vmem:[%s65 + $0x48] sm:$0xff]
        %v3430 = vld [vmem:[%s65 + $0x50] sm:$0xff]
        %v3431 = vld [vmem:[%s65 + $0x58] sm:$0xff]
        %v3432 = vld [vmem:[%s65 + $0x60] sm:$0xff]
        %v3433 = vld [vmem:[%s65 + $0x68] sm:$0xff]
        %v3434 = vld [vmem:[%s65 + $0x70] sm:$0xff]
        %v3435 = vld [vmem:[%s65 + $0x78] sm:$0xff]
        %v3436 = vld [vmem:[%s63] sm:$0x1]
        %3438 = vset.pattern.permute.xlu0 0
        %3439 = vperm.xlu0 %3438, %v3420
        %v3440 = vpop.permute.xlu0 %3439
        %3443 = vset.pattern.permute.xlu0 0
        %3444 = vperm.xlu0 %3443, %v3421
        %v3445 = vpop.permute.xlu0 %3444
        %3448 = vset.pattern.permute.xlu0 0
        %3449 = vperm.xlu0 %3448, %v3422
        %v3450 = vpop.permute.xlu0 %3449
        %3453 = vset.pattern.permute.xlu0 0
        %3454 = vperm.xlu0 %3453, %v3423
        %v3455 = vpop.permute.xlu0 %3454
        %3458 = vset.pattern.permute.xlu0 0
        %3459 = vperm.xlu0 %3458, %v3424
        %v3460 = vpop.permute.xlu0 %3459
        %3463 = vset.pattern.permute.xlu0 0
        %3464 = vperm.xlu0 %3463, %v3425
        %v3465 = vpop.permute.xlu0 %3464
        %3468 = vset.pattern.permute.xlu0 0
        %3469 = vperm.xlu0 %3468, %v3426
        %v3470 = vpop.permute.xlu0 %3469
        %3473 = vset.pattern.permute.xlu0 0
        %3474 = vperm.xlu0 %3473, %v3427
        %v3475 = vpop.permute.xlu0 %3474
        %3478 = vset.pattern.permute.xlu0 0
        %3479 = vperm.xlu0 %3478, %v3428
        %v3480 = vpop.permute.xlu0 %3479
        %3483 = vset.pattern.permute.xlu0 0
        %3484 = vperm.xlu0 %3483, %v3429
        %v3485 = vpop.permute.xlu0 %3484
        %3488 = vset.pattern.permute.xlu0 0
        %3489 = vperm.xlu0 %3488, %v3430
        %v3490 = vpop.permute.xlu0 %3489
        %3493 = vset.pattern.permute.xlu0 0
        %3494 = vperm.xlu0 %3493, %v3431
        %v3495 = vpop.permute.xlu0 %3494
        %3498 = vset.pattern.permute.xlu0 0
        %3499 = vperm.xlu0 %3498, %v3432
        %v3500 = vpop.permute.xlu0 %3499
        %3503 = vset.pattern.permute.xlu0 0
        %3504 = vperm.xlu0 %3503, %v3433
        %v3505 = vpop.permute.xlu0 %3504
        %3508 = vset.pattern.permute.xlu0 0
        %3509 = vperm.xlu0 %3508, %v3434
        %v3510 = vpop.permute.xlu0 %3509
        %3513 = vset.pattern.permute.xlu0 0
        %3514 = vperm.xlu0 %3513, %v3435
        %v3515 = vpop.permute.xlu0 %3514
        %v3518 = vlaneseq
        %v3519 = vshrl.u32 %v3518, 7
        %v3520 = vsub.s32 0, %v3519
        %v3521 = vrot.slane %v3436, %v3520
        %v3523 = vmul.f32 %v3440, %v3521
        %v3524 = vmul.f32 %v3445, %v3521
        %v3525 = vmul.f32 %v3450, %v3521
        %v3526 = vmul.f32 %v3455, %v3521
        %v3527 = vmul.f32 %v3460, %v3521
        %v3528 = vmul.f32 %v3465, %v3521
        %v3529 = vmul.f32 %v3470, %v3521
        %v3530 = vmul.f32 %v3475, %v3521
        %v3531 = vmul.f32 %v3480, %v3521
        %v3532 = vmul.f32 %v3485, %v3521
        %v3533 = vmul.f32 %v3490, %v3521
        %v3534 = vmul.f32 %v3495, %v3521
        %v3535 = vmul.f32 %v3500, %v3521
        %v3536 = vmul.f32 %v3505, %v3521
        %v3537 = vmul.f32 %v3510, %v3521
        %v3538 = vmul.f32 %v3515, %v3521
        %v3539 = vmul.f32 %v3404, %v3523
        %v3540 = vmul.f32 %v3405, %v3524
        %v3541 = vmul.f32 %v3406, %v3525
        %v3542 = vmul.f32 %v3407, %v3526
        %v3543 = vmul.f32 %v3408, %v3527
        %v3544 = vmul.f32 %v3409, %v3528
        %v3545 = vmul.f32 %v3410, %v3529
        %v3546 = vmul.f32 %v3411, %v3530
        %v3547 = vmul.f32 %v3412, %v3531
        %v3548 = vmul.f32 %v3413, %v3532
        %v3549 = vmul.f32 %v3414, %v3533
        %v3550 = vmul.f32 %v3415, %v3534
        %v3551 = vmul.f32 %v3416, %v3535
        %v3552 = vmul.f32 %v3417, %v3536
        %v3553 = vmul.f32 %v3418, %v3537
        %v3554 = vmul.f32 %v3419, %v3538
        %v3555 = vadd.f32 %v3388, %v3539
        %v3556 = vadd.f32 %v3389, %v3540
        %v3557 = vadd.f32 %v3390, %v3541
        %v3558 = vadd.f32 %v3391, %v3542
        %v3559 = vadd.f32 %v3392, %v3543
        %v3560 = vadd.f32 %v3393, %v3544
        %v3561 = vadd.f32 %v3394, %v3545
        %v3562 = vadd.f32 %v3395, %v3546
        %v3563 = vadd.f32 %v3396, %v3547
        %v3564 = vadd.f32 %v3397, %v3548
        %v3565 = vadd.f32 %v3398, %v3549
        %v3566 = vadd.f32 %v3399, %v3550
        %v3567 = vadd.f32 %v3400, %v3551
        %v3568 = vadd.f32 %v3401, %v3552
        %v3569 = vadd.f32 %v3402, %v3553
        %v3570 = vadd.f32 %v3403, %v3554
        %v3571 = vld [vmem:[%s67] sm:$0x1]
        %v3572 = vld [vmem:[%s69] sm:$0x1]
        %v3573 = vld [vmem:[%s71] sm:$0x1]
        %v3574 = vmul.f32 %v3572, %v3573
        %v3575 = vadd.f32 %v3571, %v3574
        %v3577 = vlaneseq
        %v3578 = vshrl.u32 %v3577, 7
        %v3579 = vsub.s32 0, %v3578
        %v3580 = vrot.slane %v3575, %v3579
        %3582 = vmatprep.subr.mxu0 0.0
        %3583 = vmatpush1.xpose.msra.mxu0 %v3570
        %3584 = vmatprep.subr.mxu0 0.0
        %3585 = vmatpush1.xpose.msra.mxu0 %v3569
        %3586 = vmatprep.subr.mxu0 0.0
        %3587 = vmatpush1.xpose.msra.mxu0 %v3568
        %3588 = vmatprep.subr.mxu0 0.0
        %3589 = vmatpush1.xpose.msra.mxu0 %v3567
        %3590 = vmatprep.subr.mxu0 0.0
        %3591 = vmatpush1.xpose.msra.mxu0 %v3566
        %3592 = vmatprep.subr.mxu0 0.0
        %3593 = vmatpush1.xpose.msra.mxu0 %v3565
        %3594 = vmatprep.subr.mxu0 0.0
        %3595 = vmatpush1.xpose.msra.mxu0 %v3564
        %3596 = vmatprep.subr.mxu0 0.0
        %3597 = vmatpush1.xpose.msra.mxu0 %v3563
        %3598 = vmatprep.subr.mxu0 0.0
        %3599 = vmatpush1.xpose.msra.mxu0 %v3562
        %3600 = vmatprep.subr.mxu0 0.0
        %3601 = vmatpush1.xpose.msra.mxu0 %v3561
        %3602 = vmatprep.subr.mxu0 0.0
        %3603 = vmatpush1.xpose.msra.mxu0 %v3560
        %3604 = vmatprep.subr.mxu0 0.0
        %3605 = vmatpush1.xpose.msra.mxu0 %v3559
        %3606 = vmatprep.subr.mxu0 0.0
        %3607 = vmatpush1.xpose.msra.mxu0 %v3558
        %3608 = vmatprep.subr.mxu0 0.0
        %3609 = vmatpush1.xpose.msra.mxu0 %v3557
        %3610 = vmatprep.subr.mxu0 0.0
        %3611 = vmatpush1.xpose.msra.mxu0 %v3556
        %3612 = vmatprep.subr.mxu0 0.0
        %3613 = vmatpush1.xpose.msra.mxu0 %v3555
        %3614 = vmatprep.subr.mxu0 0.0
        %3615 = vmatpush2.xpose.msra.mxu0 0.0
        %3616 = vmatprep.subr.mxu0 0.0
        %3617 = vmatpush2.xpose.msra.mxu0 0.0
        %3618 = vmatprep.subr.mxu0 0.0
        %3619 = vmatpush2.xpose.msra.mxu0 0.0
        %3620 = vmatprep.subr.mxu0 0.0
        %3621 = vmatpush2.xpose.msra.mxu0 0.0
        %3622 = vmatprep.subr.mxu0 0.0
        %3623 = vmatpush2.xpose.msra.mxu0 0.0
        %3624 = vmatprep.subr.mxu0 0.0
        %3625 = vmatpush2.xpose.msra.mxu0 0.0
        %3626 = vmatprep.subr.mxu0 0.0
        %3627 = vmatpush2.xpose.msra.mxu0 0.0
        %3628 = vmatprep.subr.mxu0 0.0
        %3629 = vmatpush2.xpose.msra.mxu0 0.0
        %3630 = vmatprep.subr.mxu0 0.0
        %3631 = vmatpush2.xpose.msra.mxu0 0.0
        %3632 = vmatprep.subr.mxu0 0.0
        %3633 = vmatpush2.xpose.msra.mxu0 0.0
        %3634 = vmatprep.subr.mxu0 0.0
        %3635 = vmatpush2.xpose.msra.mxu0 0.0
        %3636 = vmatprep.subr.mxu0 0.0
        %3637 = vmatpush2.xpose.msra.mxu0 0.0
        %3638 = vmatprep.subr.mxu0 0.0
        %3639 = vmatpush2.xpose.msra.mxu0 0.0
        %3640 = vmatprep.subr.mxu0 0.0
        %3641 = vmatpush2.xpose.msra.mxu0 0.0
        %3642 = vmatprep.subr.mxu0 0.0
        %3643 = vmatpush2.xpose.msra.mxu0 0.0
        %3644 = vmatprep.subr.mxu0 0.0
        %3645 = vmatpush2.xpose.msra.mxu0 0.0
        %3646 = vmatprep.mubr.f32.mxu0 0.0
        %3647 = vmatmul.mubr.f32.gmra.mxu0 %v3384
        %v3648 = vpop.f32.mrf.mxu0
        %v3649 = vadd.f32 %v3580, %v3648
        %v3650 = vpop.f32.mrf.mxu0
        %3651 = vmatprep.mubr.f32.mxu0 0.0
        %3652 = vmatmul.mubr.f32.gmra.mxu0 %v3385
        %v3653 = vpop.f32.mrf.mxu0
        %v3654 = vadd.f32 %v3580, %v3653
        %v3655 = vpop.f32.mrf.mxu0
        %3656 = vmatprep.mubr.f32.mxu0 0.0
        %3657 = vmatmul.mubr.f32.gmra.mxu0 %v3386
        %v3658 = vpop.f32.mrf.mxu0
        %v3659 = vadd.f32 %v3580, %v3658
        %v3660 = vpop.f32.mrf.mxu0
        %3661 = vmatprep.mubr.f32.mxu0 0.0
        %3662 = vmatmul.mubr.f32.gmra.mxu0 %v3387
        %v3663 = vpop.f32.mrf.mxu0
        %v3664 = vadd.f32 %v3580, %v3663
        %v3665 = vpop.f32.mrf.mxu0
        %3666 = vdwg.mxu0
        %3667 = vadd.xlane.f32.xlu0 %v3649
        %v3668 = vpop.xlane.xlu0 %3667
        %3669 = vadd.xlane.f32.xlu0 %v3654
        %v3670 = vpop.xlane.xlu0 %3669
        %3671 = vadd.xlane.f32.xlu0 %v3659
        %v3672 = vpop.xlane.xlu0 %3671
        %3673 = vadd.xlane.f32.xlu0 %v3664
        %v3674 = vpop.xlane.xlu0 %3673
        %v3675 = vmul.f32 %v3668, %v2623
        %v3676 = vmul.f32 %v3670, %v2623
        %v3677 = vmul.f32 %v3672, %v2623
        %v3678 = vmul.f32 %v3674, %v2623
        %v3679 = vsub.f32 %v3649, %v3675
        %v3680 = vsub.f32 %v3654, %v3676
        %v3681 = vsub.f32 %v3659, %v3677
        %v3682 = vsub.f32 %v3664, %v3678
        %v3683 = vmul.f32 %v3679, %v3679
        %v3684 = vmul.f32 %v3680, %v3680
        %v3685 = vmul.f32 %v3681, %v3681
        %v3686 = vmul.f32 %v3682, %v3682
        %3687 = vadd.xlane.f32.xlu0 %v3683
        %v3688 = vpop.xlane.xlu0 %3687
        %3689 = vadd.xlane.f32.xlu0 %v3684
        %v3690 = vpop.xlane.xlu0 %3689
        %3691 = vadd.xlane.f32.xlu0 %v3685
        %v3692 = vpop.xlane.xlu0 %3691
        %3693 = vadd.xlane.f32.xlu0 %v3686
        %v3694 = vpop.xlane.xlu0 %3693
        %v3695 = vmul.f32 %v3688, %v2623
        %v3696 = vmul.f32 %v3690, %v2623
        %v3697 = vmul.f32 %v3692, %v2623
        %v3698 = vmul.f32 %v3694, %v2623
        %v3699 = vadd.f32 %v3695, 1e-05
        %v3700 = vadd.f32 %v3696, 1e-05
        %v3701 = vadd.f32 %v3697, 1e-05
        %v3702 = vadd.f32 %v3698, 1e-05
        %v3703 = vrsqrt.pop %v3699
        %v3704 = vrsqrt.pop %v3700
        %v3705 = vrsqrt.pop %v3701
        %v3706 = vrsqrt.pop %v3702
        %v3707 = vmul.f32 %v3679, %v3703
        %v3708 = vmul.f32 %v3680, %v3704
        %v3709 = vmul.f32 %v3681, %v3705
        %v3710 = vmul.f32 %v3682, %v3706
        %v3711 = vld [vmem:[#allocation13] sm:$0x1]
        %v3713 = vlaneseq
        %v3714 = vshrl.u32 %v3713, 7
        %v3715 = vsub.s32 0, %v3714
        %v3716 = vrot.slane %v3711, %v3715
        %v3718 = vmul.f32 %v3707, %v3716
        %v3719 = vmul.f32 %v3708, %v3716
        %v3720 = vmul.f32 %v3709, %v3716
        %v3721 = vmul.f32 %v3710, %v3716
        %v3722 = vld [vmem:[#allocation15] sm:$0x1]
        %v3724 = vlaneseq
        %v3725 = vshrl.u32 %v3724, 7
        %v3726 = vsub.s32 0, %v3725
        %v3727 = vrot.slane %v3722, %v3726
        %v3729 = vadd.f32 %v3718, %v3727
        %v3730 = vadd.f32 %v3719, %v3727
        %v3731 = vadd.f32 %v3720, %v3727
        %v3732 = vadd.f32 %v3721, %v3727
        %v3733 = vadd.f32 %v3035, %v3729
        %v3734 = vadd.f32 %v3036, %v3730
        %v3735 = vadd.f32 %v3037, %v3731
        %v3736 = vadd.f32 %v3038, %v3732
        %v3737 = vmax.f32 %v3733, 0.0
        %v3738 = vmax.f32 %v3734, 0.0
        %v3739 = vmax.f32 %v3735, 0.0
        %v3740 = vmax.f32 %v3736, 0.0
        %v3741 = vld [vmem:[%s73] sm:$0xff]
        %v3742 = vld [vmem:[%s73 + $0x8] sm:$0xff]
        %v3743 = vld [vmem:[%s73 + $0x10] sm:$0xff]
        %v3744 = vld [vmem:[%s73 + $0x18] sm:$0xff]
        %v3745 = vld [vmem:[%s73 + $0x20] sm:$0xff]
        %v3746 = vld [vmem:[%s73 + $0x28] sm:$0xff]
        %v3747 = vld [vmem:[%s73 + $0x30] sm:$0xff]
        %v3748 = vld [vmem:[%s73 + $0x38] sm:$0xff]
        %v3749 = vld [vmem:[%s73 + $0x40] sm:$0xff]
        %v3750 = vld [vmem:[%s73 + $0x48] sm:$0xff]
        %v3751 = vld [vmem:[%s73 + $0x50] sm:$0xff]
        %v3752 = vld [vmem:[%s73 + $0x58] sm:$0xff]
        %v3753 = vld [vmem:[%s73 + $0x60] sm:$0xff]
        %v3754 = vld [vmem:[%s73 + $0x68] sm:$0xff]
        %v3755 = vld [vmem:[%s73 + $0x70] sm:$0xff]
        %v3756 = vld [vmem:[%s73 + $0x78] sm:$0xff]
        %v3757 = vld [vmem:[%s75] sm:$0xff]
        %v3758 = vld [vmem:[%s75 + $0x8] sm:$0xff]
        %v3759 = vld [vmem:[%s75 + $0x10] sm:$0xff]
        %v3760 = vld [vmem:[%s75 + $0x18] sm:$0xff]
        %v3761 = vld [vmem:[%s75 + $0x20] sm:$0xff]
        %v3762 = vld [vmem:[%s75 + $0x28] sm:$0xff]
        %v3763 = vld [vmem:[%s75 + $0x30] sm:$0xff]
        %v3764 = vld [vmem:[%s75 + $0x38] sm:$0xff]
        %v3765 = vld [vmem:[%s75 + $0x40] sm:$0xff]
        %v3766 = vld [vmem:[%s75 + $0x48] sm:$0xff]
        %v3767 = vld [vmem:[%s75 + $0x50] sm:$0xff]
        %v3768 = vld [vmem:[%s75 + $0x58] sm:$0xff]
        %v3769 = vld [vmem:[%s75 + $0x60] sm:$0xff]
        %v3770 = vld [vmem:[%s75 + $0x68] sm:$0xff]
        %v3771 = vld [vmem:[%s75 + $0x70] sm:$0xff]
        %v3772 = vld [vmem:[%s75 + $0x78] sm:$0xff]
        %v3773 = vld [vmem:[%s79] sm:$0xff]
        %v3774 = vld [vmem:[%s79 + $0x8] sm:$0xff]
        %v3775 = vld [vmem:[%s79 + $0x10] sm:$0xff]
        %v3776 = vld [vmem:[%s79 + $0x18] sm:$0xff]
        %v3777 = vld [vmem:[%s79 + $0x20] sm:$0xff]
        %v3778 = vld [vmem:[%s79 + $0x28] sm:$0xff]
        %v3779 = vld [vmem:[%s79 + $0x30] sm:$0xff]
        %v3780 = vld [vmem:[%s79 + $0x38] sm:$0xff]
        %v3781 = vld [vmem:[%s79 + $0x40] sm:$0xff]
        %v3782 = vld [vmem:[%s79 + $0x48] sm:$0xff]
        %v3783 = vld [vmem:[%s79 + $0x50] sm:$0xff]
        %v3784 = vld [vmem:[%s79 + $0x58] sm:$0xff]
        %v3785 = vld [vmem:[%s79 + $0x60] sm:$0xff]
        %v3786 = vld [vmem:[%s79 + $0x68] sm:$0xff]
        %v3787 = vld [vmem:[%s79 + $0x70] sm:$0xff]
        %v3788 = vld [vmem:[%s79 + $0x78] sm:$0xff]
        %v3789 = vld [vmem:[%s77] sm:$0x1]
        %3791 = vset.pattern.permute.xlu0 0
        %3792 = vperm.xlu0 %3791, %v3773
        %v3793 = vpop.permute.xlu0 %3792
        %3796 = vset.pattern.permute.xlu0 0
        %3797 = vperm.xlu0 %3796, %v3774
        %v3798 = vpop.permute.xlu0 %3797
        %3801 = vset.pattern.permute.xlu0 0
        %3802 = vperm.xlu0 %3801, %v3775
        %v3803 = vpop.permute.xlu0 %3802
        %3806 = vset.pattern.permute.xlu0 0
        %3807 = vperm.xlu0 %3806, %v3776
        %v3808 = vpop.permute.xlu0 %3807
        %3811 = vset.pattern.permute.xlu0 0
        %3812 = vperm.xlu0 %3811, %v3777
        %v3813 = vpop.permute.xlu0 %3812
        %3816 = vset.pattern.permute.xlu0 0
        %3817 = vperm.xlu0 %3816, %v3778
        %v3818 = vpop.permute.xlu0 %3817
        %3821 = vset.pattern.permute.xlu0 0
        %3822 = vperm.xlu0 %3821, %v3779
        %v3823 = vpop.permute.xlu0 %3822
        %3826 = vset.pattern.permute.xlu0 0
        %3827 = vperm.xlu0 %3826, %v3780
        %v3828 = vpop.permute.xlu0 %3827
        %3831 = vset.pattern.permute.xlu0 0
        %3832 = vperm.xlu0 %3831, %v3781
        %v3833 = vpop.permute.xlu0 %3832
        %3836 = vset.pattern.permute.xlu0 0
        %3837 = vperm.xlu0 %3836, %v3782
        %v3838 = vpop.permute.xlu0 %3837
        %3841 = vset.pattern.permute.xlu0 0
        %3842 = vperm.xlu0 %3841, %v3783
        %v3843 = vpop.permute.xlu0 %3842
        %3846 = vset.pattern.permute.xlu0 0
        %3847 = vperm.xlu0 %3846, %v3784
        %v3848 = vpop.permute.xlu0 %3847
        %3851 = vset.pattern.permute.xlu0 0
        %3852 = vperm.xlu0 %3851, %v3785
        %v3853 = vpop.permute.xlu0 %3852
        %3856 = vset.pattern.permute.xlu0 0
        %3857 = vperm.xlu0 %3856, %v3786
        %v3858 = vpop.permute.xlu0 %3857
        %3861 = vset.pattern.permute.xlu0 0
        %3862 = vperm.xlu0 %3861, %v3787
        %v3863 = vpop.permute.xlu0 %3862
        %3866 = vset.pattern.permute.xlu0 0
        %3867 = vperm.xlu0 %3866, %v3788
        %v3868 = vpop.permute.xlu0 %3867
        %v3871 = vlaneseq
        %v3872 = vshrl.u32 %v3871, 7
        %v3873 = vsub.s32 0, %v3872
        %v3874 = vrot.slane %v3789, %v3873
        %v3876 = vmul.f32 %v3793, %v3874
        %v3877 = vmul.f32 %v3798, %v3874
        %v3878 = vmul.f32 %v3803, %v3874
        %v3879 = vmul.f32 %v3808, %v3874
        %v3880 = vmul.f32 %v3813, %v3874
        %v3881 = vmul.f32 %v3818, %v3874
        %v3882 = vmul.f32 %v3823, %v3874
        %v3883 = vmul.f32 %v3828, %v3874
        %v3884 = vmul.f32 %v3833, %v3874
        %v3885 = vmul.f32 %v3838, %v3874
        %v3886 = vmul.f32 %v3843, %v3874
        %v3887 = vmul.f32 %v3848, %v3874
        %v3888 = vmul.f32 %v3853, %v3874
        %v3889 = vmul.f32 %v3858, %v3874
        %v3890 = vmul.f32 %v3863, %v3874
        %v3891 = vmul.f32 %v3868, %v3874
        %v3892 = vmul.f32 %v3757, %v3876
        %v3893 = vmul.f32 %v3758, %v3877
        %v3894 = vmul.f32 %v3759, %v3878
        %v3895 = vmul.f32 %v3760, %v3879
        %v3896 = vmul.f32 %v3761, %v3880
        %v3897 = vmul.f32 %v3762, %v3881
        %v3898 = vmul.f32 %v3763, %v3882
        %v3899 = vmul.f32 %v3764, %v3883
        %v3900 = vmul.f32 %v3765, %v3884
        %v3901 = vmul.f32 %v3766, %v3885
        %v3902 = vmul.f32 %v3767, %v3886
        %v3903 = vmul.f32 %v3768, %v3887
        %v3904 = vmul.f32 %v3769, %v3888
        %v3905 = vmul.f32 %v3770, %v3889
        %v3906 = vmul.f32 %v3771, %v3890
        %v3907 = vmul.f32 %v3772, %v3891
        %v3908 = vadd.f32 %v3741, %v3892
        %v3909 = vadd.f32 %v3742, %v3893
        %v3910 = vadd.f32 %v3743, %v3894
        %v3911 = vadd.f32 %v3744, %v3895
        %v3912 = vadd.f32 %v3745, %v3896
        %v3913 = vadd.f32 %v3746, %v3897
        %v3914 = vadd.f32 %v3747, %v3898
        %v3915 = vadd.f32 %v3748, %v3899
        %v3916 = vadd.f32 %v3749, %v3900
        %v3917 = vadd.f32 %v3750, %v3901
        %v3918 = vadd.f32 %v3751, %v3902
        %v3919 = vadd.f32 %v3752, %v3903
        %v3920 = vadd.f32 %v3753, %v3904
        %v3921 = vadd.f32 %v3754, %v3905
        %v3922 = vadd.f32 %v3755, %v3906
        %v3923 = vadd.f32 %v3756, %v3907
        %v3924 = vld [vmem:[%s81] sm:$0x1]
        %v3925 = vld [vmem:[%s83] sm:$0x1]
        %v3926 = vld [vmem:[%s85] sm:$0x1]
        %v3927 = vmul.f32 %v3925, %v3926
        %v3928 = vadd.f32 %v3924, %v3927
        %v3930 = vlaneseq
        %v3931 = vshrl.u32 %v3930, 7
        %v3932 = vsub.s32 0, %v3931
        %v3933 = vrot.slane %v3928, %v3932
        %3935 = vmatprep.subr.mxu0 0.0
        %3936 = vmatpush1.xpose.msra.mxu0 %v3923
        %3937 = vmatprep.subr.mxu0 0.0
        %3938 = vmatpush1.xpose.msra.mxu0 %v3922
        %3939 = vmatprep.subr.mxu0 0.0
        %3940 = vmatpush1.xpose.msra.mxu0 %v3921
        %3941 = vmatprep.subr.mxu0 0.0
        %3942 = vmatpush1.xpose.msra.mxu0 %v3920
        %3943 = vmatprep.subr.mxu0 0.0
        %3944 = vmatpush1.xpose.msra.mxu0 %v3919
        %3945 = vmatprep.subr.mxu0 0.0
        %3946 = vmatpush1.xpose.msra.mxu0 %v3918
        %3947 = vmatprep.subr.mxu0 0.0
        %3948 = vmatpush1.xpose.msra.mxu0 %v3917
        %3949 = vmatprep.subr.mxu0 0.0
        %3950 = vmatpush1.xpose.msra.mxu0 %v3916
        %3951 = vmatprep.subr.mxu0 0.0
        %3952 = vmatpush1.xpose.msra.mxu0 %v3915
        %3953 = vmatprep.subr.mxu0 0.0
        %3954 = vmatpush1.xpose.msra.mxu0 %v3914
        %3955 = vmatprep.subr.mxu0 0.0
        %3956 = vmatpush1.xpose.msra.mxu0 %v3913
        %3957 = vmatprep.subr.mxu0 0.0
        %3958 = vmatpush1.xpose.msra.mxu0 %v3912
        %3959 = vmatprep.subr.mxu0 0.0
        %3960 = vmatpush1.xpose.msra.mxu0 %v3911
        %3961 = vmatprep.subr.mxu0 0.0
        %3962 = vmatpush1.xpose.msra.mxu0 %v3910
        %3963 = vmatprep.subr.mxu0 0.0
        %3964 = vmatpush1.xpose.msra.mxu0 %v3909
        %3965 = vmatprep.subr.mxu0 0.0
        %3966 = vmatpush1.xpose.msra.mxu0 %v3908
        %3967 = vmatprep.subr.mxu0 0.0
        %3968 = vmatpush2.xpose.msra.mxu0 0.0
        %3969 = vmatprep.subr.mxu0 0.0
        %3970 = vmatpush2.xpose.msra.mxu0 0.0
        %3971 = vmatprep.subr.mxu0 0.0
        %3972 = vmatpush2.xpose.msra.mxu0 0.0
        %3973 = vmatprep.subr.mxu0 0.0
        %3974 = vmatpush2.xpose.msra.mxu0 0.0
        %3975 = vmatprep.subr.mxu0 0.0
        %3976 = vmatpush2.xpose.msra.mxu0 0.0
        %3977 = vmatprep.subr.mxu0 0.0
        %3978 = vmatpush2.xpose.msra.mxu0 0.0
        %3979 = vmatprep.subr.mxu0 0.0
        %3980 = vmatpush2.xpose.msra.mxu0 0.0
        %3981 = vmatprep.subr.mxu0 0.0
        %3982 = vmatpush2.xpose.msra.mxu0 0.0
        %3983 = vmatprep.subr.mxu0 0.0
        %3984 = vmatpush2.xpose.msra.mxu0 0.0
        %3985 = vmatprep.subr.mxu0 0.0
        %3986 = vmatpush2.xpose.msra.mxu0 0.0
        %3987 = vmatprep.subr.mxu0 0.0
        %3988 = vmatpush2.xpose.msra.mxu0 0.0
        %3989 = vmatprep.subr.mxu0 0.0
        %3990 = vmatpush2.xpose.msra.mxu0 0.0
        %3991 = vmatprep.subr.mxu0 0.0
        %3992 = vmatpush2.xpose.msra.mxu0 0.0
        %3993 = vmatprep.subr.mxu0 0.0
        %3994 = vmatpush2.xpose.msra.mxu0 0.0
        %3995 = vmatprep.subr.mxu0 0.0
        %3996 = vmatpush2.xpose.msra.mxu0 0.0
        %3997 = vmatprep.subr.mxu0 0.0
        %3998 = vmatpush2.xpose.msra.mxu0 0.0
        %3999 = vmatprep.mubr.f32.mxu0 0.0
        %4000 = vmatmul.mubr.f32.gmra.mxu0 %v3737
        %v4001 = vpop.f32.mrf.mxu0
        %v4002 = vadd.f32 %v3933, %v4001
        %v4003 = vpop.f32.mrf.mxu0
        %4004 = vmatprep.mubr.f32.mxu0 0.0
        %4005 = vmatmul.mubr.f32.gmra.mxu0 %v3738
        %v4006 = vpop.f32.mrf.mxu0
        %v4007 = vadd.f32 %v3933, %v4006
        %v4008 = vpop.f32.mrf.mxu0
        %4009 = vmatprep.mubr.f32.mxu0 0.0
        %4010 = vmatmul.mubr.f32.gmra.mxu0 %v3739
        %v4011 = vpop.f32.mrf.mxu0
        %v4012 = vadd.f32 %v3933, %v4011
        %v4013 = vpop.f32.mrf.mxu0
        %4014 = vmatprep.mubr.f32.mxu0 0.0
        %4015 = vmatmul.mubr.f32.gmra.mxu0 %v3740
        %v4016 = vpop.f32.mrf.mxu0
        %v4017 = vadd.f32 %v3933, %v4016
        %v4018 = vpop.f32.mrf.mxu0
        %4019 = vdwg.mxu0
        %4020 = vadd.xlane.f32.xlu0 %v4002
        %v4021 = vpop.xlane.xlu0 %4020
        %4022 = vadd.xlane.f32.xlu0 %v4007
        %v4023 = vpop.xlane.xlu0 %4022
        %4024 = vadd.xlane.f32.xlu0 %v4012
        %v4025 = vpop.xlane.xlu0 %4024
        %4026 = vadd.xlane.f32.xlu0 %v4017
        %v4027 = vpop.xlane.xlu0 %4026
        %v4028 = vmul.f32 %v4021, %v2623
        %v4029 = vmul.f32 %v4023, %v2623
        %v4030 = vmul.f32 %v4025, %v2623
        %v4031 = vmul.f32 %v4027, %v2623
        %v4032 = vsub.f32 %v4002, %v4028
        %v4033 = vsub.f32 %v4007, %v4029
        %v4034 = vsub.f32 %v4012, %v4030
        %v4035 = vsub.f32 %v4017, %v4031
        %v4036 = vmul.f32 %v4032, %v4032
        %v4037 = vmul.f32 %v4033, %v4033
        %v4038 = vmul.f32 %v4034, %v4034
        %v4039 = vmul.f32 %v4035, %v4035
        %4040 = vadd.xlane.f32.xlu0 %v4036
        %v4041 = vpop.xlane.xlu0 %4040
        %4042 = vadd.xlane.f32.xlu0 %v4037
        %v4043 = vpop.xlane.xlu0 %4042
        %4044 = vadd.xlane.f32.xlu0 %v4038
        %v4045 = vpop.xlane.xlu0 %4044
        %4046 = vadd.xlane.f32.xlu0 %v4039
        %v4047 = vpop.xlane.xlu0 %4046
        %v4048 = vmul.f32 %v4041, %v2623
        %v4049 = vmul.f32 %v4043, %v2623
        %v4050 = vmul.f32 %v4045, %v2623
        %v4051 = vmul.f32 %v4047, %v2623
        %v4052 = vadd.f32 %v4048, 1e-05
        %v4053 = vadd.f32 %v4049, 1e-05
        %v4054 = vadd.f32 %v4050, 1e-05
        %v4055 = vadd.f32 %v4051, 1e-05
        %v4056 = vrsqrt.pop %v4052
        %v4057 = vrsqrt.pop %v4053
        %v4058 = vrsqrt.pop %v4054
        %v4059 = vrsqrt.pop %v4055
        %v4060 = vmul.f32 %v4032, %v4056
        %v4061 = vmul.f32 %v4033, %v4057
        %v4062 = vmul.f32 %v4034, %v4058
        %v4063 = vmul.f32 %v4035, %v4059
        %v4064 = vld [vmem:[#allocation16] sm:$0x1]
        %v4066 = vlaneseq
        %v4067 = vshrl.u32 %v4066, 7
        %v4068 = vsub.s32 0, %v4067
        %v4069 = vrot.slane %v4064, %v4068
        %v4071 = vmul.f32 %v4060, %v4069
        %v4072 = vmul.f32 %v4061, %v4069
        %v4073 = vmul.f32 %v4062, %v4069
        %v4074 = vmul.f32 %v4063, %v4069
        %v4075 = vld [vmem:[#allocation18] sm:$0x1]
        %v4077 = vlaneseq
        %v4078 = vshrl.u32 %v4077, 7
        %v4079 = vsub.s32 0, %v4078
        %v4080 = vrot.slane %v4075, %v4079
        %v4082 = vadd.f32 %v4071, %v4080
        %v4083 = vadd.f32 %v4072, %v4080
        %v4084 = vadd.f32 %v4073, %v4080
        %v4085 = vadd.f32 %v4074, %v4080
        %v4086 = vmax.f32 %v4082, 0.0
        %v4087 = vmax.f32 %v4083, 0.0
        %v4088 = vmax.f32 %v4084, 0.0
        %v4089 = vmax.f32 %v4085, 0.0
        %v4090 = vld [vmem:[%s87] sm:$0xff]
        %v4091 = vld [vmem:[%s87 + $0x8] sm:$0xff]
        %v4092 = vld [vmem:[%s87 + $0x10] sm:$0xff]
        %v4093 = vld [vmem:[%s87 + $0x18] sm:$0xff]
        %v4094 = vld [vmem:[%s87 + $0x20] sm:$0xff]
        %v4095 = vld [vmem:[%s87 + $0x28] sm:$0xff]
        %v4096 = vld [vmem:[%s87 + $0x30] sm:$0xff]
        %v4097 = vld [vmem:[%s87 + $0x38] sm:$0xff]
        %v4098 = vld [vmem:[%s87 + $0x40] sm:$0xff]
        %v4099 = vld [vmem:[%s87 + $0x48] sm:$0xff]
        %v4100 = vld [vmem:[%s87 + $0x50] sm:$0xff]
        %v4101 = vld [vmem:[%s87 + $0x58] sm:$0xff]
        %v4102 = vld [vmem:[%s87 + $0x60] sm:$0xff]
        %v4103 = vld [vmem:[%s87 + $0x68] sm:$0xff]
        %v4104 = vld [vmem:[%s87 + $0x70] sm:$0xff]
        %v4105 = vld [vmem:[%s87 + $0x78] sm:$0xff]
        %v4106 = vld [vmem:[%s89] sm:$0xff]
        %v4107 = vld [vmem:[%s89 + $0x8] sm:$0xff]
        %v4108 = vld [vmem:[%s89 + $0x10] sm:$0xff]
        %v4109 = vld [vmem:[%s89 + $0x18] sm:$0xff]
        %v4110 = vld [vmem:[%s89 + $0x20] sm:$0xff]
        %v4111 = vld [vmem:[%s89 + $0x28] sm:$0xff]
        %v4112 = vld [vmem:[%s89 + $0x30] sm:$0xff]
        %v4113 = vld [vmem:[%s89 + $0x38] sm:$0xff]
        %v4114 = vld [vmem:[%s89 + $0x40] sm:$0xff]
        %v4115 = vld [vmem:[%s89 + $0x48] sm:$0xff]
        %v4116 = vld [vmem:[%s89 + $0x50] sm:$0xff]
        %v4117 = vld [vmem:[%s89 + $0x58] sm:$0xff]
        %v4118 = vld [vmem:[%s89 + $0x60] sm:$0xff]
        %v4119 = vld [vmem:[%s89 + $0x68] sm:$0xff]
        %v4120 = vld [vmem:[%s89 + $0x70] sm:$0xff]
        %v4121 = vld [vmem:[%s89 + $0x78] sm:$0xff]
        %v4122 = vld [vmem:[%s93] sm:$0xff]
        %v4123 = vld [vmem:[%s93 + $0x8] sm:$0xff]
        %v4124 = vld [vmem:[%s93 + $0x10] sm:$0xff]
        %v4125 = vld [vmem:[%s93 + $0x18] sm:$0xff]
        %v4126 = vld [vmem:[%s93 + $0x20] sm:$0xff]
        %v4127 = vld [vmem:[%s93 + $0x28] sm:$0xff]
        %v4128 = vld [vmem:[%s93 + $0x30] sm:$0xff]
        %v4129 = vld [vmem:[%s93 + $0x38] sm:$0xff]
        %v4130 = vld [vmem:[%s93 + $0x40] sm:$0xff]
        %v4131 = vld [vmem:[%s93 + $0x48] sm:$0xff]
        %v4132 = vld [vmem:[%s93 + $0x50] sm:$0xff]
        %v4133 = vld [vmem:[%s93 + $0x58] sm:$0xff]
        %v4134 = vld [vmem:[%s93 + $0x60] sm:$0xff]
        %v4135 = vld [vmem:[%s93 + $0x68] sm:$0xff]
        %v4136 = vld [vmem:[%s93 + $0x70] sm:$0xff]
        %v4137 = vld [vmem:[%s93 + $0x78] sm:$0xff]
        %v4138 = vld [vmem:[%s91] sm:$0x1]
        %4140 = vset.pattern.permute.xlu0 0
        %4141 = vperm.xlu0 %4140, %v4122
        %v4142 = vpop.permute.xlu0 %4141
        %4145 = vset.pattern.permute.xlu0 0
        %4146 = vperm.xlu0 %4145, %v4123
        %v4147 = vpop.permute.xlu0 %4146
        %4150 = vset.pattern.permute.xlu0 0
        %4151 = vperm.xlu0 %4150, %v4124
        %v4152 = vpop.permute.xlu0 %4151
        %4155 = vset.pattern.permute.xlu0 0
        %4156 = vperm.xlu0 %4155, %v4125
        %v4157 = vpop.permute.xlu0 %4156
        %4160 = vset.pattern.permute.xlu0 0
        %4161 = vperm.xlu0 %4160, %v4126
        %v4162 = vpop.permute.xlu0 %4161
        %4165 = vset.pattern.permute.xlu0 0
        %4166 = vperm.xlu0 %4165, %v4127
        %v4167 = vpop.permute.xlu0 %4166
        %4170 = vset.pattern.permute.xlu0 0
        %4171 = vperm.xlu0 %4170, %v4128
        %v4172 = vpop.permute.xlu0 %4171
        %4175 = vset.pattern.permute.xlu0 0
        %4176 = vperm.xlu0 %4175, %v4129
        %v4177 = vpop.permute.xlu0 %4176
        %4180 = vset.pattern.permute.xlu0 0
        %4181 = vperm.xlu0 %4180, %v4130
        %v4182 = vpop.permute.xlu0 %4181
        %4185 = vset.pattern.permute.xlu0 0
        %4186 = vperm.xlu0 %4185, %v4131
        %v4187 = vpop.permute.xlu0 %4186
        %4190 = vset.pattern.permute.xlu0 0
        %4191 = vperm.xlu0 %4190, %v4132
        %v4192 = vpop.permute.xlu0 %4191
        %4195 = vset.pattern.permute.xlu0 0
        %4196 = vperm.xlu0 %4195, %v4133
        %v4197 = vpop.permute.xlu0 %4196
        %4200 = vset.pattern.permute.xlu0 0
        %4201 = vperm.xlu0 %4200, %v4134
        %v4202 = vpop.permute.xlu0 %4201
        %4205 = vset.pattern.permute.xlu0 0
        %4206 = vperm.xlu0 %4205, %v4135
        %v4207 = vpop.permute.xlu0 %4206
        %4210 = vset.pattern.permute.xlu0 0
        %4211 = vperm.xlu0 %4210, %v4136
        %v4212 = vpop.permute.xlu0 %4211
        %4215 = vset.pattern.permute.xlu0 0
        %4216 = vperm.xlu0 %4215, %v4137
        %v4217 = vpop.permute.xlu0 %4216
        %v4220 = vlaneseq
        %v4221 = vshrl.u32 %v4220, 7
        %v4222 = vsub.s32 0, %v4221
        %v4223 = vrot.slane %v4138, %v4222
        %v4225 = vmul.f32 %v4142, %v4223
        %v4226 = vmul.f32 %v4147, %v4223
        %v4227 = vmul.f32 %v4152, %v4223
        %v4228 = vmul.f32 %v4157, %v4223
        %v4229 = vmul.f32 %v4162, %v4223
        %v4230 = vmul.f32 %v4167, %v4223
        %v4231 = vmul.f32 %v4172, %v4223
        %v4232 = vmul.f32 %v4177, %v4223
        %v4233 = vmul.f32 %v4182, %v4223
        %v4234 = vmul.f32 %v4187, %v4223
        %v4235 = vmul.f32 %v4192, %v4223
        %v4236 = vmul.f32 %v4197, %v4223
        %v4237 = vmul.f32 %v4202, %v4223
        %v4238 = vmul.f32 %v4207, %v4223
        %v4239 = vmul.f32 %v4212, %v4223
        %v4240 = vmul.f32 %v4217, %v4223
        %v4241 = vmul.f32 %v4106, %v4225
        %v4242 = vmul.f32 %v4107, %v4226
        %v4243 = vmul.f32 %v4108, %v4227
        %v4244 = vmul.f32 %v4109, %v4228
        %v4245 = vmul.f32 %v4110, %v4229
        %v4246 = vmul.f32 %v4111, %v4230
        %v4247 = vmul.f32 %v4112, %v4231
        %v4248 = vmul.f32 %v4113, %v4232
        %v4249 = vmul.f32 %v4114, %v4233
        %v4250 = vmul.f32 %v4115, %v4234
        %v4251 = vmul.f32 %v4116, %v4235
        %v4252 = vmul.f32 %v4117, %v4236
        %v4253 = vmul.f32 %v4118, %v4237
        %v4254 = vmul.f32 %v4119, %v4238
        %v4255 = vmul.f32 %v4120, %v4239
        %v4256 = vmul.f32 %v4121, %v4240
        %v4257 = vadd.f32 %v4090, %v4241
        %v4258 = vadd.f32 %v4091, %v4242
        %v4259 = vadd.f32 %v4092, %v4243
        %v4260 = vadd.f32 %v4093, %v4244
        %v4261 = vadd.f32 %v4094, %v4245
        %v4262 = vadd.f32 %v4095, %v4246
        %v4263 = vadd.f32 %v4096, %v4247
        %v4264 = vadd.f32 %v4097, %v4248
        %v4265 = vadd.f32 %v4098, %v4249
        %v4266 = vadd.f32 %v4099, %v4250
        %v4267 = vadd.f32 %v4100, %v4251
        %v4268 = vadd.f32 %v4101, %v4252
        %v4269 = vadd.f32 %v4102, %v4253
        %v4270 = vadd.f32 %v4103, %v4254
        %v4271 = vadd.f32 %v4104, %v4255
        %v4272 = vadd.f32 %v4105, %v4256
        %v4273 = vld [vmem:[%s95] sm:$0x1]
        %v4274 = vld [vmem:[#allocation2] sm:$0x1]
        %v4275 = vld [vmem:[%s99] sm:$0x1]
        %v4276 = vmul.f32 %v4274, %v4275
        %v4277 = vadd.f32 %v4273, %v4276
        %v4279 = vlaneseq
        %v4280 = vshrl.u32 %v4279, 7
        %v4281 = vsub.s32 0, %v4280
        %v4282 = vrot.slane %v4277, %v4281
        %4284 = vmatprep.subr.mxu0 0.0
        %4285 = vmatpush1.xpose.msra.mxu0 %v4272
        %4286 = vmatprep.subr.mxu0 0.0
        %4287 = vmatpush1.xpose.msra.mxu0 %v4271
        %4288 = vmatprep.subr.mxu0 0.0
        %4289 = vmatpush1.xpose.msra.mxu0 %v4270
        %4290 = vmatprep.subr.mxu0 0.0
        %4291 = vmatpush1.xpose.msra.mxu0 %v4269
        %4292 = vmatprep.subr.mxu0 0.0
        %4293 = vmatpush1.xpose.msra.mxu0 %v4268
        %4294 = vmatprep.subr.mxu0 0.0
        %4295 = vmatpush1.xpose.msra.mxu0 %v4267
        %4296 = vmatprep.subr.mxu0 0.0
        %4297 = vmatpush1.xpose.msra.mxu0 %v4266
        %4298 = vmatprep.subr.mxu0 0.0
        %4299 = vmatpush1.xpose.msra.mxu0 %v4265
        %4300 = vmatprep.subr.mxu0 0.0
        %4301 = vmatpush1.xpose.msra.mxu0 %v4264
        %4302 = vmatprep.subr.mxu0 0.0
        %4303 = vmatpush1.xpose.msra.mxu0 %v4263
        %4304 = vmatprep.subr.mxu0 0.0
        %4305 = vmatpush1.xpose.msra.mxu0 %v4262
        %4306 = vmatprep.subr.mxu0 0.0
        %4307 = vmatpush1.xpose.msra.mxu0 %v4261
        %4308 = vmatprep.subr.mxu0 0.0
        %4309 = vmatpush1.xpose.msra.mxu0 %v4260
        %4310 = vmatprep.subr.mxu0 0.0
        %4311 = vmatpush1.xpose.msra.mxu0 %v4259
        %4312 = vmatprep.subr.mxu0 0.0
        %4313 = vmatpush1.xpose.msra.mxu0 %v4258
        %4314 = vmatprep.subr.mxu0 0.0
        %4315 = vmatpush1.xpose.msra.mxu0 %v4257
        %4316 = vmatprep.subr.mxu0 0.0
        %4317 = vmatpush2.xpose.msra.mxu0 0.0
        %4318 = vmatprep.subr.mxu0 0.0
        %4319 = vmatpush2.xpose.msra.mxu0 0.0
        %4320 = vmatprep.subr.mxu0 0.0
        %4321 = vmatpush2.xpose.msra.mxu0 0.0
        %4322 = vmatprep.subr.mxu0 0.0
        %4323 = vmatpush2.xpose.msra.mxu0 0.0
        %4324 = vmatprep.subr.mxu0 0.0
        %4325 = vmatpush2.xpose.msra.mxu0 0.0
        %4326 = vmatprep.subr.mxu0 0.0
        %4327 = vmatpush2.xpose.msra.mxu0 0.0
        %4328 = vmatprep.subr.mxu0 0.0
        %4329 = vmatpush2.xpose.msra.mxu0 0.0
        %4330 = vmatprep.subr.mxu0 0.0
        %4331 = vmatpush2.xpose.msra.mxu0 0.0
        %4332 = vmatprep.subr.mxu0 0.0
        %4333 = vmatpush2.xpose.msra.mxu0 0.0
        %4334 = vmatprep.subr.mxu0 0.0
        %4335 = vmatpush2.xpose.msra.mxu0 0.0
        %4336 = vmatprep.subr.mxu0 0.0
        %4337 = vmatpush2.xpose.msra.mxu0 0.0
        %4338 = vmatprep.subr.mxu0 0.0
        %4339 = vmatpush2.xpose.msra.mxu0 0.0
        %4340 = vmatprep.subr.mxu0 0.0
        %4341 = vmatpush2.xpose.msra.mxu0 0.0
        %4342 = vmatprep.subr.mxu0 0.0
        %4343 = vmatpush2.xpose.msra.mxu0 0.0
        %4344 = vmatprep.subr.mxu0 0.0
        %4345 = vmatpush2.xpose.msra.mxu0 0.0
        %4346 = vmatprep.subr.mxu0 0.0
        %4347 = vmatpush2.xpose.msra.mxu0 0.0
        %4348 = vmatprep.mubr.f32.mxu0 0.0
        %4349 = vmatmul.mubr.f32.gmra.mxu0 %v4086
        %v4350 = vpop.f32.mrf.mxu0
        %v4351 = vadd.f32 %v4282, %v4350
        %v4352 = vpop.f32.mrf.mxu0
        %4353 = vmatprep.mubr.f32.mxu0 0.0
        %4354 = vmatmul.mubr.f32.gmra.mxu0 %v4087
        %v4355 = vpop.f32.mrf.mxu0
        %v4356 = vadd.f32 %v4282, %v4355
        %v4357 = vpop.f32.mrf.mxu0
        %4358 = vmatprep.mubr.f32.mxu0 0.0
        %4359 = vmatmul.mubr.f32.gmra.mxu0 %v4088
        %v4360 = vpop.f32.mrf.mxu0
        %v4361 = vadd.f32 %v4282, %v4360
        %v4362 = vpop.f32.mrf.mxu0
        %4363 = vmatprep.mubr.f32.mxu0 0.0
        %4364 = vmatmul.mubr.f32.gmra.mxu0 %v4089
        %v4365 = vpop.f32.mrf.mxu0
        %v4366 = vadd.f32 %v4282, %v4365
        %v4367 = vpop.f32.mrf.mxu0
        %4368 = vdwg.mxu0
        %4369 = vadd.xlane.f32.xlu0 %v4351
        %v4370 = vpop.xlane.xlu0 %4369
        %4371 = vadd.xlane.f32.xlu0 %v4356
        %v4372 = vpop.xlane.xlu0 %4371
        %4373 = vadd.xlane.f32.xlu0 %v4361
        %v4374 = vpop.xlane.xlu0 %4373
        %4375 = vadd.xlane.f32.xlu0 %v4366
        %v4376 = vpop.xlane.xlu0 %4375
        %v4377 = vmul.f32 %v4370, %v2623
        %v4378 = vmul.f32 %v4372, %v2623
        %v4379 = vmul.f32 %v4374, %v2623
        %v4380 = vmul.f32 %v4376, %v2623
        %v4381 = vsub.f32 %v4351, %v4377
        %v4382 = vsub.f32 %v4356, %v4378
        %v4383 = vsub.f32 %v4361, %v4379
        %v4384 = vsub.f32 %v4366, %v4380
        %v4385 = vmul.f32 %v4381, %v4381
        %v4386 = vmul.f32 %v4382, %v4382
        %v4387 = vmul.f32 %v4383, %v4383
        %v4388 = vmul.f32 %v4384, %v4384
        %4389 = vadd.xlane.f32.xlu0 %v4385
        %v4390 = vpop.xlane.xlu0 %4389
        %4391 = vadd.xlane.f32.xlu0 %v4386
        %v4392 = vpop.xlane.xlu0 %4391
        %4393 = vadd.xlane.f32.xlu0 %v4387
        %v4394 = vpop.xlane.xlu0 %4393
        %4395 = vadd.xlane.f32.xlu0 %v4388
        %v4396 = vpop.xlane.xlu0 %4395
        %v4397 = vmul.f32 %v4390, %v2623
        %v4398 = vmul.f32 %v4392, %v2623
        %v4399 = vmul.f32 %v4394, %v2623
        %v4400 = vmul.f32 %v4396, %v2623
        %v4401 = vadd.f32 %v4397, 1e-05
        %v4402 = vadd.f32 %v4398, 1e-05
        %v4403 = vadd.f32 %v4399, 1e-05
        %v4404 = vadd.f32 %v4400, 1e-05
        %v4405 = vrsqrt.pop %v4401
        %v4406 = vrsqrt.pop %v4402
        %v4407 = vrsqrt.pop %v4403
        %v4408 = vrsqrt.pop %v4404
        %v4409 = vmul.f32 %v4381, %v4405
        %v4410 = vmul.f32 %v4382, %v4406
        %v4411 = vmul.f32 %v4383, %v4407
        %v4412 = vmul.f32 %v4384, %v4408
        %v4413 = vld [vmem:[#allocation19] sm:$0x1]
        %v4415 = vlaneseq
        %v4416 = vshrl.u32 %v4415, 7
        %v4417 = vsub.s32 0, %v4416
        %v4418 = vrot.slane %v4413, %v4417
        %v4420 = vmul.f32 %v4409, %v4418
        %v4421 = vmul.f32 %v4410, %v4418
        %v4422 = vmul.f32 %v4411, %v4418
        %v4423 = vmul.f32 %v4412, %v4418
        %v4424 = vld [vmem:[#allocation21] sm:$0x1]
        %v4426 = vlaneseq
        %v4427 = vshrl.u32 %v4426, 7
        %v4428 = vsub.s32 0, %v4427
        %v4429 = vrot.slane %v4424, %v4428
        %v4431 = vadd.f32 %v4420, %v4429
        %v4432 = vadd.f32 %v4421, %v4429
        %v4433 = vadd.f32 %v4422, %v4429
        %v4434 = vadd.f32 %v4423, %v4429
        %v4435 = vadd.f32 %v3737, %v4431
        %v4436 = vadd.f32 %v3738, %v4432
        %v4437 = vadd.f32 %v3739, %v4433
        %v4438 = vadd.f32 %v3740, %v4434
        %v4439 = vmax.f32 %v4435, 0.0
        %v4440 = vmax.f32 %v4436, 0.0
        %v4441 = vmax.f32 %v4437, 0.0
        %v4442 = vmax.f32 %v4438, 0.0
        %v4443 = vld [vmem:[%s125] sm:$0xff]
        %v4444 = vld [vmem:[%s125 + $0x8] sm:$0xff]
        %v4445 = vld [vmem:[%s125 + $0x10] sm:$0xff]
        %v4446 = vld [vmem:[%s125 + $0x18] sm:$0xff]
        %v4447 = vld [vmem:[%s125 + $0x20] sm:$0xff]
        %v4448 = vld [vmem:[%s125 + $0x28] sm:$0xff]
        %v4449 = vld [vmem:[%s125 + $0x30] sm:$0xff]
        %v4450 = vld [vmem:[%s125 + $0x38] sm:$0xff]
        %v4451 = vld [vmem:[%s125 + $0x40] sm:$0xff]
        %v4452 = vld [vmem:[%s125 + $0x48] sm:$0xff]
        %v4453 = vld [vmem:[%s125 + $0x50] sm:$0xff]
        %v4454 = vld [vmem:[%s125 + $0x58] sm:$0xff]
        %v4455 = vld [vmem:[%s125 + $0x60] sm:$0xff]
        %v4456 = vld [vmem:[%s125 + $0x68] sm:$0xff]
        %v4457 = vld [vmem:[%s125 + $0x70] sm:$0xff]
        %v4458 = vld [vmem:[%s125 + $0x78] sm:$0xff]
        %v4459 = vld [vmem:[%s127] sm:$0x1]
        %v4461 = vlaneseq
        %v4462 = vshrl.u32 %v4461, 7
        %v4463 = vsub.s32 0, %v4462
        %v4464 = vrot.slane %v4459, %v4463
        %4466 = vmatprep.subr.mxu0 0.0
        %4467 = vmatpush1.xpose.msra.mxu0 %v4458
        %4468 = vmatprep.subr.mxu0 0.0
        %4469 = vmatpush1.xpose.msra.mxu0 %v4457
        %4470 = vmatprep.subr.mxu0 0.0
        %4471 = vmatpush1.xpose.msra.mxu0 %v4456
        %4472 = vmatprep.subr.mxu0 0.0
        %4473 = vmatpush1.xpose.msra.mxu0 %v4455
        %4474 = vmatprep.subr.mxu0 0.0
        %4475 = vmatpush1.xpose.msra.mxu0 %v4454
        %4476 = vmatprep.subr.mxu0 0.0
        %4477 = vmatpush1.xpose.msra.mxu0 %v4453
        %4478 = vmatprep.subr.mxu0 0.0
        %4479 = vmatpush1.xpose.msra.mxu0 %v4452
        %4480 = vmatprep.subr.mxu0 0.0
        %4481 = vmatpush1.xpose.msra.mxu0 %v4451
        %4482 = vmatprep.subr.mxu0 0.0
        %4483 = vmatpush1.xpose.msra.mxu0 %v4450
        %4484 = vmatprep.subr.mxu0 0.0
        %4485 = vmatpush1.xpose.msra.mxu0 %v4449
        %4486 = vmatprep.subr.mxu0 0.0
        %4487 = vmatpush1.xpose.msra.mxu0 %v4448
        %4488 = vmatprep.subr.mxu0 0.0
        %4489 = vmatpush1.xpose.msra.mxu0 %v4447
        %4490 = vmatprep.subr.mxu0 0.0
        %4491 = vmatpush1.xpose.msra.mxu0 %v4446
        %4492 = vmatprep.subr.mxu0 0.0
        %4493 = vmatpush1.xpose.msra.mxu0 %v4445
        %4494 = vmatprep.subr.mxu0 0.0
        %4495 = vmatpush1.xpose.msra.mxu0 %v4444
        %4496 = vmatprep.subr.mxu0 0.0
        %4497 = vmatpush1.xpose.msra.mxu0 %v4443
        %4498 = vmatprep.subr.mxu0 0.0
        %4499 = vmatpush2.xpose.msra.mxu0 0.0
        %4500 = vmatprep.subr.mxu0 0.0
        %4501 = vmatpush2.xpose.msra.mxu0 0.0
        %4502 = vmatprep.subr.mxu0 0.0
        %4503 = vmatpush2.xpose.msra.mxu0 0.0
        %4504 = vmatprep.subr.mxu0 0.0
        %4505 = vmatpush2.xpose.msra.mxu0 0.0
        %4506 = vmatprep.subr.mxu0 0.0
        %4507 = vmatpush2.xpose.msra.mxu0 0.0
        %4508 = vmatprep.subr.mxu0 0.0
        %4509 = vmatpush2.xpose.msra.mxu0 0.0
        %4510 = vmatprep.subr.mxu0 0.0
        %4511 = vmatpush2.xpose.msra.mxu0 0.0
        %4512 = vmatprep.subr.mxu0 0.0
        %4513 = vmatpush2.xpose.msra.mxu0 0.0
        %4514 = vmatprep.subr.mxu0 0.0
        %4515 = vmatpush2.xpose.msra.mxu0 0.0
        %4516 = vmatprep.subr.mxu0 0.0
        %4517 = vmatpush2.xpose.msra.mxu0 0.0
        %4518 = vmatprep.subr.mxu0 0.0
        %4519 = vmatpush2.xpose.msra.mxu0 0.0
        %4520 = vmatprep.subr.mxu0 0.0
        %4521 = vmatpush2.xpose.msra.mxu0 0.0
        %4522 = vmatprep.subr.mxu0 0.0
        %4523 = vmatpush2.xpose.msra.mxu0 0.0
        %4524 = vmatprep.subr.mxu0 0.0
        %4525 = vmatpush2.xpose.msra.mxu0 0.0
        %4526 = vmatprep.subr.mxu0 0.0
        %4527 = vmatpush2.xpose.msra.mxu0 0.0
        %4528 = vmatprep.subr.mxu0 0.0
        %4529 = vmatpush2.xpose.msra.mxu0 0.0
        %4530 = vmatprep.mubr.f32.mxu0 0.0
        %4531 = vmatmul.mubr.f32.gmra.mxu0 %v4439
        %v4532 = vpop.f32.mrf.mxu0
        %v4533 = vadd.f32 %v4464, %v4532
        %v4534 = vpop.f32.mrf.mxu0
        %4535 = vmatprep.mubr.f32.mxu0 0.0
        %4536 = vmatmul.mubr.f32.gmra.mxu0 %v4440
        %v4537 = vpop.f32.mrf.mxu0
        %v4538 = vadd.f32 %v4464, %v4537
        %v4539 = vpop.f32.mrf.mxu0
        %4540 = vmatprep.mubr.f32.mxu0 0.0
        %4541 = vmatmul.mubr.f32.gmra.mxu0 %v4441
        %v4542 = vpop.f32.mrf.mxu0
        %v4543 = vadd.f32 %v4464, %v4542
        %v4544 = vpop.f32.mrf.mxu0
        %4545 = vmatprep.mubr.f32.mxu0 0.0
        %4546 = vmatmul.mubr.f32.gmra.mxu0 %v4442
        %v4547 = vpop.f32.mrf.mxu0
        %v4548 = vadd.f32 %v4464, %v4547
        %v4549 = vpop.f32.mrf.mxu0
        %4550 = vdwg.mxu0
        %v4551 = vmax.f32 %v4533, 0.0
        %v4552 = vmax.f32 %v4538, 0.0
        %v4553 = vmax.f32 %v4543, 0.0
        %v4554 = vmax.f32 %v4548, 0.0
        %v4555 = vand.u32 2147483647, %v4533
        %v4556 = vand.u32 2147483647, %v4538
        %v4557 = vand.u32 2147483647, %v4543
        %v4558 = vand.u32 2147483647, %v4548
        %v4559 = vsub.f32 0.0, %v4555
        %v4560 = vsub.f32 0.0, %v4556
        %v4561 = vsub.f32 0.0, %v4557
        %v4562 = vsub.f32 0.0, %v4558
        %v4563 = vmul.f32 %v4559, 1.442695
        %v4564 = vpow.pop %v4563
        %v4565 = vmul.f32 %v4560, 1.442695
        %v4566 = vpow.pop %v4565
        %v4567 = vmul.f32 %v4561, 1.442695
        %v4568 = vpow.pop %v4567
        %v4569 = vmul.f32 %v4562, 1.442695
        %v4570 = vpow.pop %v4569
        %v4571 = vadd.f32 %v4564, 1.0
        %v4572 = vadd.f32 %v4566, 1.0
        %v4573 = vadd.f32 %v4568, 1.0
        %v4574 = vadd.f32 %v4570, 1.0
        %v4575 = vlog2.pop %v4571
        %v4576 = vmul.f32 %v4575, 0.6931472
        %v4577 = vlog2.pop %v4572
        %v4578 = vmul.f32 %v4577, 0.6931472
        %v4579 = vlog2.pop %v4573
        %v4580 = vmul.f32 %v4579, 0.6931472
        %v4581 = vlog2.pop %v4574
        %v4582 = vmul.f32 %v4581, 0.6931472
        %v4583 = vadd.f32 %v4551, %v4576
        %v4584 = vadd.f32 %v4552, %v4578
        %v4585 = vadd.f32 %v4553, %v4580
        %v4586 = vadd.f32 %v4554, %v4582
        %v4587 = vlaneseq
        %v4588 = vand.u32 %v4587, 127
        %vm4589 = vcmp.eq.s32.totalorder %v4588, 2
        %v4590 = vadd.f32 %v4583, 0.0001
        %v4591 = vadd.f32 %v4584, 0.0001
        %v4592 = vadd.f32 %v4585, 0.0001
        %v4593 = vadd.f32 %v4586, 0.0001
        %v4594 = vsel %vm4589, %v4590, %v4533
        %v4595 = vsel %vm4589, %v4591, %v4538
        %v4596 = vsel %vm4589, %v4592, %v4543
        %v4597 = vsel %vm4589, %v4593, %v4548
        %4598 = vst [vmem:[%s2047] sm:$0xff] %v4594
        %4599 = vst [vmem:[%s2047 + $0x8] sm:$0xff] %v4595
        %4600 = vst [vmem:[%s2047 + $0x10] sm:$0xff] %v4596
        %4601 = vst [vmem:[%s2047 + $0x18] sm:$0xff] %v4597
        %s4602 = smul.u32 4, %s147
        %p4603 = scmp.lt.s32.totalorder %s4602, 7
        %s4604 = scalar_select %p4603, %s4602, 7
        %s4605 = smul.addr %s4604, 8
        %s4606 = scalar_lea.vmem %s129, %s4605
        // Predicated region
        $region329: #{dqn_forward.1} parent=275 // pred_check
          %p4607 = pneg %p1514
        $region330: #{dqn_forward.1} parent=275 // pred_check_branch
          %4609 = sbr.rel (%p4607) target = $region332
        $region331: #{dqn_forward.1} parent=275 // pred_region
          %s4610 = smul.u32 4, %s147
        $region332: #{dqn_forward.1} parent=275 // pred_fallthru
          _
      $region276: #{dqn_forward.1} parent=5 // pred_fallthru
        _
      %p4611 = scmp.le.s32.totalorder 2, %s142
      // Predicated region
      $region333: #{dqn_forward.1} parent=5 // pred_check
        %p4612 = pneg %p4611
      $region334: #{dqn_forward.1} parent=5 // pred_check_branch
        %4614 = sbr.rel (%p4612) target = $region336
      $region335: #{dqn_forward.1} parent=5 // pred_region
        %s4615 = ssub.s32 %s142, 2
        // Predicated region
        $region337: #{dqn_forward.1} parent=335 // pred_check
          %p4616 = pneg %p1520
        $region338: #{dqn_forward.1} parent=335 // pred_check_branch
          %4618 = sbr.rel (%p4616) target = $region340
        $region339: #{dqn_forward.1} parent=335 // pred_region
          %s4619 = smul.u32 4, %s148
          %p4620 = scmp.lt.s32.totalorder %s4619, 7
          %s4621 = scalar_select %p4620, %s4619, 7
          %s4622 = smul.addr %s4621, 8
          %s4623 = scalar_lea.vmem %s129, %s4622
        $region340: #{dqn_forward.1} parent=335 // pred_fallthru
          _
      $region336: #{dqn_forward.1} parent=5 // pred_fallthru
        _
    $region6: #{dqn_forward.1} parent=1 // loop_footer
      %s146 = sadd.s32 1, %s142
    $region7: #{dqn_forward.1} parent=1 // loop_footer_branch
      %141 = sbr.rel target = $region3
    $region8: #{dqn_forward.1} parent=1 // loop_exit
      _
    %4624 = vsyncpa [#allocation3], 1
    %s4625 = scalar_lea.sflag [#allocation3], 1
    %4626 = vsyncpa %s4625, 1
    %4627 = vsyncpa [#allocation5], 1
    %4628 = vsyncpa [#allocation8], 1
    %4629 = vsyncpa [#allocation11], 1
    %4630 = vsyncpa [#allocation14], 1
    %4631 = vsyncpa [#allocation17], 1
    %4632 = vsyncpa [#allocation20], 1

</llo_original>
